<compile_context>
chip_gen: v5e
topology: v5e:2x2
jax: 0.10.0
libtpu: 0.0.40
codegen_flags: <defaults>
</compile_context>

<pallas_src>
import functools

import jax
import jax.numpy as jnp
from jax.experimental import pallas as pl
from jax.experimental.pallas import tpu as pltpu


def _round_up(n, m):
    return ((n + m - 1) // m) * m


# ----------------------------------------------------------------------------
# Kernel
# ----------------------------------------------------------------------------
def rainbow_kernel(ximg_ref,            # (TB, Dimg_p)  bf16  image features
                   vel_ref,             # (TB, Dvel_p)  bf16  velocity (zero-pad)
                   w1i_ref, w1v_ref,    # (Dimg_p,768) / (Dvel_p,768) bf16 fused fc1
                   b1_ref,              # (1, 768) f32
                   w2a_ref, b2a_ref,    # (256, 128) bf16 / (1, 128) f32
                   w3a_ref, b3a_ref,    # (128, Np)  bf16 / (1, Np) f32 (Np = 128)
                   w3v_ref, b3v_ref,    # (1, 512)   bf16 / (1, 1)  f32
                   out_ref,             # (TB, Np)   f32
                   *, n_actions, n_adv):
    # ---- fused fc1 (adv 256 cols | val 512 cols), two lane-aligned chunks ---
    h1 = jnp.dot(ximg_ref[...], w1i_ref[...], preferred_element_type=jnp.float32)
    h1 = h1 + jnp.dot(vel_ref[...], w1v_ref[...],
                      preferred_element_type=jnp.float32)
    h1 = jnp.maximum(h1 + b1_ref[...], 0.0)                            # (TB, 768)
    h_adv = h1[:, :n_adv]                                              # (TB, 256)
    h_val = h1[:, n_adv:]                                              # (TB, 512)

    # ---- advantage stream: 256 -> 128 -> n_actions (padded to 128) ----------
    adv = jnp.dot(h_adv.astype(jnp.bfloat16), w2a_ref[...],
                  preferred_element_type=jnp.float32) + b2a_ref[...]
    adv = jnp.maximum(adv, 0.0)                                        # (TB, 128)
    adv = jnp.dot(adv.astype(jnp.bfloat16), w3a_ref[...],
                  preferred_element_type=jnp.float32) + b3a_ref[...]   # (TB, Np)
    # padded columns of w3a/b3a are zero -> padded adv columns are exactly 0.

    # ---- value stream: 512 -> 1 (lane-dense reduce, no 1-wide matmul) -------
    val = jnp.sum(h_val * w3v_ref[...].astype(jnp.float32),
                  axis=1, keepdims=True) + b3v_ref[...]                # (TB, 1)

    # ---- dueling combine: (val - mean(adv)) + adv ----------------------------
    # padded adv columns are zero, so summing all Np columns == summing the
    # real n_actions columns.
    adv_mean = jnp.sum(adv, axis=1, keepdims=True) * (1.0 / n_actions)
    out_ref[...] = (val - adv_mean) + adv                              # (TB, Np)


# ----------------------------------------------------------------------------
# Parameter construction (PyTorch-style init) and kernel-side packing
# ----------------------------------------------------------------------------
def init_linear(key, in_dim, out_dim):
    """U(-1/sqrt(fan_in), 1/sqrt(fan_in)); weight stored (in, out)."""
    kw, kb = jax.random.split(key)
    bound = 1.0 / jnp.sqrt(jnp.float32(in_dim))
    w = jax.random.uniform(kw, (in_dim, out_dim), jnp.float32, -bound, bound)
    b = jax.random.uniform(kb, (1, out_dim), jnp.float32, -bound, bound)
    return w, b


def make_params(in_dims, n_actions, seed=0):
    a = 1
    for d in in_dims:
        a *= d
    d_in = a + 28
    keys = jax.random.split(jax.random.PRNGKey(seed), 5)
    return {
        "fc1_adv": init_linear(keys[0], d_in, 256),
        "fc2_adv": init_linear(keys[1], 256, 128),
        "fc3_adv": init_linear(keys[2], 128, n_actions),
        "fc1_val": init_linear(keys[3], d_in, 512),
        "fc3_val": init_linear(keys[4], 512, 1),
        "d_img": a,
        "d_vel": 28,
    }


def pack_params(params, n_actions):
    """One-time packing: fuse fc1, split image/vel rows, pad to 128, bf16."""
    w1a, b1a = params["fc1_adv"]
    w2a, b2a = params["fc2_adv"]
    w3a, b3a = params["fc3_adv"]
    w1v_, b1v = params["fc1_val"]
    w3v, b3v = params["fc3_val"]

    d_img = int(params["d_img"])
    d_vel = int(params["d_vel"])
    n_adv = int(w1a.shape[1])                         # 256
    n_pad = _round_up(max(n_actions, 128), 128)       # 128 for small n_actions
    d_img_pad = _round_up(d_img, 128)                 # 1024 stays 1024
    d_vel_pad = _round_up(max(d_vel, 128), 128)       # 28 -> 128

    # Fused fc1: columns [0:256) = adv, [256:768) = val. Split the contraction
    # into an image part and a velocity part; zero rows beyond the real dims
    # keep the result identical for zero-padded inputs.
    w1 = jnp.concatenate([w1a, w1v_], axis=1)         # (D, 768)
    w1_img = jnp.pad(w1[:d_img], ((0, d_img_pad - d_img), (0, 0))
                     ).astype(jnp.bfloat16)           # (Dimg_p, 768)
    w1_vel = jnp.pad(w1[d_img:], ((0, d_vel_pad - d_vel), (0, 0))
                     ).astype(jnp.bfloat16)           # (Dvel_p, 768)
    b1 = jnp.concatenate([b1a, b1v], axis=1)          # (1, 768) f32

    w3a_p = jnp.pad(w3a, ((0, 0), (0, n_pad - n_actions))).astype(jnp.bfloat16)
    b3a_p = jnp.pad(b3a, ((0, 0), (0, n_pad - n_actions)))    # (1, 128) f32

    # Invariant the dueling mean relies on: padded action columns are zero.
    assert bool(jnp.all(w3a_p[:, n_actions:] == 0))
    assert bool(jnp.all(b3a_p[:, n_actions:] == 0))

    return {
        "w1_img": w1_img, "w1_vel": w1_vel, "b1": b1,
        "w2a": w2a.astype(jnp.bfloat16), "b2a": b2a,
        "w3a": w3a_p, "b3a": b3a_p,
        "w3v": w3v.T.astype(jnp.bfloat16),            # (1, 512)
        "b3v": b3v,                                   # (1, 1)
        "d_img": d_img, "d_img_pad": int(d_img_pad),
        "d_vel": d_vel, "d_vel_pad": int(d_vel_pad),
        "n_actions": int(n_actions), "n_adv": n_adv, "n_pad": int(n_pad),
    }


# ----------------------------------------------------------------------------
# Wrapper
# ----------------------------------------------------------------------------
def rainbow_forward(x_img, vel, packed, *, max_tile_b=256):
    """x_img: (B, C, H, W); vel: (B, 28). Returns (B, n_actions) f32.

    Batch is tiled into TILE_B chunks along a 1-D grid; weights are fetched
    into VMEM once and stay resident across all grid steps.
    """
    B = x_img.shape[0]
    n_actions, n_adv, n_pad = packed["n_actions"], packed["n_adv"], packed["n_pad"]
    d_img, d_img_pad = packed["d_img"], packed["d_img_pad"]
    d_vel, d_vel_pad = packed["d_vel"], packed["d_vel_pad"]

    # Pad batch to a sublane multiple, then to a multiple of the batch tile.
    bp = _round_up(max(B, 8), 8)
    tile_b = bp if bp <= max_tile_b else max_tile_b
    bp = _round_up(bp, tile_b)
    grid = (bp // tile_b,)

    # Single direct cast to bf16 (no intermediate f32 copy), no concat: image
    # and velocity parts stay separate lane-aligned slabs.
    ximg = x_img.reshape(B, -1).astype(jnp.bfloat16)
    ximg = jnp.pad(ximg, ((0, bp - B), (0, d_img_pad - d_img)))
    velp = jnp.pad(vel.astype(jnp.bfloat16),
                   ((0, bp - B), (0, d_vel_pad - d_vel)))

    kernel = functools.partial(rainbow_kernel, n_actions=n_actions, n_adv=n_adv)

    def batch_spec(cols):
        return pl.BlockSpec((tile_b, cols), lambda i: (i, 0))

    def const_spec(arr):
        # Full-array block, constant index -> fetched once, resident in VMEM.
        return pl.BlockSpec(arr.shape, lambda i: (0, 0))

    weights = (packed["w1_img"], packed["w1_vel"], packed["b1"],
               packed["w2a"], packed["b2a"],
               packed["w3a"], packed["b3a"],
               packed["w3v"], packed["b3v"])

    out = pl.pallas_call(
        kernel,
        out_shape=jax.ShapeDtypeStruct((bp, n_pad), jnp.float32),
        grid=grid,
        in_specs=[batch_spec(d_img_pad), batch_spec(d_vel_pad)]
                 + [const_spec(w) for w in weights],
        out_specs=pl.BlockSpec((tile_b, n_pad), lambda i: (i, 0)),
        compiler_params=pltpu.CompilerParams(
            dimension_semantics=("parallel",)),
    )(ximg, velp, *weights)

    # Padded output columns hold (val - adv_mean), not zeros: always slice.
    return out[:B, :n_actions]


# ----------------------------------------------------------------------------
# References
# ----------------------------------------------------------------------------
def rainbow_forward_ref_f32(x_img, vel, params):
    """Pure-JAX f32 reference mirroring the PyTorch forward."""
    B = x_img.shape[0]
    x = jnp.concatenate([x_img.reshape(B, -1), vel], axis=1).astype(jnp.float32)
    w1a, b1a = params["fc1_adv"]
    w2a, b2a = params["fc2_adv"]
    w3a, b3a = params["fc3_adv"]
    w1v, b1v = params["fc1_val"]
    w3v, b3v = params["fc3_val"]
    adv = jax.nn.relu(x @ w1a + b1a)
    adv = jax.nn.relu(adv @ w2a + b2a)
    adv = adv @ w3a + b3a
    val = jax.nn.relu(x @ w1v + b1v)
    val = val @ w3v + b3v
    return (val - adv.mean(axis=1, keepdims=True)) + adv


def rainbow_forward_ref_bf16(x_img, vel, params):
    """Reference matching the kernel's bf16-weight / f32-accumulate numerics."""
    B = x_img.shape[0]
    x = jnp.concatenate([x_img.reshape(B, -1), vel], axis=1).astype(jnp.float32)
    xb = x.astype(jnp.bfloat16)
    w1a, b1a = params["fc1_adv"]
    w2a, b2a = params["fc2_adv"]
    w3a, b3a = params["fc3_adv"]
    w1v, b1v = params["fc1_val"]
    w3v, b3v = params["fc3_val"]

    def mm(a, w):
        return jnp.dot(a, w.astype(jnp.bfloat16),
                       preferred_element_type=jnp.float32)

    adv = jax.nn.relu(mm(xb, w1a) + b1a)
    adv = jax.nn.relu(mm(adv.astype(jnp.bfloat16), w2a) + b2a)
    adv = mm(adv.astype(jnp.bfloat16), w3a) + b3a
    h_val = jax.nn.relu(mm(xb, w1v) + b1v)
    val = jnp.sum(h_val * w3v.T.astype(jnp.bfloat16).astype(jnp.float32),
                  axis=1, keepdims=True) + b3v
    return (val - adv.mean(axis=1, keepdims=True)) + adv


if __name__ == "__main__":
    # Small shapes consistent with the module: in_dims=(4,16,16) -> a=1024,
    # vel has 28 features (D = 1052), batch=2, 6 actions.
    in_dims = (4, 16, 16)
    n_actions = 6
    B = 2

    key = jax.random.PRNGKey(0)
    k_img, k_vel, k_img2, k_vel2 = jax.random.split(key, 4)
    x_img = jax.random.normal(k_img, (B,) + in_dims, dtype=jnp.float32)
    vel = jax.random.normal(k_vel, (B, 28), dtype=jnp.float32)

    params = make_params(in_dims, n_actions, seed=0)
    packed = pack_params(params, n_actions)      # one-time weight packing

    out = jax.block_until_ready(rainbow_forward(x_img, vel, packed))
    assert out.shape == (B, n_actions)

    ref_bf16 = jax.block_until_ready(rainbow_forward_ref_bf16(x_img, vel, params))
    ref_f32 = jax.block_until_ready(rainbow_forward_ref_f32(x_img, vel, params))

    # Tight check vs. numerics-matched (bf16-weight) reference.
    assert jnp.allclose(out, ref_bf16, atol=2e-2, rtol=2e-2), \
        "mismatch vs bf16-matched reference"
    # Loose semantic check vs. full-f32 reference (bf16 weight rounding only).
    assert jnp.allclose(out, ref_f32, atol=1e-1, rtol=1e-1), \
        "mismatch vs f32 reference"

    # Exercise the batched multi-step grid path (weights fetched once and kept
    # resident across grid steps; tile smaller than padded batch -> grid > 1).
    B2 = 40
    x_img2 = jax.random.normal(k_img2, (B2,) + in_dims, dtype=jnp.float32)
    vel2 = jax.random.normal(k_vel2, (B2, 28), dtype=jnp.float32)
    out2 = jax.block_until_ready(
        rainbow_forward(x_img2, vel2, packed, max_tile_b=16))
    assert out2.shape == (B2, n_actions)
    ref2 = jax.block_until_ready(rainbow_forward_ref_bf16(x_img2, vel2, params))
    assert jnp.allclose(out2, ref2, atol=2e-2, rtol=2e-2), \
        "mismatch vs bf16-matched reference (batched grid path)"

    print("KERNEL_OK")
</pallas_src>

<mosaic_0001>
module attributes {stable_mosaic.version = 11 : i64} {
  func.func @rainbow_kernel(%arg0: i32, %arg1: memref<8x1024xbf16, #tpu.memory_space<vmem>>, %arg2: memref<8x128xbf16, #tpu.memory_space<vmem>>, %arg3: memref<1024x768xbf16, #tpu.memory_space<vmem>>, %arg4: memref<128x768xbf16, #tpu.memory_space<vmem>>, %arg5: memref<1x768xf32, #tpu.memory_space<vmem>>, %arg6: memref<256x128xbf16, #tpu.memory_space<vmem>>, %arg7: memref<1x128xf32, #tpu.memory_space<vmem>>, %arg8: memref<128x128xbf16, #tpu.memory_space<vmem>>, %arg9: memref<1x128xf32, #tpu.memory_space<vmem>>, %arg10: memref<1x512xbf16, #tpu.memory_space<vmem>>, %arg11: memref<1x1xf32, #tpu.memory_space<vmem>>, %arg12: memref<8x128xf32, #tpu.memory_space<vmem>>) attributes {dimension_semantics = [#tpu.dimension_semantics<parallel>], iteration_bounds = array<i64: 1>, scalar_prefetch = 0 : i64, scratch_operands = 0 : i64, tpu.core_type = #tpu.core_type<tc>, window_params = [{transform_indices = @transform_0, window_bounds = array<i64: 8, 1024>}, {transform_indices = @transform_1, window_bounds = array<i64: 8, 128>}, {pipeline_mode = #tpu.pipeline_mode<synchronous>, transform_indices = @transform_2, window_bounds = array<i64: 1024, 768>}, {pipeline_mode = #tpu.pipeline_mode<synchronous>, transform_indices = @transform_3, window_bounds = array<i64: 128, 768>}, {pipeline_mode = #tpu.pipeline_mode<synchronous>, transform_indices = @transform_4, window_bounds = array<i64: 1, 768>}, {pipeline_mode = #tpu.pipeline_mode<synchronous>, transform_indices = @transform_5, window_bounds = array<i64: 256, 128>}, {pipeline_mode = #tpu.pipeline_mode<synchronous>, transform_indices = @transform_6, window_bounds = array<i64: 1, 128>}, {pipeline_mode = #tpu.pipeline_mode<synchronous>, transform_indices = @transform_7, window_bounds = array<i64: 128, 128>}, {pipeline_mode = #tpu.pipeline_mode<synchronous>, transform_indices = @transform_8, window_bounds = array<i64: 1, 128>}, {pipeline_mode = #tpu.pipeline_mode<synchronous>, transform_indices = @transform_9, window_bounds = array<i64: 1, 512>}, {pipeline_mode = #tpu.pipeline_mode<synchronous>, transform_indices = @transform_10, window_bounds = array<i64: 1, 1>}, {transform_indices = @transform_11, window_bounds = array<i64: 8, 128>}]} {
    %c0 = arith.constant 0 : index
    %c0_0 = arith.constant 0 : index
    %0 = vector.load %arg1[%c0, %c0_0] : memref<8x1024xbf16, #tpu.memory_space<vmem>>, vector<8x1024xbf16>
    %c0_1 = arith.constant 0 : index
    %c0_2 = arith.constant 0 : index
    %1 = vector.load %arg3[%c0_1, %c0_2] : memref<1024x768xbf16, #tpu.memory_space<vmem>>, vector<1024x768xbf16>
    %cst = arith.constant dense<0.000000e+00> : vector<8x768xf32>
    %2 = tpu.matmul %0, %1, %cst {dimension_numbers = #tpu.dot_dimension_numbers<[1], [0], [0], [1], [0, 0, 1, 1], [], []>} : vector<8x1024xbf16>, vector<1024x768xbf16>, vector<8x768xf32> -> vector<8x768xf32>
    %c0_3 = arith.constant 0 : index
    %c0_4 = arith.constant 0 : index
    %3 = vector.load %arg2[%c0_3, %c0_4] : memref<8x128xbf16, #tpu.memory_space<vmem>>, vector<8x128xbf16>
    %c0_5 = arith.constant 0 : index
    %c0_6 = arith.constant 0 : index
    %4 = vector.load %arg4[%c0_5, %c0_6] : memref<128x768xbf16, #tpu.memory_space<vmem>>, vector<128x768xbf16>
    %cst_7 = arith.constant dense<0.000000e+00> : vector<8x768xf32>
    %5 = tpu.matmul %3, %4, %cst_7 {dimension_numbers = #tpu.dot_dimension_numbers<[1], [0], [0], [1], [0, 0, 1, 1], [], []>} : vector<8x128xbf16>, vector<128x768xbf16>, vector<8x768xf32> -> vector<8x768xf32>
    %6 = arith.addf %2, %5 : vector<8x768xf32>
    %c0_8 = arith.constant 0 : index
    %c0_9 = arith.constant 0 : index
    %7 = vector.load %arg5[%c0_8, %c0_9] : memref<1x768xf32, #tpu.memory_space<vmem>>, vector<1x768xf32>
    %8 = vector.broadcast %7 : vector<1x768xf32> to vector<8x768xf32>
    %9 = arith.addf %6, %8 : vector<8x768xf32>
    %cst_10 = arith.constant 0.000000e+00 : f32
    %10 = vector.broadcast %cst_10 : f32 to vector<8x768xf32>
    %11 = arith.maximumf %9, %10 : vector<8x768xf32>
    %12 = vector.extract_strided_slice %11 {offsets = [0, 0], sizes = [8, 256], strides = [1, 1]} : vector<8x768xf32> to vector<8x256xf32>
    %13 = vector.extract_strided_slice %11 {offsets = [0, 256], sizes = [8, 512], strides = [1, 1]} : vector<8x768xf32> to vector<8x512xf32>
    %14 = arith.truncf %12 : vector<8x256xf32> to vector<8x256xbf16>
    %c0_11 = arith.constant 0 : index
    %c0_12 = arith.constant 0 : index
    %15 = vector.load %arg6[%c0_11, %c0_12] : memref<256x128xbf16, #tpu.memory_space<vmem>>, vector<256x128xbf16>
    %cst_13 = arith.constant dense<0.000000e+00> : vector<8x128xf32>
    %16 = tpu.matmul %14, %15, %cst_13 {dimension_numbers = #tpu.dot_dimension_numbers<[1], [0], [0], [1], [0, 0, 1, 1], [], []>} : vector<8x256xbf16>, vector<256x128xbf16>, vector<8x128xf32> -> vector<8x128xf32>
    %c0_14 = arith.constant 0 : index
    %c0_15 = arith.constant 0 : index
    %17 = vector.load %arg7[%c0_14, %c0_15] : memref<1x128xf32, #tpu.memory_space<vmem>>, vector<1x128xf32>
    %18 = vector.broadcast %17 : vector<1x128xf32> to vector<8x128xf32>
    %19 = arith.addf %16, %18 : vector<8x128xf32>
    %cst_16 = arith.constant 0.000000e+00 : f32
    %20 = vector.broadcast %cst_16 : f32 to vector<8x128xf32>
    %21 = arith.maximumf %19, %20 : vector<8x128xf32>
    %22 = arith.truncf %21 : vector<8x128xf32> to vector<8x128xbf16>
    %c0_17 = arith.constant 0 : index
    %c0_18 = arith.constant 0 : index
    %23 = vector.load %arg8[%c0_17, %c0_18] : memref<128x128xbf16, #tpu.memory_space<vmem>>, vector<128x128xbf16>
    %cst_19 = arith.constant dense<0.000000e+00> : vector<8x128xf32>
    %24 = tpu.matmul %22, %23, %cst_19 {dimension_numbers = #tpu.dot_dimension_numbers<[1], [0], [0], [1], [0, 0, 1, 1], [], []>} : vector<8x128xbf16>, vector<128x128xbf16>, vector<8x128xf32> -> vector<8x128xf32>
    %c0_20 = arith.constant 0 : index
    %c0_21 = arith.constant 0 : index
    %25 = vector.load %arg9[%c0_20, %c0_21] : memref<1x128xf32, #tpu.memory_space<vmem>>, vector<1x128xf32>
    %26 = vector.broadcast %25 : vector<1x128xf32> to vector<8x128xf32>
    %27 = arith.addf %24, %26 : vector<8x128xf32>
    %c0_22 = arith.constant 0 : index
    %c0_23 = arith.constant 0 : index
    %28 = vector.load %arg10[%c0_22, %c0_23] : memref<1x512xbf16, #tpu.memory_space<vmem>>, vector<1x512xbf16>
    %29 = arith.extf %28 : vector<1x512xbf16> to vector<1x512xf32>
    %30 = vector.broadcast %29 : vector<1x512xf32> to vector<8x512xf32>
    %31 = arith.mulf %13, %30 : vector<8x512xf32>
    %cst_24 = arith.constant dense<0.000000e+00> : vector<8xf32>
    %32 = vector.multi_reduction <add>, %31, %cst_24 [1] : vector<8x512xf32> to vector<8xf32>
    %33 = vector.shape_cast %32 : vector<8xf32> to vector<8x1xf32>
    %c0_25 = arith.constant 0 : index
    %c0_26 = arith.constant 0 : index
    %34 = vector.load %arg11[%c0_25, %c0_26] : memref<1x1xf32, #tpu.memory_space<vmem>>, vector<1x1xf32>
    %35 = vector.broadcast %34 : vector<1x1xf32> to vector<8x1xf32>
    %36 = arith.addf %33, %35 : vector<8x1xf32>
    %cst_27 = arith.constant dense<0.000000e+00> : vector<8xf32>
    %37 = vector.multi_reduction <add>, %27, %cst_27 [1] : vector<8x128xf32> to vector<8xf32>
    %38 = vector.shape_cast %37 : vector<8xf32> to vector<8x1xf32>
    %cst_28 = arith.constant 0.166666672 : f32
    %39 = vector.broadcast %cst_28 : f32 to vector<8x1xf32>
    %40 = arith.mulf %38, %39 : vector<8x1xf32>
    %41 = arith.subf %36, %40 : vector<8x1xf32>
    %42 = vector.broadcast %41 : vector<8x1xf32> to vector<8x128xf32>
    %43 = arith.addf %42, %27 : vector<8x128xf32>
    %c0_29 = arith.constant 0 : index
    %c0_30 = arith.constant 0 : index
    %44 = vector.load %arg12[%c0_29, %c0_30] : memref<8x128xf32, #tpu.memory_space<vmem>>, vector<8x128xf32>
    tpu.vector_store %arg12[%c0_29, %c0_30], %43 {strides = array<i32>} : memref<8x128xf32, #tpu.memory_space<vmem>>, vector<8x128xf32>,
    return
  }
  func.func @transform_0(%arg0: i32) -> (i32, i32) {
    %c0_i32 = arith.constant 0 : i32
    %c0_i32_0 = arith.constant 0 : i32
    return %arg0, %c0_i32 : i32, i32
  }
  func.func @transform_1(%arg0: i32) -> (i32, i32) {
    %c0_i32 = arith.constant 0 : i32
    %c0_i32_0 = arith.constant 0 : i32
    return %arg0, %c0_i32 : i32, i32
  }
  func.func @transform_2(%arg0: i32) -> (i32, i32) {
    %c0_i32 = arith.constant 0 : i32
    %c0_i32_0 = arith.constant 0 : i32
    %c0_i32_1 = arith.constant 0 : i32
    return %c0_i32, %c0_i32_0 : i32, i32
  }
  func.func @transform_3(%arg0: i32) -> (i32, i32) {
    %c0_i32 = arith.constant 0 : i32
    %c0_i32_0 = arith.constant 0 : i32
    %c0_i32_1 = arith.constant 0 : i32
    return %c0_i32, %c0_i32_0 : i32, i32
  }
  func.func @transform_4(%arg0: i32) -> (i32, i32) {
    %c0_i32 = arith.constant 0 : i32
    %c0_i32_0 = arith.constant 0 : i32
    %c0_i32_1 = arith.constant 0 : i32
    return %c0_i32, %c0_i32_0 : i32, i32
  }
  func.func @transform_5(%arg0: i32) -> (i32, i32) {
    %c0_i32 = arith.constant 0 : i32
    %c0_i32_0 = arith.constant 0 : i32
    %c0_i32_1 = arith.constant 0 : i32
    return %c0_i32, %c0_i32_0 : i32, i32
  }
  func.func @transform_6(%arg0: i32) -> (i32, i32) {
    %c0_i32 = arith.constant 0 : i32
    %c0_i32_0 = arith.constant 0 : i32
    %c0_i32_1 = arith.constant 0 : i32
    return %c0_i32, %c0_i32_0 : i32, i32
  }
  func.func @transform_7(%arg0: i32) -> (i32, i32) {
    %c0_i32 = arith.constant 0 : i32
    %c0_i32_0 = arith.constant 0 : i32
    %c0_i32_1 = arith.constant 0 : i32
    return %c0_i32, %c0_i32_0 : i32, i32
  }
  func.func @transform_8(%arg0: i32) -> (i32, i32) {
    %c0_i32 = arith.constant 0 : i32
    %c0_i32_0 = arith.constant 0 : i32
    %c0_i32_1 = arith.constant 0 : i32
    return %c0_i32, %c0_i32_0 : i32, i32
  }
  func.func @transform_9(%arg0: i32) -> (i32, i32) {
    %c0_i32 = arith.constant 0 : i32
    %c0_i32_0 = arith.constant 0 : i32
    %c0_i32_1 = arith.constant 0 : i32
    return %c0_i32, %c0_i32_0 : i32, i32
  }
  func.func @transform_10(%arg0: i32) -> (i32, i32) {
    %c0_i32 = arith.constant 0 : i32
    %c0_i32_0 = arith.constant 0 : i32
    %c0_i32_1 = arith.constant 0 : i32
    return %c0_i32, %c0_i32_0 : i32, i32
  }
  func.func @transform_11(%arg0: i32) -> (i32, i32) {
    %c0_i32 = arith.constant 0 : i32
    %c0_i32_0 = arith.constant 0 : i32
    return %arg0, %c0_i32 : i32, i32
  }
}

</mosaic_0001>

<llo_original>
// kernel: tpu_custom_call.1
$region0: #{tpu_custom_call.1}
  #allocation0 [shape = 'u32[]', space=smem, size = 0x4, offset = 0x4, fixed_abs, tag = 'smem constant byte address 0x4 - core index']
  #allocation1 [shape = 'u32[72,128]{1,0:T(1,128)}', space=vmem, size = 0x9000, scoped, tag = 'internal scratch']
  #allocation2 [shape = 'f32[1,1]{1,0:T(1,128)S(1)}', space=vmem, size = 0x200, scoped, tag = 'scoped memory for tpu_custom_call.1']
  %s0 = inlined_call_operand.hbm [shape: bf16[8,1024], index: 0, kind: input, shape index: {}]
  %s1 = inlined_call_operand.hbm [shape: bf16[8,128], index: 1, kind: input, shape index: {}]
  %s2 = inlined_call_operand.hbm [shape: bf16[1024,768], index: 2, kind: input, shape index: {}]
  %s3 = inlined_call_operand.hbm [shape: bf16[128,768], index: 3, kind: input, shape index: {}]
  %s4 = inlined_call_operand.hbm [shape: f32[1,768], index: 4, kind: input, shape index: {}]
  %s5 = inlined_call_operand.hbm [shape: bf16[256,128], index: 5, kind: input, shape index: {}]
  %s6 = inlined_call_operand.hbm [shape: f32[1,128], index: 6, kind: input, shape index: {}]
  %s7 = inlined_call_operand.hbm [shape: bf16[128,128], index: 7, kind: input, shape index: {}]
  %s8 = inlined_call_operand.hbm [shape: f32[1,128], index: 8, kind: input, shape index: {}]
  %s9 = inlined_call_operand.hbm [shape: bf16[1,512], index: 9, kind: input, shape index: {}]
  %s10 = inlined_call_operand.<no memory space> [shape: f32[1,1], index: 10, kind: input, shape index: {}]
  %s11 = inlined_call_operand.hbm [shape: f32[8,128], index: 11, kind: output, shape index: {}]
  %s12 = sld [smem:[#allocation0]]
  $region94: #{tpu_custom_call.1} parent=0
    _
  %s14 = ssub.s32 1, %s12
  %s15 = scalar_select 0, %s14, %s12
  %v16 = vstv %s10
  %17 = vst [vmem:[#allocation2] sm:$0x1] %v16
  $region1: #{tpu_custom_call.1} parent=0
    #allocation3 [shape = 'u8[16384]{0}', space=vmem, size = 0x4000, scoped, tag = 'input window, operand 0, single buffered']
    #allocation4 [shape = 's32[1]{0}', space=sflag, size = 0x4, scoped, tag = 'scoped memory for tpu_custom_call.1']
    #allocation5 [shape = 's32[1]{0}', space=sflag, size = 0x4, scoped, tag = 'scoped memory for tpu_custom_call.1']
    #allocation6 [shape = 'u8[2048]{0}', space=vmem, size = 0x800, scoped, tag = 'input window, operand 1, single buffered']
    #allocation7 [shape = 's32[1]{0}', space=sflag, size = 0x4, scoped, tag = 'scoped memory for tpu_custom_call.1']
    #allocation8 [shape = 'u8[1572864]{0}', space=vmem, size = 0x180000, scoped, tag = 'input window, operand 2, single buffered']
    #allocation9 [shape = 'u8[196608]{0}', space=vmem, size = 0x30000, scoped, tag = 'input window, operand 3, single buffered']
    #allocation10 [shape = 's32[1]{0}', space=sflag, size = 0x4, scoped, tag = 'scoped memory for tpu_custom_call.1']
    #allocation11 [shape = 'u8[3072]{0}', space=vmem, size = 0xc00, scoped, tag = 'input window, operand 4, single buffered']
    #allocation12 [shape = 'u8[65536]{0}', space=vmem, size = 0x10000, scoped, tag = 'input window, operand 5, single buffered']
    #allocation13 [shape = 's32[1]{0}', space=sflag, size = 0x4, scoped, tag = 'scoped memory for tpu_custom_call.1']
    #allocation14 [shape = 'u8[512]{0}', space=vmem, size = 0x400, scoped, tag = 'input window, operand 6, single buffered']
    #allocation15 [shape = 'u8[32768]{0}', space=vmem, size = 0x8000, scoped, tag = 'input window, operand 7, single buffered']
    #allocation16 [shape = 's32[1]{0}', space=sflag, size = 0x4, scoped, tag = 'scoped memory for tpu_custom_call.1']
    #allocation17 [shape = 'u8[512]{0}', space=vmem, size = 0x400, scoped, tag = 'input window, operand 8, single buffered']
    #allocation18 [shape = 'u8[2048]{0}', space=vmem, size = 0x800, scoped, tag = 'input window, operand 9, single buffered']
    #allocation19 [shape = 's32[1]{0}', space=sflag, size = 0x4, scoped, tag = 'scoped memory for tpu_custom_call.1']
    #allocation20 [shape = 'u8[4096]{0}', space=vmem, size = 0x1000, scoped, tag = 'output window, operand 0, single buffered']
    %18 = vsyncpa [#allocation4], 0
    %19 = vsyncpa [#allocation7], 0
    %20 = vsyncpa [#allocation10], 0
    %21 = vsyncpa [#allocation13], 0
    %22 = vsyncpa [#allocation16], 0
    %23 = vsyncpa [#allocation19], 0
    %24 = vsyncpa [#allocation5], 0
    // Predicated region
    $region2: #{tpu_custom_call.1} parent=1 // pred_check
      _
    $region3: #{tpu_custom_call.1} parent=1 // pred_check_branch
      %26 = sbr.rel (0) target = $region5
    $region4: #{tpu_custom_call.1} parent=1 // pred_region
      %28 = vsyncadd [#allocation4], 0
      %s30 = sshll.u32 %s0, 4
      %s31 = int_to_ptr.hbm [resolvable:$true] %s30
      %s32 = sshll.u32 [#allocation3], 4
      %s33 = int_to_ptr.vmem [resolvable:$true] %s32
      %35 = dma.hbm_to_vmem [thread:$0]  %s31, 512, %s33, [#allocation4]
    $region5: #{tpu_custom_call.1} parent=1 // pred_fallthru
      _
    // Predicated region
    $region6: #{tpu_custom_call.1} parent=1 // pred_check
      _
    $region7: #{tpu_custom_call.1} parent=1 // pred_check_branch
      %37 = sbr.rel (0) target = $region9
    $region8: #{tpu_custom_call.1} parent=1 // pred_region
      %39 = vsyncadd [#allocation7], 0
      %s41 = sshll.u32 %s1, 4
      %s42 = int_to_ptr.hbm [resolvable:$true] %s41
      %s43 = sshll.u32 [#allocation6], 4
      %s44 = int_to_ptr.vmem [resolvable:$true] %s43
      %46 = dma.hbm_to_vmem [thread:$0]  %s42, 64, %s44, [#allocation7]
    $region9: #{tpu_custom_call.1} parent=1 // pred_fallthru
      _
    // Predicated region
    $region10: #{tpu_custom_call.1} parent=1 // pred_check
      _
    $region11: #{tpu_custom_call.1} parent=1 // pred_check_branch
      %48 = sbr.rel (0) target = $region13
    $region12: #{tpu_custom_call.1} parent=1 // pred_region
      %50 = vsyncadd [#allocation7], 0
      %s51 = sshll.u32 %s2, 4
      %s52 = int_to_ptr.hbm [resolvable:$true] %s51
      %s53 = sshll.u32 [#allocation8], 4
      %s54 = int_to_ptr.vmem [resolvable:$true] %s53
      %59 = dma.hbm_to_vmem [thread:$0]  %s52, 49152, %s54, [#allocation7], 384, 384, 24
    $region13: #{tpu_custom_call.1} parent=1 // pred_fallthru
      _
    // Predicated region
    $region14: #{tpu_custom_call.1} parent=1 // pred_check
      _
    $region15: #{tpu_custom_call.1} parent=1 // pred_check_branch
      %61 = sbr.rel (0) target = $region17
    $region16: #{tpu_custom_call.1} parent=1 // pred_region
      %63 = vsyncadd [#allocation10], 0
      %s64 = sshll.u32 %s3, 4
      %s65 = int_to_ptr.hbm [resolvable:$true] %s64
      %s66 = sshll.u32 [#allocation9], 4
      %s67 = int_to_ptr.vmem [resolvable:$true] %s66
      %72 = dma.hbm_to_vmem [thread:$0]  %s65, 6144, %s67, [#allocation10], 384, 384, 24
    $region17: #{tpu_custom_call.1} parent=1 // pred_fallthru
      _
    // Predicated region
    $region18: #{tpu_custom_call.1} parent=1 // pred_check
      _
    $region19: #{tpu_custom_call.1} parent=1 // pred_check_branch
      %74 = sbr.rel (0) target = $region21
    $region20: #{tpu_custom_call.1} parent=1 // pred_region
      %76 = vsyncadd [#allocation10], 0
      %s78 = sshll.u32 %s4, 4
      %s79 = int_to_ptr.hbm [resolvable:$true] %s78
      %s80 = sshll.u32 [#allocation11], 4
      %s81 = int_to_ptr.vmem [resolvable:$true] %s80
      %83 = dma.hbm_to_vmem [thread:$0]  %s79, 96, %s81, [#allocation10]
    $region21: #{tpu_custom_call.1} parent=1 // pred_fallthru
      _
    // Predicated region
    $region22: #{tpu_custom_call.1} parent=1 // pred_check
      _
    $region23: #{tpu_custom_call.1} parent=1 // pred_check_branch
      %85 = sbr.rel (0) target = $region25
    $region24: #{tpu_custom_call.1} parent=1 // pred_region
      %87 = vsyncadd [#allocation13], 0
      %s88 = sshll.u32 %s5, 4
      %s89 = int_to_ptr.hbm [resolvable:$true] %s88
      %s90 = sshll.u32 [#allocation12], 4
      %s91 = int_to_ptr.vmem [resolvable:$true] %s90
      %96 = dma.hbm_to_vmem [thread:$0]  %s89, 2048, %s91, [#allocation13], 64, 64, 4
    $region25: #{tpu_custom_call.1} parent=1 // pred_fallthru
      _
    // Predicated region
    $region26: #{tpu_custom_call.1} parent=1 // pred_check
      _
    $region27: #{tpu_custom_call.1} parent=1 // pred_check_branch
      %98 = sbr.rel (0) target = $region29
    $region28: #{tpu_custom_call.1} parent=1 // pred_region
      %100 = vsyncadd [#allocation13], 0
      %s102 = sshll.u32 %s6, 4
      %s103 = int_to_ptr.hbm [resolvable:$true] %s102
      %s104 = sshll.u32 [#allocation14], 4
      %s105 = int_to_ptr.vmem [resolvable:$true] %s104
      %107 = dma.hbm_to_vmem [thread:$0]  %s103, 16, %s105, [#allocation13]
    $region29: #{tpu_custom_call.1} parent=1 // pred_fallthru
      _
    // Predicated region
    $region30: #{tpu_custom_call.1} parent=1 // pred_check
      _
    $region31: #{tpu_custom_call.1} parent=1 // pred_check_branch
      %109 = sbr.rel (0) target = $region33
    $region32: #{tpu_custom_call.1} parent=1 // pred_region
      %111 = vsyncadd [#allocation16], 0
      %s112 = sshll.u32 %s7, 4
      %s113 = int_to_ptr.hbm [resolvable:$true] %s112
      %s114 = sshll.u32 [#allocation15], 4
      %s115 = int_to_ptr.vmem [resolvable:$true] %s114
      %120 = dma.hbm_to_vmem [thread:$0]  %s113, 1024, %s115, [#allocation16], 64, 64, 4
    $region33: #{tpu_custom_call.1} parent=1 // pred_fallthru
      _
    // Predicated region
    $region34: #{tpu_custom_call.1} parent=1 // pred_check
      _
    $region35: #{tpu_custom_call.1} parent=1 // pred_check_branch
      %122 = sbr.rel (0) target = $region37
    $region36: #{tpu_custom_call.1} parent=1 // pred_region
      %124 = vsyncadd [#allocation16], 0
      %s126 = sshll.u32 %s8, 4
      %s127 = int_to_ptr.hbm [resolvable:$true] %s126
      %s128 = sshll.u32 [#allocation17], 4
      %s129 = int_to_ptr.vmem [resolvable:$true] %s128
      %131 = dma.hbm_to_vmem [thread:$0]  %s127, 16, %s129, [#allocation16]
    $region37: #{tpu_custom_call.1} parent=1 // pred_fallthru
      _
    // Predicated region
    $region38: #{tpu_custom_call.1} parent=1 // pred_check
      _
    $region39: #{tpu_custom_call.1} parent=1 // pred_check_branch
      %133 = sbr.rel (0) target = $region41
    $region40: #{tpu_custom_call.1} parent=1 // pred_region
      %135 = vsyncadd [#allocation19], 0
      %s137 = sshll.u32 %s9, 4
      %s138 = int_to_ptr.hbm [resolvable:$true] %s137
      %s139 = sshll.u32 [#allocation18], 4
      %s140 = int_to_ptr.vmem [resolvable:$true] %s139
      %142 = dma.hbm_to_vmem [thread:$0]  %s138, 64, %s140, [#allocation19]
    $region41: #{tpu_custom_call.1} parent=1 // pred_fallthru
      _
    // Predicated region
    $region42: #{tpu_custom_call.1} parent=1 // pred_check
      _
    $region43: #{tpu_custom_call.1} parent=1 // pred_check_branch
      %144 = sbr.rel (0) target = $region45
    $region44: #{tpu_custom_call.1} parent=1 // pred_region
      _
    $region45: #{tpu_custom_call.1} parent=1 // pred_fallthru
      _
    // Predicated region
    $region46: #{tpu_custom_call.1} parent=1 // pred_check
      _
    $region47: #{tpu_custom_call.1} parent=1 // pred_check_branch
      %146 = sbr.rel (0) target = $region49
    $region48: #{tpu_custom_call.1} parent=1 // pred_region
      %148 = dma.done [#allocation4], 512
    $region49: #{tpu_custom_call.1} parent=1 // pred_fallthru
      _
    // Predicated region
    $region50: #{tpu_custom_call.1} parent=1 // pred_check
      _
    $region51: #{tpu_custom_call.1} parent=1 // pred_check_branch
      %150 = sbr.rel (0) target = $region53
    $region52: #{tpu_custom_call.1} parent=1 // pred_region
      %152 = dma.done [#allocation7], 64
    $region53: #{tpu_custom_call.1} parent=1 // pred_fallthru
      _
    // Predicated region
    $region54: #{tpu_custom_call.1} parent=1 // pred_check
      _
    $region55: #{tpu_custom_call.1} parent=1 // pred_check_branch
      %154 = sbr.rel (0) target = $region57
    $region56: #{tpu_custom_call.1} parent=1 // pred_region
      %156 = dma.done [#allocation7], 49152
    $region57: #{tpu_custom_call.1} parent=1 // pred_fallthru
      _
    // Predicated region
    $region58: #{tpu_custom_call.1} parent=1 // pred_check
      _
    $region59: #{tpu_custom_call.1} parent=1 // pred_check_branch
      %158 = sbr.rel (0) target = $region61
    $region60: #{tpu_custom_call.1} parent=1 // pred_region
      %160 = dma.done [#allocation10], 6144
    $region61: #{tpu_custom_call.1} parent=1 // pred_fallthru
      _
    // Predicated region
    $region62: #{tpu_custom_call.1} parent=1 // pred_check
      _
    $region63: #{tpu_custom_call.1} parent=1 // pred_check_branch
      %162 = sbr.rel (0) target = $region65
    $region64: #{tpu_custom_call.1} parent=1 // pred_region
      %164 = dma.done [#allocation10], 96
    $region65: #{tpu_custom_call.1} parent=1 // pred_fallthru
      _
    // Predicated region
    $region66: #{tpu_custom_call.1} parent=1 // pred_check
      _
    $region67: #{tpu_custom_call.1} parent=1 // pred_check_branch
      %166 = sbr.rel (0) target = $region69
    $region68: #{tpu_custom_call.1} parent=1 // pred_region
      %168 = dma.done [#allocation13], 2048
    $region69: #{tpu_custom_call.1} parent=1 // pred_fallthru
      _
    // Predicated region
    $region70: #{tpu_custom_call.1} parent=1 // pred_check
      _
    $region71: #{tpu_custom_call.1} parent=1 // pred_check_branch
      %170 = sbr.rel (0) target = $region73
    $region72: #{tpu_custom_call.1} parent=1 // pred_region
      %172 = dma.done [#allocation13], 16
    $region73: #{tpu_custom_call.1} parent=1 // pred_fallthru
      _
    // Predicated region
    $region74: #{tpu_custom_call.1} parent=1 // pred_check
      _
    $region75: #{tpu_custom_call.1} parent=1 // pred_check_branch
      %174 = sbr.rel (0) target = $region77
    $region76: #{tpu_custom_call.1} parent=1 // pred_region
      %176 = dma.done [#allocation16], 1024
    $region77: #{tpu_custom_call.1} parent=1 // pred_fallthru
      _
    // Predicated region
    $region78: #{tpu_custom_call.1} parent=1 // pred_check
      _
    $region79: #{tpu_custom_call.1} parent=1 // pred_check_branch
      %178 = sbr.rel (0) target = $region81
    $region80: #{tpu_custom_call.1} parent=1 // pred_region
      %180 = dma.done [#allocation16], 16
    $region81: #{tpu_custom_call.1} parent=1 // pred_fallthru
      _
    // Predicated region
    $region82: #{tpu_custom_call.1} parent=1 // pred_check
      _
    $region83: #{tpu_custom_call.1} parent=1 // pred_check_branch
      %182 = sbr.rel (0) target = $region85
    $region84: #{tpu_custom_call.1} parent=1 // pred_region
      %184 = dma.done [#allocation19], 64
    $region85: #{tpu_custom_call.1} parent=1 // pred_fallthru
      _
    %v185 = vld [vmem:[#allocation3] sm:$0xff]
    %v186 = vld [vmem:[#allocation3 + $0x8] sm:$0xff]
    %v187 = vld [vmem:[#allocation3 + $0x10] sm:$0xff]
    %v188 = vld [vmem:[#allocation3 + $0x18] sm:$0xff]
    %v189 = vld [vmem:[#allocation8] sm:$0xff]
    %v190 = vld [vmem:[#allocation8 + $0x8] sm:$0xff]
    %v191 = vld [vmem:[#allocation8 + $0x10] sm:$0xff]
    %v192 = vld [vmem:[#allocation8 + $0x18] sm:$0xff]
    %v193 = vld [vmem:[#allocation8 + $0x20] sm:$0xff]
    %v194 = vld [vmem:[#allocation8 + $0x28] sm:$0xff]
    %v195 = vld [vmem:[#allocation8 + $0x30] sm:$0xff]
    %v196 = vld [vmem:[#allocation8 + $0x38] sm:$0xff]
    %v197 = vld [vmem:[#allocation8 + $0x40] sm:$0xff]
    %v198 = vld [vmem:[#allocation8 + $0x48] sm:$0xff]
    %v199 = vld [vmem:[#allocation8 + $0x50] sm:$0xff]
    %v200 = vld [vmem:[#allocation8 + $0x58] sm:$0xff]
    %v201 = vld [vmem:[#allocation8 + $0x60] sm:$0xff]
    %v202 = vld [vmem:[#allocation8 + $0x68] sm:$0xff]
    %v203 = vld [vmem:[#allocation8 + $0x70] sm:$0xff]
    %v204 = vld [vmem:[#allocation8 + $0x78] sm:$0xff]
    %v205 = vld [vmem:[#allocation8 + $0x80] sm:$0xff]
    %v206 = vld [vmem:[#allocation8 + $0x88] sm:$0xff]
    %v207 = vld [vmem:[#allocation8 + $0x90] sm:$0xff]
    %v208 = vld [vmem:[#allocation8 + $0x98] sm:$0xff]
    %v209 = vld [vmem:[#allocation8 + $0xa0] sm:$0xff]
    %v210 = vld [vmem:[#allocation8 + $0xa8] sm:$0xff]
    %v211 = vld [vmem:[#allocation8 + $0xb0] sm:$0xff]
    %v212 = vld [vmem:[#allocation8 + $0xb8] sm:$0xff]
    %v213 = vld [vmem:[#allocation8 + $0xc0] sm:$0xff]
    %v214 = vld [vmem:[#allocation8 + $0xc8] sm:$0xff]
    %v215 = vld [vmem:[#allocation8 + $0xd0] sm:$0xff]
    %v216 = vld [vmem:[#allocation8 + $0xd8] sm:$0xff]
    %v217 = vld [vmem:[#allocation8 + $0xe0] sm:$0xff]
    %v218 = vld [vmem:[#allocation8 + $0xe8] sm:$0xff]
    %v219 = vld [vmem:[#allocation8 + $0xf0] sm:$0xff]
    %v220 = vld [vmem:[#allocation8 + $0xf8] sm:$0xff]
    %v221 = vld [vmem:[#allocation8 + $0x100] sm:$0xff]
    %v222 = vld [vmem:[#allocation8 + $0x108] sm:$0xff]
    %v223 = vld [vmem:[#allocation8 + $0x110] sm:$0xff]
    %v224 = vld [vmem:[#allocation8 + $0x118] sm:$0xff]
    %v225 = vld [vmem:[#allocation8 + $0x120] sm:$0xff]
    %v226 = vld [vmem:[#allocation8 + $0x128] sm:$0xff]
    %v227 = vld [vmem:[#allocation8 + $0x130] sm:$0xff]
    %v228 = vld [vmem:[#allocation8 + $0x138] sm:$0xff]
    %v229 = vld [vmem:[#allocation8 + $0x140] sm:$0xff]
    %v230 = vld [vmem:[#allocation8 + $0x148] sm:$0xff]
    %v231 = vld [vmem:[#allocation8 + $0x150] sm:$0xff]
    %v232 = vld [vmem:[#allocation8 + $0x158] sm:$0xff]
    %v233 = vld [vmem:[#allocation8 + $0x160] sm:$0xff]
    %v234 = vld [vmem:[#allocation8 + $0x168] sm:$0xff]
    %v235 = vld [vmem:[#allocation8 + $0x170] sm:$0xff]
    %v236 = vld [vmem:[#allocation8 + $0x178] sm:$0xff]
    %v237 = vld [vmem:[#allocation8 + $0x180] sm:$0xff]
    %v238 = vld [vmem:[#allocation8 + $0x188] sm:$0xff]
    %v239 = vld [vmem:[#allocation8 + $0x190] sm:$0xff]
    %v240 = vld [vmem:[#allocation8 + $0x198] sm:$0xff]
    %v241 = vld [vmem:[#allocation8 + $0x1a0] sm:$0xff]
    %v242 = vld [vmem:[#allocation8 + $0x1a8] sm:$0xff]
    %v243 = vld [vmem:[#allocation8 + $0x1b0] sm:$0xff]
    %v244 = vld [vmem:[#allocation8 + $0x1b8] sm:$0xff]
    %v245 = vld [vmem:[#allocation8 + $0x1c0] sm:$0xff]
    %v246 = vld [vmem:[#allocation8 + $0x1c8] sm:$0xff]
    %v247 = vld [vmem:[#allocation8 + $0x1d0] sm:$0xff]
    %v248 = vld [vmem:[#allocation8 + $0x1d8] sm:$0xff]
    %v249 = vld [vmem:[#allocation8 + $0x1e0] sm:$0xff]
    %v250 = vld [vmem:[#allocation8 + $0x1e8] sm:$0xff]
    %v251 = vld [vmem:[#allocation8 + $0x1f0] sm:$0xff]
    %v252 = vld [vmem:[#allocation8 + $0x1f8] sm:$0xff]
    %v253 = vld [vmem:[#allocation8 + $0x200] sm:$0xff]
    %v254 = vld [vmem:[#allocation8 + $0x208] sm:$0xff]
    %v255 = vld [vmem:[#allocation8 + $0x210] sm:$0xff]
    %v256 = vld [vmem:[#allocation8 + $0x218] sm:$0xff]
    %v257 = vld [vmem:[#allocation8 + $0x220] sm:$0xff]
    %v258 = vld [vmem:[#allocation8 + $0x228] sm:$0xff]
    %v259 = vld [vmem:[#allocation8 + $0x230] sm:$0xff]
    %v260 = vld [vmem:[#allocation8 + $0x238] sm:$0xff]
    %v261 = vld [vmem:[#allocation8 + $0x240] sm:$0xff]
    %v262 = vld [vmem:[#allocation8 + $0x248] sm:$0xff]
    %v263 = vld [vmem:[#allocation8 + $0x250] sm:$0xff]
    %v264 = vld [vmem:[#allocation8 + $0x258] sm:$0xff]
    %v265 = vld [vmem:[#allocation8 + $0x260] sm:$0xff]
    %v266 = vld [vmem:[#allocation8 + $0x268] sm:$0xff]
    %v267 = vld [vmem:[#allocation8 + $0x270] sm:$0xff]
    %v268 = vld [vmem:[#allocation8 + $0x278] sm:$0xff]
    %v269 = vld [vmem:[#allocation8 + $0x280] sm:$0xff]
    %v270 = vld [vmem:[#allocation8 + $0x288] sm:$0xff]
    %v271 = vld [vmem:[#allocation8 + $0x290] sm:$0xff]
    %v272 = vld [vmem:[#allocation8 + $0x298] sm:$0xff]
    %v273 = vld [vmem:[#allocation8 + $0x2a0] sm:$0xff]
    %v274 = vld [vmem:[#allocation8 + $0x2a8] sm:$0xff]
    %v275 = vld [vmem:[#allocation8 + $0x2b0] sm:$0xff]
    %v276 = vld [vmem:[#allocation8 + $0x2b8] sm:$0xff]
    %v277 = vld [vmem:[#allocation8 + $0x2c0] sm:$0xff]
    %v278 = vld [vmem:[#allocation8 + $0x2c8] sm:$0xff]
    %v279 = vld [vmem:[#allocation8 + $0x2d0] sm:$0xff]
    %v280 = vld [vmem:[#allocation8 + $0x2d8] sm:$0xff]
    %v281 = vld [vmem:[#allocation8 + $0x2e0] sm:$0xff]
    %v282 = vld [vmem:[#allocation8 + $0x2e8] sm:$0xff]
    %v283 = vld [vmem:[#allocation8 + $0x2f0] sm:$0xff]
    %v284 = vld [vmem:[#allocation8 + $0x2f8] sm:$0xff]
    %v285 = vld [vmem:[#allocation8 + $0x300] sm:$0xff]
    %v286 = vld [vmem:[#allocation8 + $0x308] sm:$0xff]
    %v287 = vld [vmem:[#allocation8 + $0x310] sm:$0xff]
    %v288 = vld [vmem:[#allocation8 + $0x318] sm:$0xff]
    %v289 = vld [vmem:[#allocation8 + $0x320] sm:$0xff]
    %v290 = vld [vmem:[#allocation8 + $0x328] sm:$0xff]
    %v291 = vld [vmem:[#allocation8 + $0x330] sm:$0xff]
    %v292 = vld [vmem:[#allocation8 + $0x338] sm:$0xff]
    %v293 = vld [vmem:[#allocation8 + $0x340] sm:$0xff]
    %v294 = vld [vmem:[#allocation8 + $0x348] sm:$0xff]
    %v295 = vld [vmem:[#allocation8 + $0x350] sm:$0xff]
    %v296 = vld [vmem:[#allocation8 + $0x358] sm:$0xff]
    %v297 = vld [vmem:[#allocation8 + $0x360] sm:$0xff]
    %v298 = vld [vmem:[#allocation8 + $0x368] sm:$0xff]
    %v299 = vld [vmem:[#allocation8 + $0x370] sm:$0xff]
    %v300 = vld [vmem:[#allocation8 + $0x378] sm:$0xff]
    %v301 = vld [vmem:[#allocation8 + $0x380] sm:$0xff]
    %v302 = vld [vmem:[#allocation8 + $0x388] sm:$0xff]
    %v303 = vld [vmem:[#allocation8 + $0x390] sm:$0xff]
    %v304 = vld [vmem:[#allocation8 + $0x398] sm:$0xff]
    %v305 = vld [vmem:[#allocation8 + $0x3a0] sm:$0xff]
    %v306 = vld [vmem:[#allocation8 + $0x3a8] sm:$0xff]
    %v307 = vld [vmem:[#allocation8 + $0x3b0] sm:$0xff]
    %v308 = vld [vmem:[#allocation8 + $0x3b8] sm:$0xff]
    %v309 = vld [vmem:[#allocation8 + $0x3c0] sm:$0xff]
    %v310 = vld [vmem:[#allocation8 + $0x3c8] sm:$0xff]
    %v311 = vld [vmem:[#allocation8 + $0x3d0] sm:$0xff]
    %v312 = vld [vmem:[#allocation8 + $0x3d8] sm:$0xff]
    %v313 = vld [vmem:[#allocation8 + $0x3e0] sm:$0xff]
    %v314 = vld [vmem:[#allocation8 + $0x3e8] sm:$0xff]
    %v315 = vld [vmem:[#allocation8 + $0x3f0] sm:$0xff]
    %v316 = vld [vmem:[#allocation8 + $0x3f8] sm:$0xff]
    %v317 = vld [vmem:[#allocation8 + $0x400] sm:$0xff]
    %v318 = vld [vmem:[#allocation8 + $0x408] sm:$0xff]
    %v319 = vld [vmem:[#allocation8 + $0x410] sm:$0xff]
    %v320 = vld [vmem:[#allocation8 + $0x418] sm:$0xff]
    %v321 = vld [vmem:[#allocation8 + $0x420] sm:$0xff]
    %v322 = vld [vmem:[#allocation8 + $0x428] sm:$0xff]
    %v323 = vld [vmem:[#allocation8 + $0x430] sm:$0xff]
    %v324 = vld [vmem:[#allocation8 + $0x438] sm:$0xff]
    %v325 = vld [vmem:[#allocation8 + $0x440] sm:$0xff]
    %v326 = vld [vmem:[#allocation8 + $0x448] sm:$0xff]
    %v327 = vld [vmem:[#allocation8 + $0x450] sm:$0xff]
    %v328 = vld [vmem:[#allocation8 + $0x458] sm:$0xff]
    %v329 = vld [vmem:[#allocation8 + $0x460] sm:$0xff]
    %v330 = vld [vmem:[#allocation8 + $0x468] sm:$0xff]
    %v331 = vld [vmem:[#allocation8 + $0x470] sm:$0xff]
    %v332 = vld [vmem:[#allocation8 + $0x478] sm:$0xff]
    %v333 = vld [vmem:[#allocation8 + $0x480] sm:$0xff]
    %v334 = vld [vmem:[#allocation8 + $0x488] sm:$0xff]
    %v335 = vld [vmem:[#allocation8 + $0x490] sm:$0xff]
    %v336 = vld [vmem:[#allocation8 + $0x498] sm:$0xff]
    %v337 = vld [vmem:[#allocation8 + $0x4a0] sm:$0xff]
    %v338 = vld [vmem:[#allocation8 + $0x4a8] sm:$0xff]
    %v339 = vld [vmem:[#allocation8 + $0x4b0] sm:$0xff]
    %v340 = vld [vmem:[#allocation8 + $0x4b8] sm:$0xff]
    %v341 = vld [vmem:[#allocation8 + $0x4c0] sm:$0xff]
    %v342 = vld [vmem:[#allocation8 + $0x4c8] sm:$0xff]
    %v343 = vld [vmem:[#allocation8 + $0x4d0] sm:$0xff]
    %v344 = vld [vmem:[#allocation8 + $0x4d8] sm:$0xff]
    %v345 = vld [vmem:[#allocation8 + $0x4e0] sm:$0xff]
    %v346 = vld [vmem:[#allocation8 + $0x4e8] sm:$0xff]
    %v347 = vld [vmem:[#allocation8 + $0x4f0] sm:$0xff]
    %v348 = vld [vmem:[#allocation8 + $0x4f8] sm:$0xff]
    %v349 = vld [vmem:[#allocation8 + $0x500] sm:$0xff]
    %v350 = vld [vmem:[#allocation8 + $0x508] sm:$0xff]
    %v351 = vld [vmem:[#allocation8 + $0x510] sm:$0xff]
    %v352 = vld [vmem:[#allocation8 + $0x518] sm:$0xff]
    %v353 = vld [vmem:[#allocation8 + $0x520] sm:$0xff]
    %v354 = vld [vmem:[#allocation8 + $0x528] sm:$0xff]
    %v355 = vld [vmem:[#allocation8 + $0x530] sm:$0xff]
    %v356 = vld [vmem:[#allocation8 + $0x538] sm:$0xff]
    %v357 = vld [vmem:[#allocation8 + $0x540] sm:$0xff]
    %v358 = vld [vmem:[#allocation8 + $0x548] sm:$0xff]
    %v359 = vld [vmem:[#allocation8 + $0x550] sm:$0xff]
    %v360 = vld [vmem:[#allocation8 + $0x558] sm:$0xff]
    %v361 = vld [vmem:[#allocation8 + $0x560] sm:$0xff]
    %v362 = vld [vmem:[#allocation8 + $0x568] sm:$0xff]
    %v363 = vld [vmem:[#allocation8 + $0x570] sm:$0xff]
    %v364 = vld [vmem:[#allocation8 + $0x578] sm:$0xff]
    %v365 = vld [vmem:[#allocation8 + $0x580] sm:$0xff]
    %v366 = vld [vmem:[#allocation8 + $0x588] sm:$0xff]
    %v367 = vld [vmem:[#allocation8 + $0x590] sm:$0xff]
    %v368 = vld [vmem:[#allocation8 + $0x598] sm:$0xff]
    %v369 = vld [vmem:[#allocation8 + $0x5a0] sm:$0xff]
    %v370 = vld [vmem:[#allocation8 + $0x5a8] sm:$0xff]
    %v371 = vld [vmem:[#allocation8 + $0x5b0] sm:$0xff]
    %v372 = vld [vmem:[#allocation8 + $0x5b8] sm:$0xff]
    %v373 = vld [vmem:[#allocation8 + $0x5c0] sm:$0xff]
    %v374 = vld [vmem:[#allocation8 + $0x5c8] sm:$0xff]
    %v375 = vld [vmem:[#allocation8 + $0x5d0] sm:$0xff]
    %v376 = vld [vmem:[#allocation8 + $0x5d8] sm:$0xff]
    %v377 = vld [vmem:[#allocation8 + $0x5e0] sm:$0xff]
    %v378 = vld [vmem:[#allocation8 + $0x5e8] sm:$0xff]
    %v379 = vld [vmem:[#allocation8 + $0x5f0] sm:$0xff]
    %v380 = vld [vmem:[#allocation8 + $0x5f8] sm:$0xff]
    %v381 = vld [vmem:[#allocation8 + $0x600] sm:$0xff]
    %v382 = vld [vmem:[#allocation8 + $0x608] sm:$0xff]
    %v383 = vld [vmem:[#allocation8 + $0x610] sm:$0xff]
    %v384 = vld [vmem:[#allocation8 + $0x618] sm:$0xff]
    %v385 = vld [vmem:[#allocation8 + $0x620] sm:$0xff]
    %v386 = vld [vmem:[#allocation8 + $0x628] sm:$0xff]
    %v387 = vld [vmem:[#allocation8 + $0x630] sm:$0xff]
    %v388 = vld [vmem:[#allocation8 + $0x638] sm:$0xff]
    %v389 = vld [vmem:[#allocation8 + $0x640] sm:$0xff]
    %v390 = vld [vmem:[#allocation8 + $0x648] sm:$0xff]
    %v391 = vld [vmem:[#allocation8 + $0x650] sm:$0xff]
    %v392 = vld [vmem:[#allocation8 + $0x658] sm:$0xff]
    %v393 = vld [vmem:[#allocation8 + $0x660] sm:$0xff]
    %v394 = vld [vmem:[#allocation8 + $0x668] sm:$0xff]
    %v395 = vld [vmem:[#allocation8 + $0x670] sm:$0xff]
    %v396 = vld [vmem:[#allocation8 + $0x678] sm:$0xff]
    %v397 = vld [vmem:[#allocation8 + $0x680] sm:$0xff]
    %v398 = vld [vmem:[#allocation8 + $0x688] sm:$0xff]
    %v399 = vld [vmem:[#allocation8 + $0x690] sm:$0xff]
    %v400 = vld [vmem:[#allocation8 + $0x698] sm:$0xff]
    %v401 = vld [vmem:[#allocation8 + $0x6a0] sm:$0xff]
    %v402 = vld [vmem:[#allocation8 + $0x6a8] sm:$0xff]
    %v403 = vld [vmem:[#allocation8 + $0x6b0] sm:$0xff]
    %v404 = vld [vmem:[#allocation8 + $0x6b8] sm:$0xff]
    %v405 = vld [vmem:[#allocation8 + $0x6c0] sm:$0xff]
    %v406 = vld [vmem:[#allocation8 + $0x6c8] sm:$0xff]
    %v407 = vld [vmem:[#allocation8 + $0x6d0] sm:$0xff]
    %v408 = vld [vmem:[#allocation8 + $0x6d8] sm:$0xff]
    %v409 = vld [vmem:[#allocation8 + $0x6e0] sm:$0xff]
    %v410 = vld [vmem:[#allocation8 + $0x6e8] sm:$0xff]
    %v411 = vld [vmem:[#allocation8 + $0x6f0] sm:$0xff]
    %v412 = vld [vmem:[#allocation8 + $0x6f8] sm:$0xff]
    %v413 = vld [vmem:[#allocation8 + $0x700] sm:$0xff]
    %v414 = vld [vmem:[#allocation8 + $0x708] sm:$0xff]
    %v415 = vld [vmem:[#allocation8 + $0x710] sm:$0xff]
    %v416 = vld [vmem:[#allocation8 + $0x718] sm:$0xff]
    %v417 = vld [vmem:[#allocation8 + $0x720] sm:$0xff]
    %v418 = vld [vmem:[#allocation8 + $0x728] sm:$0xff]
    %v419 = vld [vmem:[#allocation8 + $0x730] sm:$0xff]
    %v420 = vld [vmem:[#allocation8 + $0x738] sm:$0xff]
    %v421 = vld [vmem:[#allocation8 + $0x740] sm:$0xff]
    %v422 = vld [vmem:[#allocation8 + $0x748] sm:$0xff]
    %v423 = vld [vmem:[#allocation8 + $0x750] sm:$0xff]
    %v424 = vld [vmem:[#allocation8 + $0x758] sm:$0xff]
    %v425 = vld [vmem:[#allocation8 + $0x760] sm:$0xff]
    %v426 = vld [vmem:[#allocation8 + $0x768] sm:$0xff]
    %v427 = vld [vmem:[#allocation8 + $0x770] sm:$0xff]
    %v428 = vld [vmem:[#allocation8 + $0x778] sm:$0xff]
    %v429 = vld [vmem:[#allocation8 + $0x780] sm:$0xff]
    %v430 = vld [vmem:[#allocation8 + $0x788] sm:$0xff]
    %v431 = vld [vmem:[#allocation8 + $0x790] sm:$0xff]
    %v432 = vld [vmem:[#allocation8 + $0x798] sm:$0xff]
    %v433 = vld [vmem:[#allocation8 + $0x7a0] sm:$0xff]
    %v434 = vld [vmem:[#allocation8 + $0x7a8] sm:$0xff]
    %v435 = vld [vmem:[#allocation8 + $0x7b0] sm:$0xff]
    %v436 = vld [vmem:[#allocation8 + $0x7b8] sm:$0xff]
    %v437 = vld [vmem:[#allocation8 + $0x7c0] sm:$0xff]
    %v438 = vld [vmem:[#allocation8 + $0x7c8] sm:$0xff]
    %v439 = vld [vmem:[#allocation8 + $0x7d0] sm:$0xff]
    %v440 = vld [vmem:[#allocation8 + $0x7d8] sm:$0xff]
    %v441 = vld [vmem:[#allocation8 + $0x7e0] sm:$0xff]
    %v442 = vld [vmem:[#allocation8 + $0x7e8] sm:$0xff]
    %v443 = vld [vmem:[#allocation8 + $0x7f0] sm:$0xff]
    %v444 = vld [vmem:[#allocation8 + $0x7f8] sm:$0xff]
    %v445 = vld [vmem:[#allocation8 + $0x800] sm:$0xff]
    %v446 = vld [vmem:[#allocation8 + $0x808] sm:$0xff]
    %v447 = vld [vmem:[#allocation8 + $0x810] sm:$0xff]
    %v448 = vld [vmem:[#allocation8 + $0x818] sm:$0xff]
    %v449 = vld [vmem:[#allocation8 + $0x820] sm:$0xff]
    %v450 = vld [vmem:[#allocation8 + $0x828] sm:$0xff]
    %v451 = vld [vmem:[#allocation8 + $0x830] sm:$0xff]
    %v452 = vld [vmem:[#allocation8 + $0x838] sm:$0xff]
    %v453 = vld [vmem:[#allocation8 + $0x840] sm:$0xff]
    %v454 = vld [vmem:[#allocation8 + $0x848] sm:$0xff]
    %v455 = vld [vmem:[#allocation8 + $0x850] sm:$0xff]
    %v456 = vld [vmem:[#allocation8 + $0x858] sm:$0xff]
    %v457 = vld [vmem:[#allocation8 + $0x860] sm:$0xff]
    %v458 = vld [vmem:[#allocation8 + $0x868] sm:$0xff]
    %v459 = vld [vmem:[#allocation8 + $0x870] sm:$0xff]
    %v460 = vld [vmem:[#allocation8 + $0x878] sm:$0xff]
    %v461 = vld [vmem:[#allocation8 + $0x880] sm:$0xff]
    %v462 = vld [vmem:[#allocation8 + $0x888] sm:$0xff]
    %v463 = vld [vmem:[#allocation8 + $0x890] sm:$0xff]
    %v464 = vld [vmem:[#allocation8 + $0x898] sm:$0xff]
    %v465 = vld [vmem:[#allocation8 + $0x8a0] sm:$0xff]
    %v466 = vld [vmem:[#allocation8 + $0x8a8] sm:$0xff]
    %v467 = vld [vmem:[#allocation8 + $0x8b0] sm:$0xff]
    %v468 = vld [vmem:[#allocation8 + $0x8b8] sm:$0xff]
    %v469 = vld [vmem:[#allocation8 + $0x8c0] sm:$0xff]
    %v470 = vld [vmem:[#allocation8 + $0x8c8] sm:$0xff]
    %v471 = vld [vmem:[#allocation8 + $0x8d0] sm:$0xff]
    %v472 = vld [vmem:[#allocation8 + $0x8d8] sm:$0xff]
    %v473 = vld [vmem:[#allocation8 + $0x8e0] sm:$0xff]
    %v474 = vld [vmem:[#allocation8 + $0x8e8] sm:$0xff]
    %v475 = vld [vmem:[#allocation8 + $0x8f0] sm:$0xff]
    %v476 = vld [vmem:[#allocation8 + $0x8f8] sm:$0xff]
    %v477 = vld [vmem:[#allocation8 + $0x900] sm:$0xff]
    %v478 = vld [vmem:[#allocation8 + $0x908] sm:$0xff]
    %v479 = vld [vmem:[#allocation8 + $0x910] sm:$0xff]
    %v480 = vld [vmem:[#allocation8 + $0x918] sm:$0xff]
    %v481 = vld [vmem:[#allocation8 + $0x920] sm:$0xff]
    %v482 = vld [vmem:[#allocation8 + $0x928] sm:$0xff]
    %v483 = vld [vmem:[#allocation8 + $0x930] sm:$0xff]
    %v484 = vld [vmem:[#allocation8 + $0x938] sm:$0xff]
    %v485 = vld [vmem:[#allocation8 + $0x940] sm:$0xff]
    %v486 = vld [vmem:[#allocation8 + $0x948] sm:$0xff]
    %v487 = vld [vmem:[#allocation8 + $0x950] sm:$0xff]
    %v488 = vld [vmem:[#allocation8 + $0x958] sm:$0xff]
    %v489 = vld [vmem:[#allocation8 + $0x960] sm:$0xff]
    %v490 = vld [vmem:[#allocation8 + $0x968] sm:$0xff]
    %v491 = vld [vmem:[#allocation8 + $0x970] sm:$0xff]
    %v492 = vld [vmem:[#allocation8 + $0x978] sm:$0xff]
    %v493 = vld [vmem:[#allocation8 + $0x980] sm:$0xff]
    %v494 = vld [vmem:[#allocation8 + $0x988] sm:$0xff]
    %v495 = vld [vmem:[#allocation8 + $0x990] sm:$0xff]
    %v496 = vld [vmem:[#allocation8 + $0x998] sm:$0xff]
    %v497 = vld [vmem:[#allocation8 + $0x9a0] sm:$0xff]
    %v498 = vld [vmem:[#allocation8 + $0x9a8] sm:$0xff]
    %v499 = vld [vmem:[#allocation8 + $0x9b0] sm:$0xff]
    %v500 = vld [vmem:[#allocation8 + $0x9b8] sm:$0xff]
    %v501 = vld [vmem:[#allocation8 + $0x9c0] sm:$0xff]
    %v502 = vld [vmem:[#allocation8 + $0x9c8] sm:$0xff]
    %v503 = vld [vmem:[#allocation8 + $0x9d0] sm:$0xff]
    %v504 = vld [vmem:[#allocation8 + $0x9d8] sm:$0xff]
    %v505 = vld [vmem:[#allocation8 + $0x9e0] sm:$0xff]
    %v506 = vld [vmem:[#allocation8 + $0x9e8] sm:$0xff]
    %v507 = vld [vmem:[#allocation8 + $0x9f0] sm:$0xff]
    %v508 = vld [vmem:[#allocation8 + $0x9f8] sm:$0xff]
    %v509 = vld [vmem:[#allocation8 + $0xa00] sm:$0xff]
    %v510 = vld [vmem:[#allocation8 + $0xa08] sm:$0xff]
    %v511 = vld [vmem:[#allocation8 + $0xa10] sm:$0xff]
    %v512 = vld [vmem:[#allocation8 + $0xa18] sm:$0xff]
    %v513 = vld [vmem:[#allocation8 + $0xa20] sm:$0xff]
    %v514 = vld [vmem:[#allocation8 + $0xa28] sm:$0xff]
    %v515 = vld [vmem:[#allocation8 + $0xa30] sm:$0xff]
    %v516 = vld [vmem:[#allocation8 + $0xa38] sm:$0xff]
    %v517 = vld [vmem:[#allocation8 + $0xa40] sm:$0xff]
    %v518 = vld [vmem:[#allocation8 + $0xa48] sm:$0xff]
    %v519 = vld [vmem:[#allocation8 + $0xa50] sm:$0xff]
    %v520 = vld [vmem:[#allocation8 + $0xa58] sm:$0xff]
    %v521 = vld [vmem:[#allocation8 + $0xa60] sm:$0xff]
    %v522 = vld [vmem:[#allocation8 + $0xa68] sm:$0xff]
    %v523 = vld [vmem:[#allocation8 + $0xa70] sm:$0xff]
    %v524 = vld [vmem:[#allocation8 + $0xa78] sm:$0xff]
    %v525 = vld [vmem:[#allocation8 + $0xa80] sm:$0xff]
    %v526 = vld [vmem:[#allocation8 + $0xa88] sm:$0xff]
    %v527 = vld [vmem:[#allocation8 + $0xa90] sm:$0xff]
    %v528 = vld [vmem:[#allocation8 + $0xa98] sm:$0xff]
    %v529 = vld [vmem:[#allocation8 + $0xaa0] sm:$0xff]
    %v530 = vld [vmem:[#allocation8 + $0xaa8] sm:$0xff]
    %v531 = vld [vmem:[#allocation8 + $0xab0] sm:$0xff]
    %v532 = vld [vmem:[#allocation8 + $0xab8] sm:$0xff]
    %v533 = vld [vmem:[#allocation8 + $0xac0] sm:$0xff]
    %v534 = vld [vmem:[#allocation8 + $0xac8] sm:$0xff]
    %v535 = vld [vmem:[#allocation8 + $0xad0] sm:$0xff]
    %v536 = vld [vmem:[#allocation8 + $0xad8] sm:$0xff]
    %v537 = vld [vmem:[#allocation8 + $0xae0] sm:$0xff]
    %v538 = vld [vmem:[#allocation8 + $0xae8] sm:$0xff]
    %v539 = vld [vmem:[#allocation8 + $0xaf0] sm:$0xff]
    %v540 = vld [vmem:[#allocation8 + $0xaf8] sm:$0xff]
    %v541 = vld [vmem:[#allocation8 + $0xb00] sm:$0xff]
    %v542 = vld [vmem:[#allocation8 + $0xb08] sm:$0xff]
    %v543 = vld [vmem:[#allocation8 + $0xb10] sm:$0xff]
    %v544 = vld [vmem:[#allocation8 + $0xb18] sm:$0xff]
    %v545 = vld [vmem:[#allocation8 + $0xb20] sm:$0xff]
    %v546 = vld [vmem:[#allocation8 + $0xb28] sm:$0xff]
    %v547 = vld [vmem:[#allocation8 + $0xb30] sm:$0xff]
    %v548 = vld [vmem:[#allocation8 + $0xb38] sm:$0xff]
    %v549 = vld [vmem:[#allocation8 + $0xb40] sm:$0xff]
    %v550 = vld [vmem:[#allocation8 + $0xb48] sm:$0xff]
    %v551 = vld [vmem:[#allocation8 + $0xb50] sm:$0xff]
    %v552 = vld [vmem:[#allocation8 + $0xb58] sm:$0xff]
    %v553 = vld [vmem:[#allocation8 + $0xb60] sm:$0xff]
    %v554 = vld [vmem:[#allocation8 + $0xb68] sm:$0xff]
    %v555 = vld [vmem:[#allocation8 + $0xb70] sm:$0xff]
    %v556 = vld [vmem:[#allocation8 + $0xb78] sm:$0xff]
    %v557 = vld [vmem:[#allocation8 + $0xb80] sm:$0xff]
    %v558 = vld [vmem:[#allocation8 + $0xb88] sm:$0xff]
    %v559 = vld [vmem:[#allocation8 + $0xb90] sm:$0xff]
    %v560 = vld [vmem:[#allocation8 + $0xb98] sm:$0xff]
    %v561 = vld [vmem:[#allocation8 + $0xba0] sm:$0xff]
    %v562 = vld [vmem:[#allocation8 + $0xba8] sm:$0xff]
    %v563 = vld [vmem:[#allocation8 + $0xbb0] sm:$0xff]
    %v564 = vld [vmem:[#allocation8 + $0xbb8] sm:$0xff]
    %v565 = vld [vmem:[#allocation8 + $0xbc0] sm:$0xff]
    %v566 = vld [vmem:[#allocation8 + $0xbc8] sm:$0xff]
    %v567 = vld [vmem:[#allocation8 + $0xbd0] sm:$0xff]
    %v568 = vld [vmem:[#allocation8 + $0xbd8] sm:$0xff]
    %v569 = vld [vmem:[#allocation8 + $0xbe0] sm:$0xff]
    %v570 = vld [vmem:[#allocation8 + $0xbe8] sm:$0xff]
    %v571 = vld [vmem:[#allocation8 + $0xbf0] sm:$0xff]
    %v572 = vld [vmem:[#allocation8 + $0xbf8] sm:$0xff]
    %v573 = vld [vmem:[#allocation6] sm:$0xf]
    %v574 = vld [vmem:[#allocation9] sm:$0xff]
    %v575 = vld [vmem:[#allocation9 + $0x8] sm:$0xff]
    %v576 = vld [vmem:[#allocation9 + $0x10] sm:$0xff]
    %v577 = vld [vmem:[#allocation9 + $0x18] sm:$0xff]
    %v578 = vld [vmem:[#allocation9 + $0x20] sm:$0xff]
    %v579 = vld [vmem:[#allocation9 + $0x28] sm:$0xff]
    %v580 = vld [vmem:[#allocation9 + $0x30] sm:$0xff]
    %v581 = vld [vmem:[#allocation9 + $0x38] sm:$0xff]
    %v582 = vld [vmem:[#allocation9 + $0x40] sm:$0xff]
    %v583 = vld [vmem:[#allocation9 + $0x48] sm:$0xff]
    %v584 = vld [vmem:[#allocation9 + $0x50] sm:$0xff]
    %v585 = vld [vmem:[#allocation9 + $0x58] sm:$0xff]
    %v586 = vld [vmem:[#allocation9 + $0x60] sm:$0xff]
    %v587 = vld [vmem:[#allocation9 + $0x68] sm:$0xff]
    %v588 = vld [vmem:[#allocation9 + $0x70] sm:$0xff]
    %v589 = vld [vmem:[#allocation9 + $0x78] sm:$0xff]
    %v590 = vld [vmem:[#allocation9 + $0x80] sm:$0xff]
    %v591 = vld [vmem:[#allocation9 + $0x88] sm:$0xff]
    %v592 = vld [vmem:[#allocation9 + $0x90] sm:$0xff]
    %v593 = vld [vmem:[#allocation9 + $0x98] sm:$0xff]
    %v594 = vld [vmem:[#allocation9 + $0xa0] sm:$0xff]
    %v595 = vld [vmem:[#allocation9 + $0xa8] sm:$0xff]
    %v596 = vld [vmem:[#allocation9 + $0xb0] sm:$0xff]
    %v597 = vld [vmem:[#allocation9 + $0xb8] sm:$0xff]
    %v598 = vld [vmem:[#allocation9 + $0xc0] sm:$0xff]
    %v599 = vld [vmem:[#allocation9 + $0xc8] sm:$0xff]
    %v600 = vld [vmem:[#allocation9 + $0xd0] sm:$0xff]
    %v601 = vld [vmem:[#allocation9 + $0xd8] sm:$0xff]
    %v602 = vld [vmem:[#allocation9 + $0xe0] sm:$0xff]
    %v603 = vld [vmem:[#allocation9 + $0xe8] sm:$0xff]
    %v604 = vld [vmem:[#allocation9 + $0xf0] sm:$0xff]
    %v605 = vld [vmem:[#allocation9 + $0xf8] sm:$0xff]
    %v606 = vld [vmem:[#allocation9 + $0x100] sm:$0xff]
    %v607 = vld [vmem:[#allocation9 + $0x108] sm:$0xff]
    %v608 = vld [vmem:[#allocation9 + $0x110] sm:$0xff]
    %v609 = vld [vmem:[#allocation9 + $0x118] sm:$0xff]
    %v610 = vld [vmem:[#allocation9 + $0x120] sm:$0xff]
    %v611 = vld [vmem:[#allocation9 + $0x128] sm:$0xff]
    %v612 = vld [vmem:[#allocation9 + $0x130] sm:$0xff]
    %v613 = vld [vmem:[#allocation9 + $0x138] sm:$0xff]
    %v614 = vld [vmem:[#allocation9 + $0x140] sm:$0xff]
    %v615 = vld [vmem:[#allocation9 + $0x148] sm:$0xff]
    %v616 = vld [vmem:[#allocation9 + $0x150] sm:$0xff]
    %v617 = vld [vmem:[#allocation9 + $0x158] sm:$0xff]
    %v618 = vld [vmem:[#allocation9 + $0x160] sm:$0xff]
    %v619 = vld [vmem:[#allocation9 + $0x168] sm:$0xff]
    %v620 = vld [vmem:[#allocation9 + $0x170] sm:$0xff]
    %v621 = vld [vmem:[#allocation9 + $0x178] sm:$0xff]
    %v670 = vunpack.c.l.b16 %v574
    %v671 = vunpack.c.h.b16 %v574
    %v672 = vunpack.c.l.b16 %v575
    %v673 = vunpack.c.h.b16 %v575
    %v674 = vunpack.c.l.b16 %v576
    %v675 = vunpack.c.h.b16 %v576
    %v676 = vunpack.c.l.b16 %v577
    %v677 = vunpack.c.h.b16 %v577
    %v678 = vunpack.c.l.b16 %v578
    %v679 = vunpack.c.h.b16 %v578
    %v680 = vunpack.c.l.b16 %v579
    %v681 = vunpack.c.h.b16 %v579
    %v682 = vunpack.c.l.b16 %v580
    %v683 = vunpack.c.h.b16 %v580
    %v684 = vunpack.c.l.b16 %v581
    %v685 = vunpack.c.h.b16 %v581
    %v686 = vunpack.c.l.b16 %v582
    %v687 = vunpack.c.h.b16 %v582
    %v688 = vunpack.c.l.b16 %v583
    %v689 = vunpack.c.h.b16 %v583
    %v690 = vunpack.c.l.b16 %v584
    %v691 = vunpack.c.h.b16 %v584
    %v692 = vunpack.c.l.b16 %v585
    %v693 = vunpack.c.h.b16 %v585
    %v694 = vunpack.c.l.b16 %v586
    %v695 = vunpack.c.h.b16 %v586
    %v696 = vunpack.c.l.b16 %v587
    %v697 = vunpack.c.h.b16 %v587
    %v698 = vunpack.c.l.b16 %v588
    %v699 = vunpack.c.h.b16 %v588
    %v700 = vunpack.c.l.b16 %v589
    %v701 = vunpack.c.h.b16 %v589
    %v702 = vunpack.c.l.b16 %v590
    %v703 = vunpack.c.h.b16 %v590
    %v704 = vunpack.c.l.b16 %v591
    %v705 = vunpack.c.h.b16 %v591
    %v706 = vunpack.c.l.b16 %v592
    %v707 = vunpack.c.h.b16 %v592
    %v708 = vunpack.c.l.b16 %v593
    %v709 = vunpack.c.h.b16 %v593
    %v710 = vunpack.c.l.b16 %v594
    %v711 = vunpack.c.h.b16 %v594
    %v712 = vunpack.c.l.b16 %v595
    %v713 = vunpack.c.h.b16 %v595
    %v714 = vunpack.c.l.b16 %v596
    %v715 = vunpack.c.h.b16 %v596
    %v716 = vunpack.c.l.b16 %v597
    %v717 = vunpack.c.h.b16 %v597
    %v718 = vunpack.c.l.b16 %v598
    %v719 = vunpack.c.h.b16 %v598
    %v720 = vunpack.c.l.b16 %v599
    %v721 = vunpack.c.h.b16 %v599
    %v722 = vunpack.c.l.b16 %v600
    %v723 = vunpack.c.h.b16 %v600
    %v724 = vunpack.c.l.b16 %v601
    %v725 = vunpack.c.h.b16 %v601
    %v726 = vunpack.c.l.b16 %v602
    %v727 = vunpack.c.h.b16 %v602
    %v728 = vunpack.c.l.b16 %v603
    %v729 = vunpack.c.h.b16 %v603
    %v730 = vunpack.c.l.b16 %v604
    %v731 = vunpack.c.h.b16 %v604
    %v732 = vunpack.c.l.b16 %v605
    %v733 = vunpack.c.h.b16 %v605
    %v734 = vunpack.c.l.b16 %v606
    %v735 = vunpack.c.h.b16 %v606
    %v736 = vunpack.c.l.b16 %v607
    %v737 = vunpack.c.h.b16 %v607
    %v738 = vunpack.c.l.b16 %v608
    %v739 = vunpack.c.h.b16 %v608
    %v740 = vunpack.c.l.b16 %v609
    %v741 = vunpack.c.h.b16 %v609
    %v742 = vunpack.c.l.b16 %v610
    %v743 = vunpack.c.h.b16 %v610
    %v744 = vunpack.c.l.b16 %v611
    %v745 = vunpack.c.h.b16 %v611
    %v746 = vunpack.c.l.b16 %v612
    %v747 = vunpack.c.h.b16 %v612
    %v748 = vunpack.c.l.b16 %v613
    %v749 = vunpack.c.h.b16 %v613
    %v750 = vunpack.c.l.b16 %v614
    %v751 = vunpack.c.h.b16 %v614
    %v752 = vunpack.c.l.b16 %v615
    %v753 = vunpack.c.h.b16 %v615
    %v754 = vunpack.c.l.b16 %v616
    %v755 = vunpack.c.h.b16 %v616
    %v756 = vunpack.c.l.b16 %v617
    %v757 = vunpack.c.h.b16 %v617
    %v758 = vunpack.c.l.b16 %v618
    %v759 = vunpack.c.h.b16 %v618
    %v760 = vunpack.c.l.b16 %v619
    %v761 = vunpack.c.h.b16 %v619
    %v762 = vunpack.c.l.b16 %v620
    %v763 = vunpack.c.h.b16 %v620
    %v764 = vunpack.c.l.b16 %v621
    %v765 = vunpack.c.h.b16 %v621
    %v766 = vpack.c.b16 %v676, %v670
    %v767 = vpack.c.b16 %v677, %v671
    %v768 = vpack.c.b16 %v678, %v672
    %v769 = vpack.c.b16 %v679, %v673
    %v770 = vpack.c.b16 %v680, %v674
    %v771 = vpack.c.b16 %v681, %v675
    %v772 = vpack.c.b16 %v688, %v682
    %v773 = vpack.c.b16 %v689, %v683
    %v774 = vpack.c.b16 %v690, %v684
    %v775 = vpack.c.b16 %v691, %v685
    %v776 = vpack.c.b16 %v692, %v686
    %v777 = vpack.c.b16 %v693, %v687
    %v778 = vpack.c.b16 %v700, %v694
    %v779 = vpack.c.b16 %v701, %v695
    %v780 = vpack.c.b16 %v702, %v696
    %v781 = vpack.c.b16 %v703, %v697
    %v782 = vpack.c.b16 %v704, %v698
    %v783 = vpack.c.b16 %v705, %v699
    %v784 = vpack.c.b16 %v712, %v706
    %v785 = vpack.c.b16 %v713, %v707
    %v786 = vpack.c.b16 %v714, %v708
    %v787 = vpack.c.b16 %v715, %v709
    %v788 = vpack.c.b16 %v716, %v710
    %v789 = vpack.c.b16 %v717, %v711
    %v790 = vpack.c.b16 %v724, %v718
    %v791 = vpack.c.b16 %v725, %v719
    %v792 = vpack.c.b16 %v726, %v720
    %v793 = vpack.c.b16 %v727, %v721
    %v794 = vpack.c.b16 %v728, %v722
    %v795 = vpack.c.b16 %v729, %v723
    %v796 = vpack.c.b16 %v736, %v730
    %v797 = vpack.c.b16 %v737, %v731
    %v798 = vpack.c.b16 %v738, %v732
    %v799 = vpack.c.b16 %v739, %v733
    %v800 = vpack.c.b16 %v740, %v734
    %v801 = vpack.c.b16 %v741, %v735
    %v802 = vpack.c.b16 %v748, %v742
    %v803 = vpack.c.b16 %v749, %v743
    %v804 = vpack.c.b16 %v750, %v744
    %v805 = vpack.c.b16 %v751, %v745
    %v806 = vpack.c.b16 %v752, %v746
    %v807 = vpack.c.b16 %v753, %v747
    %v808 = vpack.c.b16 %v760, %v754
    %v809 = vpack.c.b16 %v761, %v755
    %v810 = vpack.c.b16 %v762, %v756
    %v811 = vpack.c.b16 %v763, %v757
    %v812 = vpack.c.b16 %v764, %v758
    %v813 = vpack.c.b16 %v765, %v759
    %862 = vmatpush.bf16.msra.mxu0 %v808
    %863 = vmatpush.bf16.msra.mxu0 %v802
    %864 = vmatpush.bf16.msra.mxu0 %v796
    %865 = vmatpush.bf16.msra.mxu0 %v790
    %866 = vmatpush.bf16.msra.mxu0 %v784
    %867 = vmatpush.bf16.msra.mxu0 %v778
    %868 = vmatpush.bf16.msra.mxu0 %v772
    %869 = vmatpush.bf16.msra.mxu0 %v766
    %870 = vmatmul.bf16.gmra.mxu0 %v573
    %v871 = vpop.f32.mrf.mxu0
    %v872 = vadd.f32 0.0, %v871
    %v873 = vpop.f32.mrf.mxu0
    %874 = vdwg.mxu0
    %875 = vmatpush.bf16.msra.mxu0 %v809
    %876 = vmatpush.bf16.msra.mxu0 %v803
    %877 = vmatpush.bf16.msra.mxu0 %v797
    %878 = vmatpush.bf16.msra.mxu0 %v791
    %879 = vmatpush.bf16.msra.mxu0 %v785
    %880 = vmatpush.bf16.msra.mxu0 %v779
    %881 = vmatpush.bf16.msra.mxu0 %v773
    %882 = vmatpush.bf16.msra.mxu0 %v767
    %883 = vmatmul.bf16.gmra.mxu0 %v573
    %v884 = vpop.f32.mrf.mxu0
    %v885 = vadd.f32 0.0, %v884
    %v886 = vpop.f32.mrf.mxu0
    %887 = vdwg.mxu0
    %888 = vmatpush.bf16.msra.mxu0 %v810
    %889 = vmatpush.bf16.msra.mxu0 %v804
    %890 = vmatpush.bf16.msra.mxu0 %v798
    %891 = vmatpush.bf16.msra.mxu0 %v792
    %892 = vmatpush.bf16.msra.mxu0 %v786
    %893 = vmatpush.bf16.msra.mxu0 %v780
    %894 = vmatpush.bf16.msra.mxu0 %v774
    %895 = vmatpush.bf16.msra.mxu0 %v768
    %896 = vmatmul.bf16.gmra.mxu0 %v573
    %v897 = vpop.f32.mrf.mxu0
    %v898 = vadd.f32 0.0, %v897
    %v899 = vpop.f32.mrf.mxu0
    %900 = vdwg.mxu0
    %901 = vmatpush.bf16.msra.mxu0 %v811
    %902 = vmatpush.bf16.msra.mxu0 %v805
    %903 = vmatpush.bf16.msra.mxu0 %v799
    %904 = vmatpush.bf16.msra.mxu0 %v793
    %905 = vmatpush.bf16.msra.mxu0 %v787
    %906 = vmatpush.bf16.msra.mxu0 %v781
    %907 = vmatpush.bf16.msra.mxu0 %v775
    %908 = vmatpush.bf16.msra.mxu0 %v769
    %909 = vmatmul.bf16.gmra.mxu0 %v573
    %v910 = vpop.f32.mrf.mxu0
    %v911 = vadd.f32 0.0, %v910
    %v912 = vpop.f32.mrf.mxu0
    %913 = vdwg.mxu0
    %914 = vmatpush.bf16.msra.mxu0 %v812
    %915 = vmatpush.bf16.msra.mxu0 %v806
    %916 = vmatpush.bf16.msra.mxu0 %v800
    %917 = vmatpush.bf16.msra.mxu0 %v794
    %918 = vmatpush.bf16.msra.mxu0 %v788
    %919 = vmatpush.bf16.msra.mxu0 %v782
    %920 = vmatpush.bf16.msra.mxu0 %v776
    %921 = vmatpush.bf16.msra.mxu0 %v770
    %922 = vmatmul.bf16.gmra.mxu0 %v573
    %v923 = vpop.f32.mrf.mxu0
    %v924 = vadd.f32 0.0, %v923
    %v925 = vpop.f32.mrf.mxu0
    %926 = vdwg.mxu0
    %927 = vmatpush.bf16.msra.mxu0 %v813
    %928 = vmatpush.bf16.msra.mxu0 %v807
    %929 = vmatpush.bf16.msra.mxu0 %v801
    %930 = vmatpush.bf16.msra.mxu0 %v795
    %931 = vmatpush.bf16.msra.mxu0 %v789
    %932 = vmatpush.bf16.msra.mxu0 %v783
    %933 = vmatpush.bf16.msra.mxu0 %v777
    %934 = vmatpush.bf16.msra.mxu0 %v771
    %935 = vmatmul.bf16.gmra.mxu0 %v573
    %v936 = vpop.f32.mrf.mxu0
    %v937 = vadd.f32 0.0, %v936
    %v938 = vpop.f32.mrf.mxu0
    %939 = vdwg.mxu0
    %v944 = vunpack.c.l.b16 %v185
    %v945 = vunpack.c.h.b16 %v185
    %v946 = vunpack.c.l.b16 %v186
    %v947 = vunpack.c.h.b16 %v186
    %v948 = vunpack.c.l.b16 %v187
    %v949 = vunpack.c.h.b16 %v187
    %v950 = vunpack.c.l.b16 %v188
    %v951 = vunpack.c.h.b16 %v188
    %v952 = vpack.c.b16 %v944, %v944
    %v953 = vpack.c.b16 %v945, %v945
    %v954 = vpack.c.b16 %v946, %v946
    %v955 = vpack.c.b16 %v947, %v947
    %v956 = vpack.c.b16 %v948, %v948
    %v957 = vpack.c.b16 %v949, %v949
    %v958 = vpack.c.b16 %v950, %v950
    %v959 = vpack.c.b16 %v951, %v951
    %v1352 = vunpack.c.l.b16 %v189
    %v1353 = vunpack.c.h.b16 %v189
    %v1354 = vunpack.c.l.b16 %v190
    %v1355 = vunpack.c.h.b16 %v190
    %v1356 = vunpack.c.l.b16 %v191
    %v1357 = vunpack.c.h.b16 %v191
    %v1358 = vunpack.c.l.b16 %v192
    %v1359 = vunpack.c.h.b16 %v192
    %v1360 = vunpack.c.l.b16 %v193
    %v1361 = vunpack.c.h.b16 %v193
    %v1362 = vunpack.c.l.b16 %v194
    %v1363 = vunpack.c.h.b16 %v194
    %v1364 = vunpack.c.l.b16 %v195
    %v1365 = vunpack.c.h.b16 %v195
    %v1366 = vunpack.c.l.b16 %v196
    %v1367 = vunpack.c.h.b16 %v196
    %v1368 = vunpack.c.l.b16 %v197
    %v1369 = vunpack.c.h.b16 %v197
    %v1370 = vunpack.c.l.b16 %v198
    %v1371 = vunpack.c.h.b16 %v198
    %v1372 = vunpack.c.l.b16 %v199
    %v1373 = vunpack.c.h.b16 %v199
    %v1374 = vunpack.c.l.b16 %v200
    %v1375 = vunpack.c.h.b16 %v200
    %v1376 = vunpack.c.l.b16 %v201
    %v1377 = vunpack.c.h.b16 %v201
    %v1378 = vunpack.c.l.b16 %v202
    %v1379 = vunpack.c.h.b16 %v202
    %v1380 = vunpack.c.l.b16 %v203
    %v1381 = vunpack.c.h.b16 %v203
    %v1382 = vunpack.c.l.b16 %v204
    %v1383 = vunpack.c.h.b16 %v204
    %v1384 = vunpack.c.l.b16 %v205
    %v1385 = vunpack.c.h.b16 %v205
    %v1386 = vunpack.c.l.b16 %v206
    %v1387 = vunpack.c.h.b16 %v206
    %v1388 = vunpack.c.l.b16 %v207
    %v1389 = vunpack.c.h.b16 %v207
    %v1390 = vunpack.c.l.b16 %v208
    %v1391 = vunpack.c.h.b16 %v208
    %v1392 = vunpack.c.l.b16 %v209
    %v1393 = vunpack.c.h.b16 %v209
    %v1394 = vunpack.c.l.b16 %v210
    %v1395 = vunpack.c.h.b16 %v210
    %v1396 = vunpack.c.l.b16 %v211
    %v1397 = vunpack.c.h.b16 %v211
    %v1398 = vunpack.c.l.b16 %v212
    %v1399 = vunpack.c.h.b16 %v212
    %v1400 = vunpack.c.l.b16 %v213
    %v1401 = vunpack.c.h.b16 %v213
    %v1402 = vunpack.c.l.b16 %v214
    %v1403 = vunpack.c.h.b16 %v214
    %v1404 = vunpack.c.l.b16 %v215
    %v1405 = vunpack.c.h.b16 %v215
    %v1406 = vunpack.c.l.b16 %v216
    %v1407 = vunpack.c.h.b16 %v216
    %v1408 = vunpack.c.l.b16 %v217
    %v1409 = vunpack.c.h.b16 %v217
    %v1410 = vunpack.c.l.b16 %v218
    %v1411 = vunpack.c.h.b16 %v218
    %v1412 = vunpack.c.l.b16 %v219
    %v1413 = vunpack.c.h.b16 %v219
    %v1414 = vunpack.c.l.b16 %v220
    %v1415 = vunpack.c.h.b16 %v220
    %v1416 = vunpack.c.l.b16 %v221
    %v1417 = vunpack.c.h.b16 %v221
    %v1418 = vunpack.c.l.b16 %v222
    %v1419 = vunpack.c.h.b16 %v222
    %v1420 = vunpack.c.l.b16 %v223
    %v1421 = vunpack.c.h.b16 %v223
    %v1422 = vunpack.c.l.b16 %v224
    %v1423 = vunpack.c.h.b16 %v224
    %v1424 = vunpack.c.l.b16 %v225
    %v1425 = vunpack.c.h.b16 %v225
    %v1426 = vunpack.c.l.b16 %v226
    %v1427 = vunpack.c.h.b16 %v226
    %v1428 = vunpack.c.l.b16 %v227
    %v1429 = vunpack.c.h.b16 %v227
    %v1430 = vunpack.c.l.b16 %v228
    %v1431 = vunpack.c.h.b16 %v228
    %v1432 = vunpack.c.l.b16 %v229
    %v1433 = vunpack.c.h.b16 %v229
    %v1434 = vunpack.c.l.b16 %v230
    %v1435 = vunpack.c.h.b16 %v230
    %v1436 = vunpack.c.l.b16 %v231
    %v1437 = vunpack.c.h.b16 %v231
    %v1438 = vunpack.c.l.b16 %v232
    %v1439 = vunpack.c.h.b16 %v232
    %v1440 = vunpack.c.l.b16 %v233
    %v1441 = vunpack.c.h.b16 %v233
    %v1442 = vunpack.c.l.b16 %v234
    %v1443 = vunpack.c.h.b16 %v234
    %v1444 = vunpack.c.l.b16 %v235
    %v1445 = vunpack.c.h.b16 %v235
    %v1446 = vunpack.c.l.b16 %v236
    %v1447 = vunpack.c.h.b16 %v236
    %v1448 = vunpack.c.l.b16 %v237
    %v1449 = vunpack.c.h.b16 %v237
    %v1450 = vunpack.c.l.b16 %v238
    %v1451 = vunpack.c.h.b16 %v238
    %v1452 = vunpack.c.l.b16 %v239
    %v1453 = vunpack.c.h.b16 %v239
    %v1454 = vunpack.c.l.b16 %v240
    %v1455 = vunpack.c.h.b16 %v240
    %v1456 = vunpack.c.l.b16 %v241
    %v1457 = vunpack.c.h.b16 %v241
    %v1458 = vunpack.c.l.b16 %v242
    %v1459 = vunpack.c.h.b16 %v242
    %v1460 = vunpack.c.l.b16 %v243
    %v1461 = vunpack.c.h.b16 %v243
    %v1462 = vunpack.c.l.b16 %v244
    %v1463 = vunpack.c.h.b16 %v244
    %v1464 = vunpack.c.l.b16 %v245
    %v1465 = vunpack.c.h.b16 %v245
    %v1466 = vunpack.c.l.b16 %v246
    %v1467 = vunpack.c.h.b16 %v246
    %v1468 = vunpack.c.l.b16 %v247
    %v1469 = vunpack.c.h.b16 %v247
    %v1470 = vunpack.c.l.b16 %v248
    %v1471 = vunpack.c.h.b16 %v248
    %v1472 = vunpack.c.l.b16 %v249
    %v1473 = vunpack.c.h.b16 %v249
    %v1474 = vunpack.c.l.b16 %v250
    %v1475 = vunpack.c.h.b16 %v250
    %v1476 = vunpack.c.l.b16 %v251
    %v1477 = vunpack.c.h.b16 %v251
    %v1478 = vunpack.c.l.b16 %v252
    %v1479 = vunpack.c.h.b16 %v252
    %v1480 = vunpack.c.l.b16 %v253
    %v1481 = vunpack.c.h.b16 %v253
    %v1482 = vunpack.c.l.b16 %v254
    %v1483 = vunpack.c.h.b16 %v254
    %v1484 = vunpack.c.l.b16 %v255
    %v1485 = vunpack.c.h.b16 %v255
    %v1486 = vunpack.c.l.b16 %v256
    %v1487 = vunpack.c.h.b16 %v256
    %v1488 = vunpack.c.l.b16 %v257
    %v1489 = vunpack.c.h.b16 %v257
    %v1490 = vunpack.c.l.b16 %v258
    %v1491 = vunpack.c.h.b16 %v258
    %v1492 = vunpack.c.l.b16 %v259
    %v1493 = vunpack.c.h.b16 %v259
    %v1494 = vunpack.c.l.b16 %v260
    %v1495 = vunpack.c.h.b16 %v260
    %v1496 = vunpack.c.l.b16 %v261
    %v1497 = vunpack.c.h.b16 %v261
    %v1498 = vunpack.c.l.b16 %v262
    %v1499 = vunpack.c.h.b16 %v262
    %v1500 = vunpack.c.l.b16 %v263
    %v1501 = vunpack.c.h.b16 %v263
    %v1502 = vunpack.c.l.b16 %v264
    %v1503 = vunpack.c.h.b16 %v264
    %v1504 = vunpack.c.l.b16 %v265
    %v1505 = vunpack.c.h.b16 %v265
    %v1506 = vunpack.c.l.b16 %v266
    %v1507 = vunpack.c.h.b16 %v266
    %v1508 = vunpack.c.l.b16 %v267
    %v1509 = vunpack.c.h.b16 %v267
    %v1510 = vunpack.c.l.b16 %v268
    %v1511 = vunpack.c.h.b16 %v268
    %v1512 = vunpack.c.l.b16 %v269
    %v1513 = vunpack.c.h.b16 %v269
    %v1514 = vunpack.c.l.b16 %v270
    %v1515 = vunpack.c.h.b16 %v270
    %v1516 = vunpack.c.l.b16 %v271
    %v1517 = vunpack.c.h.b16 %v271
    %v1518 = vunpack.c.l.b16 %v272
    %v1519 = vunpack.c.h.b16 %v272
    %v1520 = vunpack.c.l.b16 %v273
    %v1521 = vunpack.c.h.b16 %v273
    %v1522 = vunpack.c.l.b16 %v274
    %v1523 = vunpack.c.h.b16 %v274
    %v1524 = vunpack.c.l.b16 %v275
    %v1525 = vunpack.c.h.b16 %v275
    %v1526 = vunpack.c.l.b16 %v276
    %v1527 = vunpack.c.h.b16 %v276
    %v1528 = vunpack.c.l.b16 %v277
    %v1529 = vunpack.c.h.b16 %v277
    %v1530 = vunpack.c.l.b16 %v278
    %v1531 = vunpack.c.h.b16 %v278
    %v1532 = vunpack.c.l.b16 %v279
    %v1533 = vunpack.c.h.b16 %v279
    %v1534 = vunpack.c.l.b16 %v280
    %v1535 = vunpack.c.h.b16 %v280
    %v1536 = vunpack.c.l.b16 %v281
    %v1537 = vunpack.c.h.b16 %v281
    %v1538 = vunpack.c.l.b16 %v282
    %v1539 = vunpack.c.h.b16 %v282
    %v1540 = vunpack.c.l.b16 %v283
    %v1541 = vunpack.c.h.b16 %v283
    %v1542 = vunpack.c.l.b16 %v284
    %v1543 = vunpack.c.h.b16 %v284
    %v1544 = vunpack.c.l.b16 %v285
    %v1545 = vunpack.c.h.b16 %v285
    %v1546 = vunpack.c.l.b16 %v286
    %v1547 = vunpack.c.h.b16 %v286
    %v1548 = vunpack.c.l.b16 %v287
    %v1549 = vunpack.c.h.b16 %v287
    %v1550 = vunpack.c.l.b16 %v288
    %v1551 = vunpack.c.h.b16 %v288
    %v1552 = vunpack.c.l.b16 %v289
    %v1553 = vunpack.c.h.b16 %v289
    %v1554 = vunpack.c.l.b16 %v290
    %v1555 = vunpack.c.h.b16 %v290
    %v1556 = vunpack.c.l.b16 %v291
    %v1557 = vunpack.c.h.b16 %v291
    %v1558 = vunpack.c.l.b16 %v292
    %v1559 = vunpack.c.h.b16 %v292
    %v1560 = vunpack.c.l.b16 %v293
    %v1561 = vunpack.c.h.b16 %v293
    %v1562 = vunpack.c.l.b16 %v294
    %v1563 = vunpack.c.h.b16 %v294
    %v1564 = vunpack.c.l.b16 %v295
    %v1565 = vunpack.c.h.b16 %v295
    %v1566 = vunpack.c.l.b16 %v296
    %v1567 = vunpack.c.h.b16 %v296
    %v1568 = vunpack.c.l.b16 %v297
    %v1569 = vunpack.c.h.b16 %v297
    %v1570 = vunpack.c.l.b16 %v298
    %v1571 = vunpack.c.h.b16 %v298
    %v1572 = vunpack.c.l.b16 %v299
    %v1573 = vunpack.c.h.b16 %v299
    %v1574 = vunpack.c.l.b16 %v300
    %v1575 = vunpack.c.h.b16 %v300
    %v1576 = vunpack.c.l.b16 %v301
    %v1577 = vunpack.c.h.b16 %v301
    %v1578 = vunpack.c.l.b16 %v302
    %v1579 = vunpack.c.h.b16 %v302
    %v1580 = vunpack.c.l.b16 %v303
    %v1581 = vunpack.c.h.b16 %v303
    %v1582 = vunpack.c.l.b16 %v304
    %v1583 = vunpack.c.h.b16 %v304
    %v1584 = vunpack.c.l.b16 %v305
    %v1585 = vunpack.c.h.b16 %v305
    %v1586 = vunpack.c.l.b16 %v306
    %v1587 = vunpack.c.h.b16 %v306
    %v1588 = vunpack.c.l.b16 %v307
    %v1589 = vunpack.c.h.b16 %v307
    %v1590 = vunpack.c.l.b16 %v308
    %v1591 = vunpack.c.h.b16 %v308
    %v1592 = vunpack.c.l.b16 %v309
    %v1593 = vunpack.c.h.b16 %v309
    %v1594 = vunpack.c.l.b16 %v310
    %v1595 = vunpack.c.h.b16 %v310
    %v1596 = vunpack.c.l.b16 %v311
    %v1597 = vunpack.c.h.b16 %v311
    %v1598 = vunpack.c.l.b16 %v312
    %v1599 = vunpack.c.h.b16 %v312
    %v1600 = vunpack.c.l.b16 %v313
    %v1601 = vunpack.c.h.b16 %v313
    %v1602 = vunpack.c.l.b16 %v314
    %v1603 = vunpack.c.h.b16 %v314
    %v1604 = vunpack.c.l.b16 %v315
    %v1605 = vunpack.c.h.b16 %v315
    %v1606 = vunpack.c.l.b16 %v316
    %v1607 = vunpack.c.h.b16 %v316
    %v1608 = vunpack.c.l.b16 %v317
    %v1609 = vunpack.c.h.b16 %v317
    %v1610 = vunpack.c.l.b16 %v318
    %v1611 = vunpack.c.h.b16 %v318
    %v1612 = vunpack.c.l.b16 %v319
    %v1613 = vunpack.c.h.b16 %v319
    %v1614 = vunpack.c.l.b16 %v320
    %v1615 = vunpack.c.h.b16 %v320
    %v1616 = vunpack.c.l.b16 %v321
    %v1617 = vunpack.c.h.b16 %v321
    %v1618 = vunpack.c.l.b16 %v322
    %v1619 = vunpack.c.h.b16 %v322
    %v1620 = vunpack.c.l.b16 %v323
    %v1621 = vunpack.c.h.b16 %v323
    %v1622 = vunpack.c.l.b16 %v324
    %v1623 = vunpack.c.h.b16 %v324
    %v1624 = vunpack.c.l.b16 %v325
    %v1625 = vunpack.c.h.b16 %v325
    %v1626 = vunpack.c.l.b16 %v326
    %v1627 = vunpack.c.h.b16 %v326
    %v1628 = vunpack.c.l.b16 %v327
    %v1629 = vunpack.c.h.b16 %v327
    %v1630 = vunpack.c.l.b16 %v328
    %v1631 = vunpack.c.h.b16 %v328
    %v1632 = vunpack.c.l.b16 %v329
    %v1633 = vunpack.c.h.b16 %v329
    %v1634 = vunpack.c.l.b16 %v330
    %v1635 = vunpack.c.h.b16 %v330
    %v1636 = vunpack.c.l.b16 %v331
    %v1637 = vunpack.c.h.b16 %v331
    %v1638 = vunpack.c.l.b16 %v332
    %v1639 = vunpack.c.h.b16 %v332
    %v1640 = vunpack.c.l.b16 %v333
    %v1641 = vunpack.c.h.b16 %v333
    %v1642 = vunpack.c.l.b16 %v334
    %v1643 = vunpack.c.h.b16 %v334
    %v1644 = vunpack.c.l.b16 %v335
    %v1645 = vunpack.c.h.b16 %v335
    %v1646 = vunpack.c.l.b16 %v336
    %v1647 = vunpack.c.h.b16 %v336
    %v1648 = vunpack.c.l.b16 %v337
    %v1649 = vunpack.c.h.b16 %v337
    %v1650 = vunpack.c.l.b16 %v338
    %v1651 = vunpack.c.h.b16 %v338
    %v1652 = vunpack.c.l.b16 %v339
    %v1653 = vunpack.c.h.b16 %v339
    %v1654 = vunpack.c.l.b16 %v340
    %v1655 = vunpack.c.h.b16 %v340
    %v1656 = vunpack.c.l.b16 %v341
    %v1657 = vunpack.c.h.b16 %v341
    %v1658 = vunpack.c.l.b16 %v342
    %v1659 = vunpack.c.h.b16 %v342
    %v1660 = vunpack.c.l.b16 %v343
    %v1661 = vunpack.c.h.b16 %v343
    %v1662 = vunpack.c.l.b16 %v344
    %v1663 = vunpack.c.h.b16 %v344
    %v1664 = vunpack.c.l.b16 %v345
    %v1665 = vunpack.c.h.b16 %v345
    %v1666 = vunpack.c.l.b16 %v346
    %v1667 = vunpack.c.h.b16 %v346
    %v1668 = vunpack.c.l.b16 %v347
    %v1669 = vunpack.c.h.b16 %v347
    %v1670 = vunpack.c.l.b16 %v348
    %v1671 = vunpack.c.h.b16 %v348
    %v1672 = vunpack.c.l.b16 %v349
    %v1673 = vunpack.c.h.b16 %v349
    %v1674 = vunpack.c.l.b16 %v350
    %v1675 = vunpack.c.h.b16 %v350
    %v1676 = vunpack.c.l.b16 %v351
    %v1677 = vunpack.c.h.b16 %v351
    %v1678 = vunpack.c.l.b16 %v352
    %v1679 = vunpack.c.h.b16 %v352
    %v1680 = vunpack.c.l.b16 %v353
    %v1681 = vunpack.c.h.b16 %v353
    %v1682 = vunpack.c.l.b16 %v354
    %v1683 = vunpack.c.h.b16 %v354
    %v1684 = vunpack.c.l.b16 %v355
    %v1685 = vunpack.c.h.b16 %v355
    %v1686 = vunpack.c.l.b16 %v356
    %v1687 = vunpack.c.h.b16 %v356
    %v1688 = vunpack.c.l.b16 %v357
    %v1689 = vunpack.c.h.b16 %v357
    %v1690 = vunpack.c.l.b16 %v358
    %v1691 = vunpack.c.h.b16 %v358
    %v1692 = vunpack.c.l.b16 %v359
    %v1693 = vunpack.c.h.b16 %v359
    %v1694 = vunpack.c.l.b16 %v360
    %v1695 = vunpack.c.h.b16 %v360
    %v1696 = vunpack.c.l.b16 %v361
    %v1697 = vunpack.c.h.b16 %v361
    %v1698 = vunpack.c.l.b16 %v362
    %v1699 = vunpack.c.h.b16 %v362
    %v1700 = vunpack.c.l.b16 %v363
    %v1701 = vunpack.c.h.b16 %v363
    %v1702 = vunpack.c.l.b16 %v364
    %v1703 = vunpack.c.h.b16 %v364
    %v1704 = vunpack.c.l.b16 %v365
    %v1705 = vunpack.c.h.b16 %v365
    %v1706 = vunpack.c.l.b16 %v366
    %v1707 = vunpack.c.h.b16 %v366
    %v1708 = vunpack.c.l.b16 %v367
    %v1709 = vunpack.c.h.b16 %v367
    %v1710 = vunpack.c.l.b16 %v368
    %v1711 = vunpack.c.h.b16 %v368
    %v1712 = vunpack.c.l.b16 %v369
    %v1713 = vunpack.c.h.b16 %v369
    %v1714 = vunpack.c.l.b16 %v370
    %v1715 = vunpack.c.h.b16 %v370
    %v1716 = vunpack.c.l.b16 %v371
    %v1717 = vunpack.c.h.b16 %v371
    %v1718 = vunpack.c.l.b16 %v372
    %v1719 = vunpack.c.h.b16 %v372
    %v1720 = vunpack.c.l.b16 %v373
    %v1721 = vunpack.c.h.b16 %v373
    %v1722 = vunpack.c.l.b16 %v374
    %v1723 = vunpack.c.h.b16 %v374
    %v1724 = vunpack.c.l.b16 %v375
    %v1725 = vunpack.c.h.b16 %v375
    %v1726 = vunpack.c.l.b16 %v376
    %v1727 = vunpack.c.h.b16 %v376
    %v1728 = vunpack.c.l.b16 %v377
    %v1729 = vunpack.c.h.b16 %v377
    %v1730 = vunpack.c.l.b16 %v378
    %v1731 = vunpack.c.h.b16 %v378
    %v1732 = vunpack.c.l.b16 %v379
    %v1733 = vunpack.c.h.b16 %v379
    %v1734 = vunpack.c.l.b16 %v380
    %v1735 = vunpack.c.h.b16 %v380
    %v1736 = vunpack.c.l.b16 %v381
    %v1737 = vunpack.c.h.b16 %v381
    %v1738 = vunpack.c.l.b16 %v382
    %v1739 = vunpack.c.h.b16 %v382
    %v1740 = vunpack.c.l.b16 %v383
    %v1741 = vunpack.c.h.b16 %v383
    %v1742 = vunpack.c.l.b16 %v384
    %v1743 = vunpack.c.h.b16 %v384
    %v1744 = vunpack.c.l.b16 %v385
    %v1745 = vunpack.c.h.b16 %v385
    %v1746 = vunpack.c.l.b16 %v386
    %v1747 = vunpack.c.h.b16 %v386
    %v1748 = vunpack.c.l.b16 %v387
    %v1749 = vunpack.c.h.b16 %v387
    %v1750 = vunpack.c.l.b16 %v388
    %v1751 = vunpack.c.h.b16 %v388
    %v1752 = vunpack.c.l.b16 %v389
    %v1753 = vunpack.c.h.b16 %v389
    %v1754 = vunpack.c.l.b16 %v390
    %v1755 = vunpack.c.h.b16 %v390
    %v1756 = vunpack.c.l.b16 %v391
    %v1757 = vunpack.c.h.b16 %v391
    %v1758 = vunpack.c.l.b16 %v392
    %v1759 = vunpack.c.h.b16 %v392
    %v1760 = vunpack.c.l.b16 %v393
    %v1761 = vunpack.c.h.b16 %v393
    %v1762 = vunpack.c.l.b16 %v394
    %v1763 = vunpack.c.h.b16 %v394
    %v1764 = vunpack.c.l.b16 %v395
    %v1765 = vunpack.c.h.b16 %v395
    %v1766 = vunpack.c.l.b16 %v396
    %v1767 = vunpack.c.h.b16 %v396
    %v1768 = vunpack.c.l.b16 %v397
    %v1769 = vunpack.c.h.b16 %v397
    %v1770 = vunpack.c.l.b16 %v398
    %v1771 = vunpack.c.h.b16 %v398
    %v1772 = vunpack.c.l.b16 %v399
    %v1773 = vunpack.c.h.b16 %v399
    %v1774 = vunpack.c.l.b16 %v400
    %v1775 = vunpack.c.h.b16 %v400
    %v1776 = vunpack.c.l.b16 %v401
    %v1777 = vunpack.c.h.b16 %v401
    %v1778 = vunpack.c.l.b16 %v402
    %v1779 = vunpack.c.h.b16 %v402
    %v1780 = vunpack.c.l.b16 %v403
    %v1781 = vunpack.c.h.b16 %v403
    %v1782 = vunpack.c.l.b16 %v404
    %v1783 = vunpack.c.h.b16 %v404
    %v1784 = vunpack.c.l.b16 %v405
    %v1785 = vunpack.c.h.b16 %v405
    %v1786 = vunpack.c.l.b16 %v406
    %v1787 = vunpack.c.h.b16 %v406
    %v1788 = vunpack.c.l.b16 %v407
    %v1789 = vunpack.c.h.b16 %v407
    %v1790 = vunpack.c.l.b16 %v408
    %v1791 = vunpack.c.h.b16 %v408
    %v1792 = vunpack.c.l.b16 %v409
    %v1793 = vunpack.c.h.b16 %v409
    %v1794 = vunpack.c.l.b16 %v410
    %v1795 = vunpack.c.h.b16 %v410
    %v1796 = vunpack.c.l.b16 %v411
    %v1797 = vunpack.c.h.b16 %v411
    %v1798 = vunpack.c.l.b16 %v412
    %v1799 = vunpack.c.h.b16 %v412
    %v1800 = vunpack.c.l.b16 %v413
    %v1801 = vunpack.c.h.b16 %v413
    %v1802 = vunpack.c.l.b16 %v414
    %v1803 = vunpack.c.h.b16 %v414
    %v1804 = vunpack.c.l.b16 %v415
    %v1805 = vunpack.c.h.b16 %v415
    %v1806 = vunpack.c.l.b16 %v416
    %v1807 = vunpack.c.h.b16 %v416
    %v1808 = vunpack.c.l.b16 %v417
    %v1809 = vunpack.c.h.b16 %v417
    %v1810 = vunpack.c.l.b16 %v418
    %v1811 = vunpack.c.h.b16 %v418
    %v1812 = vunpack.c.l.b16 %v419
    %v1813 = vunpack.c.h.b16 %v419
    %v1814 = vunpack.c.l.b16 %v420
    %v1815 = vunpack.c.h.b16 %v420
    %v1816 = vunpack.c.l.b16 %v421
    %v1817 = vunpack.c.h.b16 %v421
    %v1818 = vunpack.c.l.b16 %v422
    %v1819 = vunpack.c.h.b16 %v422
    %v1820 = vunpack.c.l.b16 %v423
    %v1821 = vunpack.c.h.b16 %v423
    %v1822 = vunpack.c.l.b16 %v424
    %v1823 = vunpack.c.h.b16 %v424
    %v1824 = vunpack.c.l.b16 %v425
    %v1825 = vunpack.c.h.b16 %v425
    %v1826 = vunpack.c.l.b16 %v426
    %v1827 = vunpack.c.h.b16 %v426
    %v1828 = vunpack.c.l.b16 %v427
    %v1829 = vunpack.c.h.b16 %v427
    %v1830 = vunpack.c.l.b16 %v428
    %v1831 = vunpack.c.h.b16 %v428
    %v1832 = vunpack.c.l.b16 %v429
    %v1833 = vunpack.c.h.b16 %v429
    %v1834 = vunpack.c.l.b16 %v430
    %v1835 = vunpack.c.h.b16 %v430
    %v1836 = vunpack.c.l.b16 %v431
    %v1837 = vunpack.c.h.b16 %v431
    %v1838 = vunpack.c.l.b16 %v432
    %v1839 = vunpack.c.h.b16 %v432
    %v1840 = vunpack.c.l.b16 %v433
    %v1841 = vunpack.c.h.b16 %v433
    %v1842 = vunpack.c.l.b16 %v434
    %v1843 = vunpack.c.h.b16 %v434
    %v1844 = vunpack.c.l.b16 %v435
    %v1845 = vunpack.c.h.b16 %v435
    %v1846 = vunpack.c.l.b16 %v436
    %v1847 = vunpack.c.h.b16 %v436
    %v1848 = vunpack.c.l.b16 %v437
    %v1849 = vunpack.c.h.b16 %v437
    %v1850 = vunpack.c.l.b16 %v438
    %v1851 = vunpack.c.h.b16 %v438
    %v1852 = vunpack.c.l.b16 %v439
    %v1853 = vunpack.c.h.b16 %v439
    %v1854 = vunpack.c.l.b16 %v440
    %v1855 = vunpack.c.h.b16 %v440
    %v1856 = vunpack.c.l.b16 %v441
    %v1857 = vunpack.c.h.b16 %v441
    %v1858 = vunpack.c.l.b16 %v442
    %v1859 = vunpack.c.h.b16 %v442
    %v1860 = vunpack.c.l.b16 %v443
    %v1861 = vunpack.c.h.b16 %v443
    %v1862 = vunpack.c.l.b16 %v444
    %v1863 = vunpack.c.h.b16 %v444
    %v1864 = vunpack.c.l.b16 %v445
    %v1865 = vunpack.c.h.b16 %v445
    %v1866 = vunpack.c.l.b16 %v446
    %v1867 = vunpack.c.h.b16 %v446
    %v1868 = vunpack.c.l.b16 %v447
    %v1869 = vunpack.c.h.b16 %v447
    %v1870 = vunpack.c.l.b16 %v448
    %v1871 = vunpack.c.h.b16 %v448
    %v1872 = vunpack.c.l.b16 %v449
    %v1873 = vunpack.c.h.b16 %v449
    %v1874 = vunpack.c.l.b16 %v450
    %v1875 = vunpack.c.h.b16 %v450
    %v1876 = vunpack.c.l.b16 %v451
    %v1877 = vunpack.c.h.b16 %v451
    %v1878 = vunpack.c.l.b16 %v452
    %v1879 = vunpack.c.h.b16 %v452
    %v1880 = vunpack.c.l.b16 %v453
    %v1881 = vunpack.c.h.b16 %v453
    %v1882 = vunpack.c.l.b16 %v454
    %v1883 = vunpack.c.h.b16 %v454
    %v1884 = vunpack.c.l.b16 %v455
    %v1885 = vunpack.c.h.b16 %v455
    %v1886 = vunpack.c.l.b16 %v456
    %v1887 = vunpack.c.h.b16 %v456
    %v1888 = vunpack.c.l.b16 %v457
    %v1889 = vunpack.c.h.b16 %v457
    %v1890 = vunpack.c.l.b16 %v458
    %v1891 = vunpack.c.h.b16 %v458
    %v1892 = vunpack.c.l.b16 %v459
    %v1893 = vunpack.c.h.b16 %v459
    %v1894 = vunpack.c.l.b16 %v460
    %v1895 = vunpack.c.h.b16 %v460
    %v1896 = vunpack.c.l.b16 %v461
    %v1897 = vunpack.c.h.b16 %v461
    %v1898 = vunpack.c.l.b16 %v462
    %v1899 = vunpack.c.h.b16 %v462
    %v1900 = vunpack.c.l.b16 %v463
    %v1901 = vunpack.c.h.b16 %v463
    %v1902 = vunpack.c.l.b16 %v464
    %v1903 = vunpack.c.h.b16 %v464
    %v1904 = vunpack.c.l.b16 %v465
    %v1905 = vunpack.c.h.b16 %v465
    %v1906 = vunpack.c.l.b16 %v466
    %v1907 = vunpack.c.h.b16 %v466
    %v1908 = vunpack.c.l.b16 %v467
    %v1909 = vunpack.c.h.b16 %v467
    %v1910 = vunpack.c.l.b16 %v468
    %v1911 = vunpack.c.h.b16 %v468
    %v1912 = vunpack.c.l.b16 %v469
    %v1913 = vunpack.c.h.b16 %v469
    %v1914 = vunpack.c.l.b16 %v470
    %v1915 = vunpack.c.h.b16 %v470
    %v1916 = vunpack.c.l.b16 %v471
    %v1917 = vunpack.c.h.b16 %v471
    %v1918 = vunpack.c.l.b16 %v472
    %v1919 = vunpack.c.h.b16 %v472
    %v1920 = vunpack.c.l.b16 %v473
    %v1921 = vunpack.c.h.b16 %v473
    %v1922 = vunpack.c.l.b16 %v474
    %v1923 = vunpack.c.h.b16 %v474
    %v1924 = vunpack.c.l.b16 %v475
    %v1925 = vunpack.c.h.b16 %v475
    %v1926 = vunpack.c.l.b16 %v476
    %v1927 = vunpack.c.h.b16 %v476
    %v1928 = vunpack.c.l.b16 %v477
    %v1929 = vunpack.c.h.b16 %v477
    %v1930 = vunpack.c.l.b16 %v478
    %v1931 = vunpack.c.h.b16 %v478
    %v1932 = vunpack.c.l.b16 %v479
    %v1933 = vunpack.c.h.b16 %v479
    %v1934 = vunpack.c.l.b16 %v480
    %v1935 = vunpack.c.h.b16 %v480
    %v1936 = vunpack.c.l.b16 %v481
    %v1937 = vunpack.c.h.b16 %v481
    %v1938 = vunpack.c.l.b16 %v482
    %v1939 = vunpack.c.h.b16 %v482
    %v1940 = vunpack.c.l.b16 %v483
    %v1941 = vunpack.c.h.b16 %v483
    %v1942 = vunpack.c.l.b16 %v484
    %v1943 = vunpack.c.h.b16 %v484
    %v1944 = vunpack.c.l.b16 %v485
    %v1945 = vunpack.c.h.b16 %v485
    %v1946 = vunpack.c.l.b16 %v486
    %v1947 = vunpack.c.h.b16 %v486
    %v1948 = vunpack.c.l.b16 %v487
    %v1949 = vunpack.c.h.b16 %v487
    %v1950 = vunpack.c.l.b16 %v488
    %v1951 = vunpack.c.h.b16 %v488
    %v1952 = vunpack.c.l.b16 %v489
    %v1953 = vunpack.c.h.b16 %v489
    %v1954 = vunpack.c.l.b16 %v490
    %v1955 = vunpack.c.h.b16 %v490
    %v1956 = vunpack.c.l.b16 %v491
    %v1957 = vunpack.c.h.b16 %v491
    %v1958 = vunpack.c.l.b16 %v492
    %v1959 = vunpack.c.h.b16 %v492
    %v1960 = vunpack.c.l.b16 %v493
    %v1961 = vunpack.c.h.b16 %v493
    %v1962 = vunpack.c.l.b16 %v494
    %v1963 = vunpack.c.h.b16 %v494
    %v1964 = vunpack.c.l.b16 %v495
    %v1965 = vunpack.c.h.b16 %v495
    %v1966 = vunpack.c.l.b16 %v496
    %v1967 = vunpack.c.h.b16 %v496
    %v1968 = vunpack.c.l.b16 %v497
    %v1969 = vunpack.c.h.b16 %v497
    %v1970 = vunpack.c.l.b16 %v498
    %v1971 = vunpack.c.h.b16 %v498
    %v1972 = vunpack.c.l.b16 %v499
    %v1973 = vunpack.c.h.b16 %v499
    %v1974 = vunpack.c.l.b16 %v500
    %v1975 = vunpack.c.h.b16 %v500
    %v1976 = vunpack.c.l.b16 %v501
    %v1977 = vunpack.c.h.b16 %v501
    %v1978 = vunpack.c.l.b16 %v502
    %v1979 = vunpack.c.h.b16 %v502
    %v1980 = vunpack.c.l.b16 %v503
    %v1981 = vunpack.c.h.b16 %v503
    %v1982 = vunpack.c.l.b16 %v504
    %v1983 = vunpack.c.h.b16 %v504
    %v1984 = vunpack.c.l.b16 %v505
    %v1985 = vunpack.c.h.b16 %v505
    %v1986 = vunpack.c.l.b16 %v506
    %v1987 = vunpack.c.h.b16 %v506
    %v1988 = vunpack.c.l.b16 %v507
    %v1989 = vunpack.c.h.b16 %v507
    %v1990 = vunpack.c.l.b16 %v508
    %v1991 = vunpack.c.h.b16 %v508
    %v1992 = vunpack.c.l.b16 %v509
    %v1993 = vunpack.c.h.b16 %v509
    %v1994 = vunpack.c.l.b16 %v510
    %v1995 = vunpack.c.h.b16 %v510
    %v1996 = vunpack.c.l.b16 %v511
    %v1997 = vunpack.c.h.b16 %v511
    %v1998 = vunpack.c.l.b16 %v512
    %v1999 = vunpack.c.h.b16 %v512
    %v2000 = vunpack.c.l.b16 %v513
    %v2001 = vunpack.c.h.b16 %v513
    %v2002 = vunpack.c.l.b16 %v514
    %v2003 = vunpack.c.h.b16 %v514
    %v2004 = vunpack.c.l.b16 %v515
    %v2005 = vunpack.c.h.b16 %v515
    %v2006 = vunpack.c.l.b16 %v516
    %v2007 = vunpack.c.h.b16 %v516
    %v2008 = vunpack.c.l.b16 %v517
    %v2009 = vunpack.c.h.b16 %v517
    %v2010 = vunpack.c.l.b16 %v518
    %v2011 = vunpack.c.h.b16 %v518
    %v2012 = vunpack.c.l.b16 %v519
    %v2013 = vunpack.c.h.b16 %v519
    %v2014 = vunpack.c.l.b16 %v520
    %v2015 = vunpack.c.h.b16 %v520
    %v2016 = vunpack.c.l.b16 %v521
    %v2017 = vunpack.c.h.b16 %v521
    %v2018 = vunpack.c.l.b16 %v522
    %v2019 = vunpack.c.h.b16 %v522
    %v2020 = vunpack.c.l.b16 %v523
    %v2021 = vunpack.c.h.b16 %v523
    %v2022 = vunpack.c.l.b16 %v524
    %v2023 = vunpack.c.h.b16 %v524
    %v2024 = vunpack.c.l.b16 %v525
    %v2025 = vunpack.c.h.b16 %v525
    %v2026 = vunpack.c.l.b16 %v526
    %v2027 = vunpack.c.h.b16 %v526
    %v2028 = vunpack.c.l.b16 %v527
    %v2029 = vunpack.c.h.b16 %v527
    %v2030 = vunpack.c.l.b16 %v528
    %v2031 = vunpack.c.h.b16 %v528
    %v2032 = vunpack.c.l.b16 %v529
    %v2033 = vunpack.c.h.b16 %v529
    %v2034 = vunpack.c.l.b16 %v530
    %v2035 = vunpack.c.h.b16 %v530
    %v2036 = vunpack.c.l.b16 %v531
    %v2037 = vunpack.c.h.b16 %v531
    %v2038 = vunpack.c.l.b16 %v532
    %v2039 = vunpack.c.h.b16 %v532
    %v2040 = vunpack.c.l.b16 %v533
    %v2041 = vunpack.c.h.b16 %v533
    %v2042 = vunpack.c.l.b16 %v534
    %v2043 = vunpack.c.h.b16 %v534
    %v2044 = vunpack.c.l.b16 %v535
    %v2045 = vunpack.c.h.b16 %v535
    %v2046 = vunpack.c.l.b16 %v536
    %v2047 = vunpack.c.h.b16 %v536
    %v2048 = vunpack.c.l.b16 %v537
    %v2049 = vunpack.c.h.b16 %v537
    %v2050 = vunpack.c.l.b16 %v538
    %v2051 = vunpack.c.h.b16 %v538
    %v2052 = vunpack.c.l.b16 %v539
    %v2053 = vunpack.c.h.b16 %v539
    %v2054 = vunpack.c.l.b16 %v540
    %v2055 = vunpack.c.h.b16 %v540
    %v2056 = vunpack.c.l.b16 %v541
    %v2057 = vunpack.c.h.b16 %v541
    %v2058 = vunpack.c.l.b16 %v542
    %v2059 = vunpack.c.h.b16 %v542
    %v2060 = vunpack.c.l.b16 %v543
    %v2061 = vunpack.c.h.b16 %v543
    %v2062 = vunpack.c.l.b16 %v544
    %v2063 = vunpack.c.h.b16 %v544
    %v2064 = vunpack.c.l.b16 %v545
    %v2065 = vunpack.c.h.b16 %v545
    %v2066 = vunpack.c.l.b16 %v546
    %v2067 = vunpack.c.h.b16 %v546
    %v2068 = vunpack.c.l.b16 %v547
    %v2069 = vunpack.c.h.b16 %v547
    %v2070 = vunpack.c.l.b16 %v548
    %v2071 = vunpack.c.h.b16 %v548
    %v2072 = vunpack.c.l.b16 %v549
    %v2073 = vunpack.c.h.b16 %v549
    %v2074 = vunpack.c.l.b16 %v550
    %v2075 = vunpack.c.h.b16 %v550
    %v2076 = vunpack.c.l.b16 %v551
    %v2077 = vunpack.c.h.b16 %v551
    %v2078 = vunpack.c.l.b16 %v552
    %v2079 = vunpack.c.h.b16 %v552
    %v2080 = vunpack.c.l.b16 %v553
    %v2081 = vunpack.c.h.b16 %v553
    %v2082 = vunpack.c.l.b16 %v554
    %v2083 = vunpack.c.h.b16 %v554
    %v2084 = vunpack.c.l.b16 %v555
    %v2085 = vunpack.c.h.b16 %v555
    %v2086 = vunpack.c.l.b16 %v556
    %v2087 = vunpack.c.h.b16 %v556
    %v2088 = vunpack.c.l.b16 %v557
    %v2089 = vunpack.c.h.b16 %v557
    %v2090 = vunpack.c.l.b16 %v558
    %v2091 = vunpack.c.h.b16 %v558
    %v2092 = vunpack.c.l.b16 %v559
    %v2093 = vunpack.c.h.b16 %v559
    %v2094 = vunpack.c.l.b16 %v560
    %v2095 = vunpack.c.h.b16 %v560
    %v2096 = vunpack.c.l.b16 %v561
    %v2097 = vunpack.c.h.b16 %v561
    %v2098 = vunpack.c.l.b16 %v562
    %v2099 = vunpack.c.h.b16 %v562
    %v2100 = vunpack.c.l.b16 %v563
    %v2101 = vunpack.c.h.b16 %v563
    %v2102 = vunpack.c.l.b16 %v564
    %v2103 = vunpack.c.h.b16 %v564
    %v2104 = vunpack.c.l.b16 %v565
    %v2105 = vunpack.c.h.b16 %v565
    %v2106 = vunpack.c.l.b16 %v566
    %v2107 = vunpack.c.h.b16 %v566
    %v2108 = vunpack.c.l.b16 %v567
    %v2109 = vunpack.c.h.b16 %v567
    %v2110 = vunpack.c.l.b16 %v568
    %v2111 = vunpack.c.h.b16 %v568
    %v2112 = vunpack.c.l.b16 %v569
    %v2113 = vunpack.c.h.b16 %v569
    %v2114 = vunpack.c.l.b16 %v570
    %v2115 = vunpack.c.h.b16 %v570
    %v2116 = vunpack.c.l.b16 %v571
    %v2117 = vunpack.c.h.b16 %v571
    %v2118 = vunpack.c.l.b16 %v572
    %v2119 = vunpack.c.h.b16 %v572
    %v2120 = vpack.c.b16 %v1358, %v1352
    %v2121 = vpack.c.b16 %v1359, %v1353
    %v2122 = vpack.c.b16 %v1360, %v1354
    %v2123 = vpack.c.b16 %v1361, %v1355
    %v2124 = vpack.c.b16 %v1362, %v1356
    %v2125 = vpack.c.b16 %v1363, %v1357
    %v2126 = vpack.c.b16 %v1370, %v1364
    %v2127 = vpack.c.b16 %v1371, %v1365
    %v2128 = vpack.c.b16 %v1372, %v1366
    %v2129 = vpack.c.b16 %v1373, %v1367
    %v2130 = vpack.c.b16 %v1374, %v1368
    %v2131 = vpack.c.b16 %v1375, %v1369
    %v2132 = vpack.c.b16 %v1382, %v1376
    %v2133 = vpack.c.b16 %v1383, %v1377
    %v2134 = vpack.c.b16 %v1384, %v1378
    %v2135 = vpack.c.b16 %v1385, %v1379
    %v2136 = vpack.c.b16 %v1386, %v1380
    %v2137 = vpack.c.b16 %v1387, %v1381
    %v2138 = vpack.c.b16 %v1394, %v1388
    %v2139 = vpack.c.b16 %v1395, %v1389
    %v2140 = vpack.c.b16 %v1396, %v1390
    %v2141 = vpack.c.b16 %v1397, %v1391
    %v2142 = vpack.c.b16 %v1398, %v1392
    %v2143 = vpack.c.b16 %v1399, %v1393
    %v2144 = vpack.c.b16 %v1406, %v1400
    %v2145 = vpack.c.b16 %v1407, %v1401
    %v2146 = vpack.c.b16 %v1408, %v1402
    %v2147 = vpack.c.b16 %v1409, %v1403
    %v2148 = vpack.c.b16 %v1410, %v1404
    %v2149 = vpack.c.b16 %v1411, %v1405
    %v2150 = vpack.c.b16 %v1418, %v1412
    %v2151 = vpack.c.b16 %v1419, %v1413
    %v2152 = vpack.c.b16 %v1420, %v1414
    %v2153 = vpack.c.b16 %v1421, %v1415
    %v2154 = vpack.c.b16 %v1422, %v1416
    %v2155 = vpack.c.b16 %v1423, %v1417
    %v2156 = vpack.c.b16 %v1430, %v1424
    %v2157 = vpack.c.b16 %v1431, %v1425
    %v2158 = vpack.c.b16 %v1432, %v1426
    %v2159 = vpack.c.b16 %v1433, %v1427
    %v2160 = vpack.c.b16 %v1434, %v1428
    %v2161 = vpack.c.b16 %v1435, %v1429
    %v2162 = vpack.c.b16 %v1442, %v1436
    %v2163 = vpack.c.b16 %v1443, %v1437
    %v2164 = vpack.c.b16 %v1444, %v1438
    %v2165 = vpack.c.b16 %v1445, %v1439
    %v2166 = vpack.c.b16 %v1446, %v1440
    %v2167 = vpack.c.b16 %v1447, %v1441
    %v2168 = vpack.c.b16 %v1454, %v1448
    %v2169 = vpack.c.b16 %v1455, %v1449
    %v2170 = vpack.c.b16 %v1456, %v1450
    %v2171 = vpack.c.b16 %v1457, %v1451
    %v2172 = vpack.c.b16 %v1458, %v1452
    %v2173 = vpack.c.b16 %v1459, %v1453
    %v2174 = vpack.c.b16 %v1466, %v1460
    %v2175 = vpack.c.b16 %v1467, %v1461
    %v2176 = vpack.c.b16 %v1468, %v1462
    %v2177 = vpack.c.b16 %v1469, %v1463
    %v2178 = vpack.c.b16 %v1470, %v1464
    %v2179 = vpack.c.b16 %v1471, %v1465
    %v2180 = vpack.c.b16 %v1478, %v1472
    %v2181 = vpack.c.b16 %v1479, %v1473
    %v2182 = vpack.c.b16 %v1480, %v1474
    %v2183 = vpack.c.b16 %v1481, %v1475
    %v2184 = vpack.c.b16 %v1482, %v1476
    %v2185 = vpack.c.b16 %v1483, %v1477
    %v2186 = vpack.c.b16 %v1490, %v1484
    %v2187 = vpack.c.b16 %v1491, %v1485
    %v2188 = vpack.c.b16 %v1492, %v1486
    %v2189 = vpack.c.b16 %v1493, %v1487
    %v2190 = vpack.c.b16 %v1494, %v1488
    %v2191 = vpack.c.b16 %v1495, %v1489
    %v2192 = vpack.c.b16 %v1502, %v1496
    %v2193 = vpack.c.b16 %v1503, %v1497
    %v2194 = vpack.c.b16 %v1504, %v1498
    %v2195 = vpack.c.b16 %v1505, %v1499
    %v2196 = vpack.c.b16 %v1506, %v1500
    %v2197 = vpack.c.b16 %v1507, %v1501
    %v2198 = vpack.c.b16 %v1514, %v1508
    %v2199 = vpack.c.b16 %v1515, %v1509
    %v2200 = vpack.c.b16 %v1516, %v1510
    %v2201 = vpack.c.b16 %v1517, %v1511
    %v2202 = vpack.c.b16 %v1518, %v1512
    %v2203 = vpack.c.b16 %v1519, %v1513
    %v2204 = vpack.c.b16 %v1526, %v1520
    %v2205 = vpack.c.b16 %v1527, %v1521
    %v2206 = vpack.c.b16 %v1528, %v1522
    %v2207 = vpack.c.b16 %v1529, %v1523
    %v2208 = vpack.c.b16 %v1530, %v1524
    %v2209 = vpack.c.b16 %v1531, %v1525
    %v2210 = vpack.c.b16 %v1538, %v1532
    %v2211 = vpack.c.b16 %v1539, %v1533
    %v2212 = vpack.c.b16 %v1540, %v1534
    %v2213 = vpack.c.b16 %v1541, %v1535
    %v2214 = vpack.c.b16 %v1542, %v1536
    %v2215 = vpack.c.b16 %v1543, %v1537
    %v2216 = vpack.c.b16 %v1550, %v1544
    %v2217 = vpack.c.b16 %v1551, %v1545
    %v2218 = vpack.c.b16 %v1552, %v1546
    %v2219 = vpack.c.b16 %v1553, %v1547
    %v2220 = vpack.c.b16 %v1554, %v1548
    %v2221 = vpack.c.b16 %v1555, %v1549
    %v2222 = vpack.c.b16 %v1562, %v1556
    %v2223 = vpack.c.b16 %v1563, %v1557
    %v2224 = vpack.c.b16 %v1564, %v1558
    %v2225 = vpack.c.b16 %v1565, %v1559
    %v2226 = vpack.c.b16 %v1566, %v1560
    %v2227 = vpack.c.b16 %v1567, %v1561
    %v2228 = vpack.c.b16 %v1574, %v1568
    %v2229 = vpack.c.b16 %v1575, %v1569
    %v2230 = vpack.c.b16 %v1576, %v1570
    %v2231 = vpack.c.b16 %v1577, %v1571
    %v2232 = vpack.c.b16 %v1578, %v1572
    %v2233 = vpack.c.b16 %v1579, %v1573
    %v2234 = vpack.c.b16 %v1586, %v1580
    %v2235 = vpack.c.b16 %v1587, %v1581
    %v2236 = vpack.c.b16 %v1588, %v1582
    %v2237 = vpack.c.b16 %v1589, %v1583
    %v2238 = vpack.c.b16 %v1590, %v1584
    %v2239 = vpack.c.b16 %v1591, %v1585
    %v2240 = vpack.c.b16 %v1598, %v1592
    %v2241 = vpack.c.b16 %v1599, %v1593
    %v2242 = vpack.c.b16 %v1600, %v1594
    %v2243 = vpack.c.b16 %v1601, %v1595
    %v2244 = vpack.c.b16 %v1602, %v1596
    %v2245 = vpack.c.b16 %v1603, %v1597
    %v2246 = vpack.c.b16 %v1610, %v1604
    %v2247 = vpack.c.b16 %v1611, %v1605
    %v2248 = vpack.c.b16 %v1612, %v1606
    %v2249 = vpack.c.b16 %v1613, %v1607
    %v2250 = vpack.c.b16 %v1614, %v1608
    %v2251 = vpack.c.b16 %v1615, %v1609
    %v2252 = vpack.c.b16 %v1622, %v1616
    %v2253 = vpack.c.b16 %v1623, %v1617
    %v2254 = vpack.c.b16 %v1624, %v1618
    %v2255 = vpack.c.b16 %v1625, %v1619
    %v2256 = vpack.c.b16 %v1626, %v1620
    %v2257 = vpack.c.b16 %v1627, %v1621
    %v2258 = vpack.c.b16 %v1634, %v1628
    %v2259 = vpack.c.b16 %v1635, %v1629
    %v2260 = vpack.c.b16 %v1636, %v1630
    %v2261 = vpack.c.b16 %v1637, %v1631
    %v2262 = vpack.c.b16 %v1638, %v1632
    %v2263 = vpack.c.b16 %v1639, %v1633
    %v2264 = vpack.c.b16 %v1646, %v1640
    %v2265 = vpack.c.b16 %v1647, %v1641
    %v2266 = vpack.c.b16 %v1648, %v1642
    %v2267 = vpack.c.b16 %v1649, %v1643
    %v2268 = vpack.c.b16 %v1650, %v1644
    %v2269 = vpack.c.b16 %v1651, %v1645
    %v2270 = vpack.c.b16 %v1658, %v1652
    %v2271 = vpack.c.b16 %v1659, %v1653
    %v2272 = vpack.c.b16 %v1660, %v1654
    %v2273 = vpack.c.b16 %v1661, %v1655
    %v2274 = vpack.c.b16 %v1662, %v1656
    %v2275 = vpack.c.b16 %v1663, %v1657
    %v2276 = vpack.c.b16 %v1670, %v1664
    %v2277 = vpack.c.b16 %v1671, %v1665
    %v2278 = vpack.c.b16 %v1672, %v1666
    %v2279 = vpack.c.b16 %v1673, %v1667
    %v2280 = vpack.c.b16 %v1674, %v1668
    %v2281 = vpack.c.b16 %v1675, %v1669
    %v2282 = vpack.c.b16 %v1682, %v1676
    %v2283 = vpack.c.b16 %v1683, %v1677
    %v2284 = vpack.c.b16 %v1684, %v1678
    %v2285 = vpack.c.b16 %v1685, %v1679
    %v2286 = vpack.c.b16 %v1686, %v1680
    %v2287 = vpack.c.b16 %v1687, %v1681
    %v2288 = vpack.c.b16 %v1694, %v1688
    %v2289 = vpack.c.b16 %v1695, %v1689
    %v2290 = vpack.c.b16 %v1696, %v1690
    %v2291 = vpack.c.b16 %v1697, %v1691
    %v2292 = vpack.c.b16 %v1698, %v1692
    %v2293 = vpack.c.b16 %v1699, %v1693
    %v2294 = vpack.c.b16 %v1706, %v1700
    %v2295 = vpack.c.b16 %v1707, %v1701
    %v2296 = vpack.c.b16 %v1708, %v1702
    %v2297 = vpack.c.b16 %v1709, %v1703
    %v2298 = vpack.c.b16 %v1710, %v1704
    %v2299 = vpack.c.b16 %v1711, %v1705
    %v2300 = vpack.c.b16 %v1718, %v1712
    %v2301 = vpack.c.b16 %v1719, %v1713
    %v2302 = vpack.c.b16 %v1720, %v1714
    %v2303 = vpack.c.b16 %v1721, %v1715
    %v2304 = vpack.c.b16 %v1722, %v1716
    %v2305 = vpack.c.b16 %v1723, %v1717
    %v2306 = vpack.c.b16 %v1730, %v1724
    %v2307 = vpack.c.b16 %v1731, %v1725
    %v2308 = vpack.c.b16 %v1732, %v1726
    %v2309 = vpack.c.b16 %v1733, %v1727
    %v2310 = vpack.c.b16 %v1734, %v1728
    %v2311 = vpack.c.b16 %v1735, %v1729
    %v2312 = vpack.c.b16 %v1742, %v1736
    %v2313 = vpack.c.b16 %v1743, %v1737
    %v2314 = vpack.c.b16 %v1744, %v1738
    %v2315 = vpack.c.b16 %v1745, %v1739
    %v2316 = vpack.c.b16 %v1746, %v1740
    %v2317 = vpack.c.b16 %v1747, %v1741
    %v2318 = vpack.c.b16 %v1754, %v1748
    %v2319 = vpack.c.b16 %v1755, %v1749
    %v2320 = vpack.c.b16 %v1756, %v1750
    %v2321 = vpack.c.b16 %v1757, %v1751
    %v2322 = vpack.c.b16 %v1758, %v1752
    %v2323 = vpack.c.b16 %v1759, %v1753
    %v2324 = vpack.c.b16 %v1766, %v1760
    %v2325 = vpack.c.b16 %v1767, %v1761
    %v2326 = vpack.c.b16 %v1768, %v1762
    %v2327 = vpack.c.b16 %v1769, %v1763
    %v2328 = vpack.c.b16 %v1770, %v1764
    %v2329 = vpack.c.b16 %v1771, %v1765
    %v2330 = vpack.c.b16 %v1778, %v1772
    %v2331 = vpack.c.b16 %v1779, %v1773
    %v2332 = vpack.c.b16 %v1780, %v1774
    %v2333 = vpack.c.b16 %v1781, %v1775
    %v2334 = vpack.c.b16 %v1782, %v1776
    %v2335 = vpack.c.b16 %v1783, %v1777
    %v2336 = vpack.c.b16 %v1790, %v1784
    %v2337 = vpack.c.b16 %v1791, %v1785
    %v2338 = vpack.c.b16 %v1792, %v1786
    %v2339 = vpack.c.b16 %v1793, %v1787
    %v2340 = vpack.c.b16 %v1794, %v1788
    %v2341 = vpack.c.b16 %v1795, %v1789
    %v2342 = vpack.c.b16 %v1802, %v1796
    %v2343 = vpack.c.b16 %v1803, %v1797
    %v2344 = vpack.c.b16 %v1804, %v1798
    %v2345 = vpack.c.b16 %v1805, %v1799
    %v2346 = vpack.c.b16 %v1806, %v1800
    %v2347 = vpack.c.b16 %v1807, %v1801
    %v2348 = vpack.c.b16 %v1814, %v1808
    %v2349 = vpack.c.b16 %v1815, %v1809
    %v2350 = vpack.c.b16 %v1816, %v1810
    %v2351 = vpack.c.b16 %v1817, %v1811
    %v2352 = vpack.c.b16 %v1818, %v1812
    %v2353 = vpack.c.b16 %v1819, %v1813
    %v2354 = vpack.c.b16 %v1826, %v1820
    %v2355 = vpack.c.b16 %v1827, %v1821
    %v2356 = vpack.c.b16 %v1828, %v1822
    %v2357 = vpack.c.b16 %v1829, %v1823
    %v2358 = vpack.c.b16 %v1830, %v1824
    %v2359 = vpack.c.b16 %v1831, %v1825
    %v2360 = vpack.c.b16 %v1838, %v1832
    %v2361 = vpack.c.b16 %v1839, %v1833
    %v2362 = vpack.c.b16 %v1840, %v1834
    %v2363 = vpack.c.b16 %v1841, %v1835
    %v2364 = vpack.c.b16 %v1842, %v1836
    %v2365 = vpack.c.b16 %v1843, %v1837
    %v2366 = vpack.c.b16 %v1850, %v1844
    %v2367 = vpack.c.b16 %v1851, %v1845
    %v2368 = vpack.c.b16 %v1852, %v1846
    %v2369 = vpack.c.b16 %v1853, %v1847
    %v2370 = vpack.c.b16 %v1854, %v1848
    %v2371 = vpack.c.b16 %v1855, %v1849
    %v2372 = vpack.c.b16 %v1862, %v1856
    %v2373 = vpack.c.b16 %v1863, %v1857
    %v2374 = vpack.c.b16 %v1864, %v1858
    %v2375 = vpack.c.b16 %v1865, %v1859
    %v2376 = vpack.c.b16 %v1866, %v1860
    %v2377 = vpack.c.b16 %v1867, %v1861
    %v2378 = vpack.c.b16 %v1874, %v1868
    %v2379 = vpack.c.b16 %v1875, %v1869
    %v2380 = vpack.c.b16 %v1876, %v1870
    %v2381 = vpack.c.b16 %v1877, %v1871
    %v2382 = vpack.c.b16 %v1878, %v1872
    %v2383 = vpack.c.b16 %v1879, %v1873
    %v2384 = vpack.c.b16 %v1886, %v1880
    %v2385 = vpack.c.b16 %v1887, %v1881
    %v2386 = vpack.c.b16 %v1888, %v1882
    %v2387 = vpack.c.b16 %v1889, %v1883
    %v2388 = vpack.c.b16 %v1890, %v1884
    %v2389 = vpack.c.b16 %v1891, %v1885
    %v2390 = vpack.c.b16 %v1898, %v1892
    %v2391 = vpack.c.b16 %v1899, %v1893
    %v2392 = vpack.c.b16 %v1900, %v1894
    %v2393 = vpack.c.b16 %v1901, %v1895
    %v2394 = vpack.c.b16 %v1902, %v1896
    %v2395 = vpack.c.b16 %v1903, %v1897
    %v2396 = vpack.c.b16 %v1910, %v1904
    %v2397 = vpack.c.b16 %v1911, %v1905
    %v2398 = vpack.c.b16 %v1912, %v1906
    %v2399 = vpack.c.b16 %v1913, %v1907
    %v2400 = vpack.c.b16 %v1914, %v1908
    %v2401 = vpack.c.b16 %v1915, %v1909
    %v2402 = vpack.c.b16 %v1922, %v1916
    %v2403 = vpack.c.b16 %v1923, %v1917
    %v2404 = vpack.c.b16 %v1924, %v1918
    %v2405 = vpack.c.b16 %v1925, %v1919
    %v2406 = vpack.c.b16 %v1926, %v1920
    %v2407 = vpack.c.b16 %v1927, %v1921
    %v2408 = vpack.c.b16 %v1934, %v1928
    %v2409 = vpack.c.b16 %v1935, %v1929
    %v2410 = vpack.c.b16 %v1936, %v1930
    %v2411 = vpack.c.b16 %v1937, %v1931
    %v2412 = vpack.c.b16 %v1938, %v1932
    %v2413 = vpack.c.b16 %v1939, %v1933
    %v2414 = vpack.c.b16 %v1946, %v1940
    %v2415 = vpack.c.b16 %v1947, %v1941
    %v2416 = vpack.c.b16 %v1948, %v1942
    %v2417 = vpack.c.b16 %v1949, %v1943
    %v2418 = vpack.c.b16 %v1950, %v1944
    %v2419 = vpack.c.b16 %v1951, %v1945
    %v2420 = vpack.c.b16 %v1958, %v1952
    %v2421 = vpack.c.b16 %v1959, %v1953
    %v2422 = vpack.c.b16 %v1960, %v1954
    %v2423 = vpack.c.b16 %v1961, %v1955
    %v2424 = vpack.c.b16 %v1962, %v1956
    %v2425 = vpack.c.b16 %v1963, %v1957
    %v2426 = vpack.c.b16 %v1970, %v1964
    %v2427 = vpack.c.b16 %v1971, %v1965
    %v2428 = vpack.c.b16 %v1972, %v1966
    %v2429 = vpack.c.b16 %v1973, %v1967
    %v2430 = vpack.c.b16 %v1974, %v1968
    %v2431 = vpack.c.b16 %v1975, %v1969
    %v2432 = vpack.c.b16 %v1982, %v1976
    %v2433 = vpack.c.b16 %v1983, %v1977
    %v2434 = vpack.c.b16 %v1984, %v1978
    %v2435 = vpack.c.b16 %v1985, %v1979
    %v2436 = vpack.c.b16 %v1986, %v1980
    %v2437 = vpack.c.b16 %v1987, %v1981
    %v2438 = vpack.c.b16 %v1994, %v1988
    %v2439 = vpack.c.b16 %v1995, %v1989
    %v2440 = vpack.c.b16 %v1996, %v1990
    %v2441 = vpack.c.b16 %v1997, %v1991
    %v2442 = vpack.c.b16 %v1998, %v1992
    %v2443 = vpack.c.b16 %v1999, %v1993
    %v2444 = vpack.c.b16 %v2006, %v2000
    %v2445 = vpack.c.b16 %v2007, %v2001
    %v2446 = vpack.c.b16 %v2008, %v2002
    %v2447 = vpack.c.b16 %v2009, %v2003
    %v2448 = vpack.c.b16 %v2010, %v2004
    %v2449 = vpack.c.b16 %v2011, %v2005
    %v2450 = vpack.c.b16 %v2018, %v2012
    %v2451 = vpack.c.b16 %v2019, %v2013
    %v2452 = vpack.c.b16 %v2020, %v2014
    %v2453 = vpack.c.b16 %v2021, %v2015
    %v2454 = vpack.c.b16 %v2022, %v2016
    %v2455 = vpack.c.b16 %v2023, %v2017
    %v2456 = vpack.c.b16 %v2030, %v2024
    %v2457 = vpack.c.b16 %v2031, %v2025
    %v2458 = vpack.c.b16 %v2032, %v2026
    %v2459 = vpack.c.b16 %v2033, %v2027
    %v2460 = vpack.c.b16 %v2034, %v2028
    %v2461 = vpack.c.b16 %v2035, %v2029
    %v2462 = vpack.c.b16 %v2042, %v2036
    %v2463 = vpack.c.b16 %v2043, %v2037
    %v2464 = vpack.c.b16 %v2044, %v2038
    %v2465 = vpack.c.b16 %v2045, %v2039
    %v2466 = vpack.c.b16 %v2046, %v2040
    %v2467 = vpack.c.b16 %v2047, %v2041
    %v2468 = vpack.c.b16 %v2054, %v2048
    %v2469 = vpack.c.b16 %v2055, %v2049
    %v2470 = vpack.c.b16 %v2056, %v2050
    %v2471 = vpack.c.b16 %v2057, %v2051
    %v2472 = vpack.c.b16 %v2058, %v2052
    %v2473 = vpack.c.b16 %v2059, %v2053
    %v2474 = vpack.c.b16 %v2066, %v2060
    %v2475 = vpack.c.b16 %v2067, %v2061
    %v2476 = vpack.c.b16 %v2068, %v2062
    %v2477 = vpack.c.b16 %v2069, %v2063
    %v2478 = vpack.c.b16 %v2070, %v2064
    %v2479 = vpack.c.b16 %v2071, %v2065
    %v2480 = vpack.c.b16 %v2078, %v2072
    %v2481 = vpack.c.b16 %v2079, %v2073
    %v2482 = vpack.c.b16 %v2080, %v2074
    %v2483 = vpack.c.b16 %v2081, %v2075
    %v2484 = vpack.c.b16 %v2082, %v2076
    %v2485 = vpack.c.b16 %v2083, %v2077
    %v2486 = vpack.c.b16 %v2090, %v2084
    %v2487 = vpack.c.b16 %v2091, %v2085
    %v2488 = vpack.c.b16 %v2092, %v2086
    %v2489 = vpack.c.b16 %v2093, %v2087
    %v2490 = vpack.c.b16 %v2094, %v2088
    %v2491 = vpack.c.b16 %v2095, %v2089
    %v2492 = vpack.c.b16 %v2102, %v2096
    %v2493 = vpack.c.b16 %v2103, %v2097
    %v2494 = vpack.c.b16 %v2104, %v2098
    %v2495 = vpack.c.b16 %v2105, %v2099
    %v2496 = vpack.c.b16 %v2106, %v2100
    %v2497 = vpack.c.b16 %v2107, %v2101
    %v2498 = vpack.c.b16 %v2114, %v2108
    %v2499 = vpack.c.b16 %v2115, %v2109
    %v2500 = vpack.c.b16 %v2116, %v2110
    %v2501 = vpack.c.b16 %v2117, %v2111
    %v2502 = vpack.c.b16 %v2118, %v2112
    %v2503 = vpack.c.b16 %v2119, %v2113
    %2888 = vmatpush.bf16.msra.mxu0 %v2162
    %2889 = vmatpush.bf16.msra.mxu0 %v2156
    %2890 = vmatpush.bf16.msra.mxu0 %v2150
    %2891 = vmatpush.bf16.msra.mxu0 %v2144
    %2892 = vmatpush.bf16.msra.mxu0 %v2138
    %2893 = vmatpush.bf16.msra.mxu0 %v2132
    %2894 = vmatpush.bf16.msra.mxu0 %v2126
    %2895 = vmatpush.bf16.msra.mxu0 %v2120
    %2896 = vmatmul.bf16.gmra.mxu0 %v952
    %v2897 = vpop.f32.mrf.mxu0
    %v2898 = vadd.f32 %v872, %v2897
    %v2899 = vpop.f32.mrf.mxu0
    %2900 = vdwg.mxu0
    %2901 = vmatpush.bf16.msra.mxu0 %v2210
    %2902 = vmatpush.bf16.msra.mxu0 %v2204
    %2903 = vmatpush.bf16.msra.mxu0 %v2198
    %2904 = vmatpush.bf16.msra.mxu0 %v2192
    %2905 = vmatpush.bf16.msra.mxu0 %v2186
    %2906 = vmatpush.bf16.msra.mxu0 %v2180
    %2907 = vmatpush.bf16.msra.mxu0 %v2174
    %2908 = vmatpush.bf16.msra.mxu0 %v2168
    %2909 = vmatmul.bf16.gmra.mxu0 %v953
    %v2910 = vpop.f32.mrf.mxu0
    %v2911 = vadd.f32 %v2898, %v2910
    %v2912 = vpop.f32.mrf.mxu0
    %2913 = vdwg.mxu0
    %2914 = vmatpush.bf16.msra.mxu0 %v2258
    %2915 = vmatpush.bf16.msra.mxu0 %v2252
    %2916 = vmatpush.bf16.msra.mxu0 %v2246
    %2917 = vmatpush.bf16.msra.mxu0 %v2240
    %2918 = vmatpush.bf16.msra.mxu0 %v2234
    %2919 = vmatpush.bf16.msra.mxu0 %v2228
    %2920 = vmatpush.bf16.msra.mxu0 %v2222
    %2921 = vmatpush.bf16.msra.mxu0 %v2216
    %2922 = vmatmul.bf16.gmra.mxu0 %v954
    %v2923 = vpop.f32.mrf.mxu0
    %v2924 = vadd.f32 %v2911, %v2923
    %v2925 = vpop.f32.mrf.mxu0
    %2926 = vdwg.mxu0
    %2927 = vmatpush.bf16.msra.mxu0 %v2306
    %2928 = vmatpush.bf16.msra.mxu0 %v2300
    %2929 = vmatpush.bf16.msra.mxu0 %v2294
    %2930 = vmatpush.bf16.msra.mxu0 %v2288
    %2931 = vmatpush.bf16.msra.mxu0 %v2282
    %2932 = vmatpush.bf16.msra.mxu0 %v2276
    %2933 = vmatpush.bf16.msra.mxu0 %v2270
    %2934 = vmatpush.bf16.msra.mxu0 %v2264
    %2935 = vmatmul.bf16.gmra.mxu0 %v955
    %v2936 = vpop.f32.mrf.mxu0
    %v2937 = vadd.f32 %v2924, %v2936
    %v2938 = vpop.f32.mrf.mxu0
    %2939 = vdwg.mxu0
    %2940 = vmatpush.bf16.msra.mxu0 %v2354
    %2941 = vmatpush.bf16.msra.mxu0 %v2348
    %2942 = vmatpush.bf16.msra.mxu0 %v2342
    %2943 = vmatpush.bf16.msra.mxu0 %v2336
    %2944 = vmatpush.bf16.msra.mxu0 %v2330
    %2945 = vmatpush.bf16.msra.mxu0 %v2324
    %2946 = vmatpush.bf16.msra.mxu0 %v2318
    %2947 = vmatpush.bf16.msra.mxu0 %v2312
    %2948 = vmatmul.bf16.gmra.mxu0 %v956
    %v2949 = vpop.f32.mrf.mxu0
    %v2950 = vadd.f32 %v2937, %v2949
    %v2951 = vpop.f32.mrf.mxu0
    %2952 = vdwg.mxu0
    %2953 = vmatpush.bf16.msra.mxu0 %v2402
    %2954 = vmatpush.bf16.msra.mxu0 %v2396
    %2955 = vmatpush.bf16.msra.mxu0 %v2390
    %2956 = vmatpush.bf16.msra.mxu0 %v2384
    %2957 = vmatpush.bf16.msra.mxu0 %v2378
    %2958 = vmatpush.bf16.msra.mxu0 %v2372
    %2959 = vmatpush.bf16.msra.mxu0 %v2366
    %2960 = vmatpush.bf16.msra.mxu0 %v2360
    %2961 = vmatmul.bf16.gmra.mxu0 %v957
    %v2962 = vpop.f32.mrf.mxu0
    %v2963 = vadd.f32 %v2950, %v2962
    %v2964 = vpop.f32.mrf.mxu0
    %2965 = vdwg.mxu0
    %2966 = vmatpush.bf16.msra.mxu0 %v2450
    %2967 = vmatpush.bf16.msra.mxu0 %v2444
    %2968 = vmatpush.bf16.msra.mxu0 %v2438
    %2969 = vmatpush.bf16.msra.mxu0 %v2432
    %2970 = vmatpush.bf16.msra.mxu0 %v2426
    %2971 = vmatpush.bf16.msra.mxu0 %v2420
    %2972 = vmatpush.bf16.msra.mxu0 %v2414
    %2973 = vmatpush.bf16.msra.mxu0 %v2408
    %2974 = vmatmul.bf16.gmra.mxu0 %v958
    %v2975 = vpop.f32.mrf.mxu0
    %v2976 = vadd.f32 %v2963, %v2975
    %v2977 = vpop.f32.mrf.mxu0
    %2978 = vdwg.mxu0
    %2979 = vmatpush.bf16.msra.mxu0 %v2498
    %2980 = vmatpush.bf16.msra.mxu0 %v2492
    %2981 = vmatpush.bf16.msra.mxu0 %v2486
    %2982 = vmatpush.bf16.msra.mxu0 %v2480
    %2983 = vmatpush.bf16.msra.mxu0 %v2474
    %2984 = vmatpush.bf16.msra.mxu0 %v2468
    %2985 = vmatpush.bf16.msra.mxu0 %v2462
    %2986 = vmatpush.bf16.msra.mxu0 %v2456
    %2987 = vmatmul.bf16.gmra.mxu0 %v959
    %v2988 = vpop.f32.mrf.mxu0
    %v2989 = vadd.f32 %v2976, %v2988
    %v2990 = vpop.f32.mrf.mxu0
    %2991 = vdwg.mxu0
    %2992 = vmatpush.bf16.msra.mxu0 %v2163
    %2993 = vmatpush.bf16.msra.mxu0 %v2157
    %2994 = vmatpush.bf16.msra.mxu0 %v2151
    %2995 = vmatpush.bf16.msra.mxu0 %v2145
    %2996 = vmatpush.bf16.msra.mxu0 %v2139
    %2997 = vmatpush.bf16.msra.mxu0 %v2133
    %2998 = vmatpush.bf16.msra.mxu0 %v2127
    %2999 = vmatpush.bf16.msra.mxu0 %v2121
    %3000 = vmatmul.bf16.gmra.mxu0 %v952
    %v3001 = vpop.f32.mrf.mxu0
    %v3002 = vadd.f32 %v885, %v3001
    %v3003 = vpop.f32.mrf.mxu0
    %3004 = vdwg.mxu0
    %3005 = vmatpush.bf16.msra.mxu0 %v2211
    %3006 = vmatpush.bf16.msra.mxu0 %v2205
    %3007 = vmatpush.bf16.msra.mxu0 %v2199
    %3008 = vmatpush.bf16.msra.mxu0 %v2193
    %3009 = vmatpush.bf16.msra.mxu0 %v2187
    %3010 = vmatpush.bf16.msra.mxu0 %v2181
    %3011 = vmatpush.bf16.msra.mxu0 %v2175
    %3012 = vmatpush.bf16.msra.mxu0 %v2169
    %3013 = vmatmul.bf16.gmra.mxu0 %v953
    %v3014 = vpop.f32.mrf.mxu0
    %v3015 = vadd.f32 %v3002, %v3014
    %v3016 = vpop.f32.mrf.mxu0
    %3017 = vdwg.mxu0
    %3018 = vmatpush.bf16.msra.mxu0 %v2259
    %3019 = vmatpush.bf16.msra.mxu0 %v2253
    %3020 = vmatpush.bf16.msra.mxu0 %v2247
    %3021 = vmatpush.bf16.msra.mxu0 %v2241
    %3022 = vmatpush.bf16.msra.mxu0 %v2235
    %3023 = vmatpush.bf16.msra.mxu0 %v2229
    %3024 = vmatpush.bf16.msra.mxu0 %v2223
    %3025 = vmatpush.bf16.msra.mxu0 %v2217
    %3026 = vmatmul.bf16.gmra.mxu0 %v954
    %v3027 = vpop.f32.mrf.mxu0
    %v3028 = vadd.f32 %v3015, %v3027
    %v3029 = vpop.f32.mrf.mxu0
    %3030 = vdwg.mxu0
    %3031 = vmatpush.bf16.msra.mxu0 %v2307
    %3032 = vmatpush.bf16.msra.mxu0 %v2301
    %3033 = vmatpush.bf16.msra.mxu0 %v2295
    %3034 = vmatpush.bf16.msra.mxu0 %v2289
    %3035 = vmatpush.bf16.msra.mxu0 %v2283
    %3036 = vmatpush.bf16.msra.mxu0 %v2277
    %3037 = vmatpush.bf16.msra.mxu0 %v2271
    %3038 = vmatpush.bf16.msra.mxu0 %v2265
    %3039 = vmatmul.bf16.gmra.mxu0 %v955
    %v3040 = vpop.f32.mrf.mxu0
    %v3041 = vadd.f32 %v3028, %v3040
    %v3042 = vpop.f32.mrf.mxu0
    %3043 = vdwg.mxu0
    %3044 = vmatpush.bf16.msra.mxu0 %v2355
    %3045 = vmatpush.bf16.msra.mxu0 %v2349
    %3046 = vmatpush.bf16.msra.mxu0 %v2343
    %3047 = vmatpush.bf16.msra.mxu0 %v2337
    %3048 = vmatpush.bf16.msra.mxu0 %v2331
    %3049 = vmatpush.bf16.msra.mxu0 %v2325
    %3050 = vmatpush.bf16.msra.mxu0 %v2319
    %3051 = vmatpush.bf16.msra.mxu0 %v2313
    %3052 = vmatmul.bf16.gmra.mxu0 %v956
    %v3053 = vpop.f32.mrf.mxu0
    %v3054 = vadd.f32 %v3041, %v3053
    %v3055 = vpop.f32.mrf.mxu0
    %3056 = vdwg.mxu0
    %3057 = vmatpush.bf16.msra.mxu0 %v2403
    %3058 = vmatpush.bf16.msra.mxu0 %v2397
    %3059 = vmatpush.bf16.msra.mxu0 %v2391
    %3060 = vmatpush.bf16.msra.mxu0 %v2385
    %3061 = vmatpush.bf16.msra.mxu0 %v2379
    %3062 = vmatpush.bf16.msra.mxu0 %v2373
    %3063 = vmatpush.bf16.msra.mxu0 %v2367
    %3064 = vmatpush.bf16.msra.mxu0 %v2361
    %3065 = vmatmul.bf16.gmra.mxu0 %v957
    %v3066 = vpop.f32.mrf.mxu0
    %v3067 = vadd.f32 %v3054, %v3066
    %v3068 = vpop.f32.mrf.mxu0
    %3069 = vdwg.mxu0
    %3070 = vmatpush.bf16.msra.mxu0 %v2451
    %3071 = vmatpush.bf16.msra.mxu0 %v2445
    %3072 = vmatpush.bf16.msra.mxu0 %v2439
    %3073 = vmatpush.bf16.msra.mxu0 %v2433
    %3074 = vmatpush.bf16.msra.mxu0 %v2427
    %3075 = vmatpush.bf16.msra.mxu0 %v2421
    %3076 = vmatpush.bf16.msra.mxu0 %v2415
    %3077 = vmatpush.bf16.msra.mxu0 %v2409
    %3078 = vmatmul.bf16.gmra.mxu0 %v958
    %v3079 = vpop.f32.mrf.mxu0
    %v3080 = vadd.f32 %v3067, %v3079
    %v3081 = vpop.f32.mrf.mxu0
    %3082 = vdwg.mxu0
    %3083 = vmatpush.bf16.msra.mxu0 %v2499
    %3084 = vmatpush.bf16.msra.mxu0 %v2493
    %3085 = vmatpush.bf16.msra.mxu0 %v2487
    %3086 = vmatpush.bf16.msra.mxu0 %v2481
    %3087 = vmatpush.bf16.msra.mxu0 %v2475
    %3088 = vmatpush.bf16.msra.mxu0 %v2469
    %3089 = vmatpush.bf16.msra.mxu0 %v2463
    %3090 = vmatpush.bf16.msra.mxu0 %v2457
    %3091 = vmatmul.bf16.gmra.mxu0 %v959
    %v3092 = vpop.f32.mrf.mxu0
    %v3093 = vadd.f32 %v3080, %v3092
    %v3094 = vpop.f32.mrf.mxu0
    %3095 = vdwg.mxu0
    %3096 = vmatpush.bf16.msra.mxu0 %v2164
    %3097 = vmatpush.bf16.msra.mxu0 %v2158
    %3098 = vmatpush.bf16.msra.mxu0 %v2152
    %3099 = vmatpush.bf16.msra.mxu0 %v2146
    %3100 = vmatpush.bf16.msra.mxu0 %v2140
    %3101 = vmatpush.bf16.msra.mxu0 %v2134
    %3102 = vmatpush.bf16.msra.mxu0 %v2128
    %3103 = vmatpush.bf16.msra.mxu0 %v2122
    %3104 = vmatmul.bf16.gmra.mxu0 %v952
    %v3105 = vpop.f32.mrf.mxu0
    %v3106 = vadd.f32 %v898, %v3105
    %v3107 = vpop.f32.mrf.mxu0
    %3108 = vdwg.mxu0
    %3109 = vmatpush.bf16.msra.mxu0 %v2212
    %3110 = vmatpush.bf16.msra.mxu0 %v2206
    %3111 = vmatpush.bf16.msra.mxu0 %v2200
    %3112 = vmatpush.bf16.msra.mxu0 %v2194
    %3113 = vmatpush.bf16.msra.mxu0 %v2188
    %3114 = vmatpush.bf16.msra.mxu0 %v2182
    %3115 = vmatpush.bf16.msra.mxu0 %v2176
    %3116 = vmatpush.bf16.msra.mxu0 %v2170
    %3117 = vmatmul.bf16.gmra.mxu0 %v953
    %v3118 = vpop.f32.mrf.mxu0
    %v3119 = vadd.f32 %v3106, %v3118
    %v3120 = vpop.f32.mrf.mxu0
    %3121 = vdwg.mxu0
    %3122 = vmatpush.bf16.msra.mxu0 %v2260
    %3123 = vmatpush.bf16.msra.mxu0 %v2254
    %3124 = vmatpush.bf16.msra.mxu0 %v2248
    %3125 = vmatpush.bf16.msra.mxu0 %v2242
    %3126 = vmatpush.bf16.msra.mxu0 %v2236
    %3127 = vmatpush.bf16.msra.mxu0 %v2230
    %3128 = vmatpush.bf16.msra.mxu0 %v2224
    %3129 = vmatpush.bf16.msra.mxu0 %v2218
    %3130 = vmatmul.bf16.gmra.mxu0 %v954
    %v3131 = vpop.f32.mrf.mxu0
    %v3132 = vadd.f32 %v3119, %v3131
    %v3133 = vpop.f32.mrf.mxu0
    %3134 = vdwg.mxu0
    %3135 = vmatpush.bf16.msra.mxu0 %v2308
    %3136 = vmatpush.bf16.msra.mxu0 %v2302
    %3137 = vmatpush.bf16.msra.mxu0 %v2296
    %3138 = vmatpush.bf16.msra.mxu0 %v2290
    %3139 = vmatpush.bf16.msra.mxu0 %v2284
    %3140 = vmatpush.bf16.msra.mxu0 %v2278
    %3141 = vmatpush.bf16.msra.mxu0 %v2272
    %3142 = vmatpush.bf16.msra.mxu0 %v2266
    %3143 = vmatmul.bf16.gmra.mxu0 %v955
    %v3144 = vpop.f32.mrf.mxu0
    %v3145 = vadd.f32 %v3132, %v3144
    %v3146 = vpop.f32.mrf.mxu0
    %3147 = vdwg.mxu0
    %3148 = vmatpush.bf16.msra.mxu0 %v2356
    %3149 = vmatpush.bf16.msra.mxu0 %v2350
    %3150 = vmatpush.bf16.msra.mxu0 %v2344
    %3151 = vmatpush.bf16.msra.mxu0 %v2338
    %3152 = vmatpush.bf16.msra.mxu0 %v2332
    %3153 = vmatpush.bf16.msra.mxu0 %v2326
    %3154 = vmatpush.bf16.msra.mxu0 %v2320
    %3155 = vmatpush.bf16.msra.mxu0 %v2314
    %3156 = vmatmul.bf16.gmra.mxu0 %v956
    %v3157 = vpop.f32.mrf.mxu0
    %v3158 = vadd.f32 %v3145, %v3157
    %v3159 = vpop.f32.mrf.mxu0
    %3160 = vdwg.mxu0
    %3161 = vmatpush.bf16.msra.mxu0 %v2404
    %3162 = vmatpush.bf16.msra.mxu0 %v2398
    %3163 = vmatpush.bf16.msra.mxu0 %v2392
    %3164 = vmatpush.bf16.msra.mxu0 %v2386
    %3165 = vmatpush.bf16.msra.mxu0 %v2380
    %3166 = vmatpush.bf16.msra.mxu0 %v2374
    %3167 = vmatpush.bf16.msra.mxu0 %v2368
    %3168 = vmatpush.bf16.msra.mxu0 %v2362
    %3169 = vmatmul.bf16.gmra.mxu0 %v957
    %v3170 = vpop.f32.mrf.mxu0
    %v3171 = vadd.f32 %v3158, %v3170
    %v3172 = vpop.f32.mrf.mxu0
    %3173 = vdwg.mxu0
    %3174 = vmatpush.bf16.msra.mxu0 %v2452
    %3175 = vmatpush.bf16.msra.mxu0 %v2446
    %3176 = vmatpush.bf16.msra.mxu0 %v2440
    %3177 = vmatpush.bf16.msra.mxu0 %v2434
    %3178 = vmatpush.bf16.msra.mxu0 %v2428
    %3179 = vmatpush.bf16.msra.mxu0 %v2422
    %3180 = vmatpush.bf16.msra.mxu0 %v2416
    %3181 = vmatpush.bf16.msra.mxu0 %v2410
    %3182 = vmatmul.bf16.gmra.mxu0 %v958
    %v3183 = vpop.f32.mrf.mxu0
    %v3184 = vadd.f32 %v3171, %v3183
    %v3185 = vpop.f32.mrf.mxu0
    %3186 = vdwg.mxu0
    %3187 = vmatpush.bf16.msra.mxu0 %v2500
    %3188 = vmatpush.bf16.msra.mxu0 %v2494
    %3189 = vmatpush.bf16.msra.mxu0 %v2488
    %3190 = vmatpush.bf16.msra.mxu0 %v2482
    %3191 = vmatpush.bf16.msra.mxu0 %v2476
    %3192 = vmatpush.bf16.msra.mxu0 %v2470
    %3193 = vmatpush.bf16.msra.mxu0 %v2464
    %3194 = vmatpush.bf16.msra.mxu0 %v2458
    %3195 = vmatmul.bf16.gmra.mxu0 %v959
    %v3196 = vpop.f32.mrf.mxu0
    %v3197 = vadd.f32 %v3184, %v3196
    %v3198 = vpop.f32.mrf.mxu0
    %3199 = vdwg.mxu0
    %3200 = vmatpush.bf16.msra.mxu0 %v2165
    %3201 = vmatpush.bf16.msra.mxu0 %v2159
    %3202 = vmatpush.bf16.msra.mxu0 %v2153
    %3203 = vmatpush.bf16.msra.mxu0 %v2147
    %3204 = vmatpush.bf16.msra.mxu0 %v2141
    %3205 = vmatpush.bf16.msra.mxu0 %v2135
    %3206 = vmatpush.bf16.msra.mxu0 %v2129
    %3207 = vmatpush.bf16.msra.mxu0 %v2123
    %3208 = vmatmul.bf16.gmra.mxu0 %v952
    %v3209 = vpop.f32.mrf.mxu0
    %v3210 = vadd.f32 %v911, %v3209
    %v3211 = vpop.f32.mrf.mxu0
    %3212 = vdwg.mxu0
    %3213 = vmatpush.bf16.msra.mxu0 %v2213
    %3214 = vmatpush.bf16.msra.mxu0 %v2207
    %3215 = vmatpush.bf16.msra.mxu0 %v2201
    %3216 = vmatpush.bf16.msra.mxu0 %v2195
    %3217 = vmatpush.bf16.msra.mxu0 %v2189
    %3218 = vmatpush.bf16.msra.mxu0 %v2183
    %3219 = vmatpush.bf16.msra.mxu0 %v2177
    %3220 = vmatpush.bf16.msra.mxu0 %v2171
    %3221 = vmatmul.bf16.gmra.mxu0 %v953
    %v3222 = vpop.f32.mrf.mxu0
    %v3223 = vadd.f32 %v3210, %v3222
    %v3224 = vpop.f32.mrf.mxu0
    %3225 = vdwg.mxu0
    %3226 = vmatpush.bf16.msra.mxu0 %v2261
    %3227 = vmatpush.bf16.msra.mxu0 %v2255
    %3228 = vmatpush.bf16.msra.mxu0 %v2249
    %3229 = vmatpush.bf16.msra.mxu0 %v2243
    %3230 = vmatpush.bf16.msra.mxu0 %v2237
    %3231 = vmatpush.bf16.msra.mxu0 %v2231
    %3232 = vmatpush.bf16.msra.mxu0 %v2225
    %3233 = vmatpush.bf16.msra.mxu0 %v2219
    %3234 = vmatmul.bf16.gmra.mxu0 %v954
    %v3235 = vpop.f32.mrf.mxu0
    %v3236 = vadd.f32 %v3223, %v3235
    %v3237 = vpop.f32.mrf.mxu0
    %3238 = vdwg.mxu0
    %3239 = vmatpush.bf16.msra.mxu0 %v2309
    %3240 = vmatpush.bf16.msra.mxu0 %v2303
    %3241 = vmatpush.bf16.msra.mxu0 %v2297
    %3242 = vmatpush.bf16.msra.mxu0 %v2291
    %3243 = vmatpush.bf16.msra.mxu0 %v2285
    %3244 = vmatpush.bf16.msra.mxu0 %v2279
    %3245 = vmatpush.bf16.msra.mxu0 %v2273
    %3246 = vmatpush.bf16.msra.mxu0 %v2267
    %3247 = vmatmul.bf16.gmra.mxu0 %v955
    %v3248 = vpop.f32.mrf.mxu0
    %v3249 = vadd.f32 %v3236, %v3248
    %v3250 = vpop.f32.mrf.mxu0
    %3251 = vdwg.mxu0
    %3252 = vmatpush.bf16.msra.mxu0 %v2357
    %3253 = vmatpush.bf16.msra.mxu0 %v2351
    %3254 = vmatpush.bf16.msra.mxu0 %v2345
    %3255 = vmatpush.bf16.msra.mxu0 %v2339
    %3256 = vmatpush.bf16.msra.mxu0 %v2333
    %3257 = vmatpush.bf16.msra.mxu0 %v2327
    %3258 = vmatpush.bf16.msra.mxu0 %v2321
    %3259 = vmatpush.bf16.msra.mxu0 %v2315
    %3260 = vmatmul.bf16.gmra.mxu0 %v956
    %v3261 = vpop.f32.mrf.mxu0
    %v3262 = vadd.f32 %v3249, %v3261
    %v3263 = vpop.f32.mrf.mxu0
    %3264 = vdwg.mxu0
    %3265 = vmatpush.bf16.msra.mxu0 %v2405
    %3266 = vmatpush.bf16.msra.mxu0 %v2399
    %3267 = vmatpush.bf16.msra.mxu0 %v2393
    %3268 = vmatpush.bf16.msra.mxu0 %v2387
    %3269 = vmatpush.bf16.msra.mxu0 %v2381
    %3270 = vmatpush.bf16.msra.mxu0 %v2375
    %3271 = vmatpush.bf16.msra.mxu0 %v2369
    %3272 = vmatpush.bf16.msra.mxu0 %v2363
    %3273 = vmatmul.bf16.gmra.mxu0 %v957
    %v3274 = vpop.f32.mrf.mxu0
    %v3275 = vadd.f32 %v3262, %v3274
    %v3276 = vpop.f32.mrf.mxu0
    %3277 = vdwg.mxu0
    %3278 = vmatpush.bf16.msra.mxu0 %v2453
    %3279 = vmatpush.bf16.msra.mxu0 %v2447
    %3280 = vmatpush.bf16.msra.mxu0 %v2441
    %3281 = vmatpush.bf16.msra.mxu0 %v2435
    %3282 = vmatpush.bf16.msra.mxu0 %v2429
    %3283 = vmatpush.bf16.msra.mxu0 %v2423
    %3284 = vmatpush.bf16.msra.mxu0 %v2417
    %3285 = vmatpush.bf16.msra.mxu0 %v2411
    %3286 = vmatmul.bf16.gmra.mxu0 %v958
    %v3287 = vpop.f32.mrf.mxu0
    %v3288 = vadd.f32 %v3275, %v3287
    %v3289 = vpop.f32.mrf.mxu0
    %3290 = vdwg.mxu0
    %3291 = vmatpush.bf16.msra.mxu0 %v2501
    %3292 = vmatpush.bf16.msra.mxu0 %v2495
    %3293 = vmatpush.bf16.msra.mxu0 %v2489
    %3294 = vmatpush.bf16.msra.mxu0 %v2483
    %3295 = vmatpush.bf16.msra.mxu0 %v2477
    %3296 = vmatpush.bf16.msra.mxu0 %v2471
    %3297 = vmatpush.bf16.msra.mxu0 %v2465
    %3298 = vmatpush.bf16.msra.mxu0 %v2459
    %3299 = vmatmul.bf16.gmra.mxu0 %v959
    %v3300 = vpop.f32.mrf.mxu0
    %v3301 = vadd.f32 %v3288, %v3300
    %v3302 = vpop.f32.mrf.mxu0
    %3303 = vdwg.mxu0
    %3304 = vmatpush.bf16.msra.mxu0 %v2166
    %3305 = vmatpush.bf16.msra.mxu0 %v2160
    %3306 = vmatpush.bf16.msra.mxu0 %v2154
    %3307 = vmatpush.bf16.msra.mxu0 %v2148
    %3308 = vmatpush.bf16.msra.mxu0 %v2142
    %3309 = vmatpush.bf16.msra.mxu0 %v2136
    %3310 = vmatpush.bf16.msra.mxu0 %v2130
    %3311 = vmatpush.bf16.msra.mxu0 %v2124
    %3312 = vmatmul.bf16.gmra.mxu0 %v952
    %v3313 = vpop.f32.mrf.mxu0
    %v3314 = vadd.f32 %v924, %v3313
    %v3315 = vpop.f32.mrf.mxu0
    %3316 = vdwg.mxu0
    %3317 = vmatpush.bf16.msra.mxu0 %v2214
    %3318 = vmatpush.bf16.msra.mxu0 %v2208
    %3319 = vmatpush.bf16.msra.mxu0 %v2202
    %3320 = vmatpush.bf16.msra.mxu0 %v2196
    %3321 = vmatpush.bf16.msra.mxu0 %v2190
    %3322 = vmatpush.bf16.msra.mxu0 %v2184
    %3323 = vmatpush.bf16.msra.mxu0 %v2178
    %3324 = vmatpush.bf16.msra.mxu0 %v2172
    %3325 = vmatmul.bf16.gmra.mxu0 %v953
    %v3326 = vpop.f32.mrf.mxu0
    %v3327 = vadd.f32 %v3314, %v3326
    %v3328 = vpop.f32.mrf.mxu0
    %3329 = vdwg.mxu0
    %3330 = vmatpush.bf16.msra.mxu0 %v2262
    %3331 = vmatpush.bf16.msra.mxu0 %v2256
    %3332 = vmatpush.bf16.msra.mxu0 %v2250
    %3333 = vmatpush.bf16.msra.mxu0 %v2244
    %3334 = vmatpush.bf16.msra.mxu0 %v2238
    %3335 = vmatpush.bf16.msra.mxu0 %v2232
    %3336 = vmatpush.bf16.msra.mxu0 %v2226
    %3337 = vmatpush.bf16.msra.mxu0 %v2220
    %3338 = vmatmul.bf16.gmra.mxu0 %v954
    %v3339 = vpop.f32.mrf.mxu0
    %v3340 = vadd.f32 %v3327, %v3339
    %v3341 = vpop.f32.mrf.mxu0
    %3342 = vdwg.mxu0
    %3343 = vmatpush.bf16.msra.mxu0 %v2310
    %3344 = vmatpush.bf16.msra.mxu0 %v2304
    %3345 = vmatpush.bf16.msra.mxu0 %v2298
    %3346 = vmatpush.bf16.msra.mxu0 %v2292
    %3347 = vmatpush.bf16.msra.mxu0 %v2286
    %3348 = vmatpush.bf16.msra.mxu0 %v2280
    %3349 = vmatpush.bf16.msra.mxu0 %v2274
    %3350 = vmatpush.bf16.msra.mxu0 %v2268
    %3351 = vmatmul.bf16.gmra.mxu0 %v955
    %v3352 = vpop.f32.mrf.mxu0
    %v3353 = vadd.f32 %v3340, %v3352
    %v3354 = vpop.f32.mrf.mxu0
    %3355 = vdwg.mxu0
    %3356 = vmatpush.bf16.msra.mxu0 %v2358
    %3357 = vmatpush.bf16.msra.mxu0 %v2352
    %3358 = vmatpush.bf16.msra.mxu0 %v2346
    %3359 = vmatpush.bf16.msra.mxu0 %v2340
    %3360 = vmatpush.bf16.msra.mxu0 %v2334
    %3361 = vmatpush.bf16.msra.mxu0 %v2328
    %3362 = vmatpush.bf16.msra.mxu0 %v2322
    %3363 = vmatpush.bf16.msra.mxu0 %v2316
    %3364 = vmatmul.bf16.gmra.mxu0 %v956
    %v3365 = vpop.f32.mrf.mxu0
    %v3366 = vadd.f32 %v3353, %v3365
    %v3367 = vpop.f32.mrf.mxu0
    %3368 = vdwg.mxu0
    %3369 = vmatpush.bf16.msra.mxu0 %v2406
    %3370 = vmatpush.bf16.msra.mxu0 %v2400
    %3371 = vmatpush.bf16.msra.mxu0 %v2394
    %3372 = vmatpush.bf16.msra.mxu0 %v2388
    %3373 = vmatpush.bf16.msra.mxu0 %v2382
    %3374 = vmatpush.bf16.msra.mxu0 %v2376
    %3375 = vmatpush.bf16.msra.mxu0 %v2370
    %3376 = vmatpush.bf16.msra.mxu0 %v2364
    %3377 = vmatmul.bf16.gmra.mxu0 %v957
    %v3378 = vpop.f32.mrf.mxu0
    %v3379 = vadd.f32 %v3366, %v3378
    %v3380 = vpop.f32.mrf.mxu0
    %3381 = vdwg.mxu0
    %3382 = vmatpush.bf16.msra.mxu0 %v2454
    %3383 = vmatpush.bf16.msra.mxu0 %v2448
    %3384 = vmatpush.bf16.msra.mxu0 %v2442
    %3385 = vmatpush.bf16.msra.mxu0 %v2436
    %3386 = vmatpush.bf16.msra.mxu0 %v2430
    %3387 = vmatpush.bf16.msra.mxu0 %v2424
    %3388 = vmatpush.bf16.msra.mxu0 %v2418
    %3389 = vmatpush.bf16.msra.mxu0 %v2412
    %3390 = vmatmul.bf16.gmra.mxu0 %v958
    %v3391 = vpop.f32.mrf.mxu0
    %v3392 = vadd.f32 %v3379, %v3391
    %v3393 = vpop.f32.mrf.mxu0
    %3394 = vdwg.mxu0
    %3395 = vmatpush.bf16.msra.mxu0 %v2502
    %3396 = vmatpush.bf16.msra.mxu0 %v2496
    %3397 = vmatpush.bf16.msra.mxu0 %v2490
    %3398 = vmatpush.bf16.msra.mxu0 %v2484
    %3399 = vmatpush.bf16.msra.mxu0 %v2478
    %3400 = vmatpush.bf16.msra.mxu0 %v2472
    %3401 = vmatpush.bf16.msra.mxu0 %v2466
    %3402 = vmatpush.bf16.msra.mxu0 %v2460
    %3403 = vmatmul.bf16.gmra.mxu0 %v959
    %v3404 = vpop.f32.mrf.mxu0
    %v3405 = vadd.f32 %v3392, %v3404
    %v3406 = vpop.f32.mrf.mxu0
    %3407 = vdwg.mxu0
    %3408 = vmatpush.bf16.msra.mxu0 %v2167
    %3409 = vmatpush.bf16.msra.mxu0 %v2161
    %3410 = vmatpush.bf16.msra.mxu0 %v2155
    %3411 = vmatpush.bf16.msra.mxu0 %v2149
    %3412 = vmatpush.bf16.msra.mxu0 %v2143
    %3413 = vmatpush.bf16.msra.mxu0 %v2137
    %3414 = vmatpush.bf16.msra.mxu0 %v2131
    %3415 = vmatpush.bf16.msra.mxu0 %v2125
    %3416 = vmatmul.bf16.gmra.mxu0 %v952
    %v3417 = vpop.f32.mrf.mxu0
    %v3418 = vadd.f32 %v937, %v3417
    %v3419 = vpop.f32.mrf.mxu0
    %3420 = vdwg.mxu0
    %3421 = vmatpush.bf16.msra.mxu0 %v2215
    %3422 = vmatpush.bf16.msra.mxu0 %v2209
    %3423 = vmatpush.bf16.msra.mxu0 %v2203
    %3424 = vmatpush.bf16.msra.mxu0 %v2197
    %3425 = vmatpush.bf16.msra.mxu0 %v2191
    %3426 = vmatpush.bf16.msra.mxu0 %v2185
    %3427 = vmatpush.bf16.msra.mxu0 %v2179
    %3428 = vmatpush.bf16.msra.mxu0 %v2173
    %3429 = vmatmul.bf16.gmra.mxu0 %v953
    %v3430 = vpop.f32.mrf.mxu0
    %v3431 = vadd.f32 %v3418, %v3430
    %v3432 = vpop.f32.mrf.mxu0
    %3433 = vdwg.mxu0
    %3434 = vmatpush.bf16.msra.mxu0 %v2263
    %3435 = vmatpush.bf16.msra.mxu0 %v2257
    %3436 = vmatpush.bf16.msra.mxu0 %v2251
    %3437 = vmatpush.bf16.msra.mxu0 %v2245
    %3438 = vmatpush.bf16.msra.mxu0 %v2239
    %3439 = vmatpush.bf16.msra.mxu0 %v2233
    %3440 = vmatpush.bf16.msra.mxu0 %v2227
    %3441 = vmatpush.bf16.msra.mxu0 %v2221
    %3442 = vmatmul.bf16.gmra.mxu0 %v954
    %v3443 = vpop.f32.mrf.mxu0
    %v3444 = vadd.f32 %v3431, %v3443
    %v3445 = vpop.f32.mrf.mxu0
    %3446 = vdwg.mxu0
    %3447 = vmatpush.bf16.msra.mxu0 %v2311
    %3448 = vmatpush.bf16.msra.mxu0 %v2305
    %3449 = vmatpush.bf16.msra.mxu0 %v2299
    %3450 = vmatpush.bf16.msra.mxu0 %v2293
    %3451 = vmatpush.bf16.msra.mxu0 %v2287
    %3452 = vmatpush.bf16.msra.mxu0 %v2281
    %3453 = vmatpush.bf16.msra.mxu0 %v2275
    %3454 = vmatpush.bf16.msra.mxu0 %v2269
    %3455 = vmatmul.bf16.gmra.mxu0 %v955
    %v3456 = vpop.f32.mrf.mxu0
    %v3457 = vadd.f32 %v3444, %v3456
    %v3458 = vpop.f32.mrf.mxu0
    %3459 = vdwg.mxu0
    %3460 = vmatpush.bf16.msra.mxu0 %v2359
    %3461 = vmatpush.bf16.msra.mxu0 %v2353
    %3462 = vmatpush.bf16.msra.mxu0 %v2347
    %3463 = vmatpush.bf16.msra.mxu0 %v2341
    %3464 = vmatpush.bf16.msra.mxu0 %v2335
    %3465 = vmatpush.bf16.msra.mxu0 %v2329
    %3466 = vmatpush.bf16.msra.mxu0 %v2323
    %3467 = vmatpush.bf16.msra.mxu0 %v2317
    %3468 = vmatmul.bf16.gmra.mxu0 %v956
    %v3469 = vpop.f32.mrf.mxu0
    %v3470 = vadd.f32 %v3457, %v3469
    %v3471 = vpop.f32.mrf.mxu0
    %3472 = vdwg.mxu0
    %3473 = vmatpush.bf16.msra.mxu0 %v2407
    %3474 = vmatpush.bf16.msra.mxu0 %v2401
    %3475 = vmatpush.bf16.msra.mxu0 %v2395
    %3476 = vmatpush.bf16.msra.mxu0 %v2389
    %3477 = vmatpush.bf16.msra.mxu0 %v2383
    %3478 = vmatpush.bf16.msra.mxu0 %v2377
    %3479 = vmatpush.bf16.msra.mxu0 %v2371
    %3480 = vmatpush.bf16.msra.mxu0 %v2365
    %3481 = vmatmul.bf16.gmra.mxu0 %v957
    %v3482 = vpop.f32.mrf.mxu0
    %v3483 = vadd.f32 %v3470, %v3482
    %v3484 = vpop.f32.mrf.mxu0
    %3485 = vdwg.mxu0
    %3486 = vmatpush.bf16.msra.mxu0 %v2455
    %3487 = vmatpush.bf16.msra.mxu0 %v2449
    %3488 = vmatpush.bf16.msra.mxu0 %v2443
    %3489 = vmatpush.bf16.msra.mxu0 %v2437
    %3490 = vmatpush.bf16.msra.mxu0 %v2431
    %3491 = vmatpush.bf16.msra.mxu0 %v2425
    %3492 = vmatpush.bf16.msra.mxu0 %v2419
    %3493 = vmatpush.bf16.msra.mxu0 %v2413
    %3494 = vmatmul.bf16.gmra.mxu0 %v958
    %v3495 = vpop.f32.mrf.mxu0
    %v3496 = vadd.f32 %v3483, %v3495
    %v3497 = vpop.f32.mrf.mxu0
    %3498 = vdwg.mxu0
    %3499 = vmatpush.bf16.msra.mxu0 %v2503
    %3500 = vmatpush.bf16.msra.mxu0 %v2497
    %3501 = vmatpush.bf16.msra.mxu0 %v2491
    %3502 = vmatpush.bf16.msra.mxu0 %v2485
    %3503 = vmatpush.bf16.msra.mxu0 %v2479
    %3504 = vmatpush.bf16.msra.mxu0 %v2473
    %3505 = vmatpush.bf16.msra.mxu0 %v2467
    %3506 = vmatpush.bf16.msra.mxu0 %v2461
    %3507 = vmatmul.bf16.gmra.mxu0 %v959
    %v3508 = vpop.f32.mrf.mxu0
    %v3509 = vadd.f32 %v3496, %v3508
    %v3510 = vpop.f32.mrf.mxu0
    %3511 = vdwg.mxu0
    %v3512 = vld [vmem:[#allocation11] sm:$0x3f]
    %v3514 = vperm.slane %v3512, 0
    %v3515 = vperm.slane %v3512, 1
    %v3516 = vperm.slane %v3512, 2
    %v3517 = vperm.slane %v3512, 3
    %v3518 = vperm.slane %v3512, 4
    %v3519 = vperm.slane %v3512, 5
    %v3526 = vadd.f32 %v2989, %v3514
    %v3527 = vadd.f32 %v3093, %v3515
    %v3528 = vadd.f32 %v3197, %v3516
    %v3529 = vadd.f32 %v3301, %v3517
    %v3530 = vadd.f32 %v3405, %v3518
    %v3531 = vadd.f32 %v3509, %v3519
    %v3532 = vmax.f32 %v3526, 0.0
    %v3533 = vmax.f32 %v3527, 0.0
    %v3534 = vmax.f32 %v3528, 0.0
    %v3535 = vmax.f32 %v3529, 0.0
    %v3536 = vmax.f32 %v3530, 0.0
    %v3537 = vmax.f32 %v3531, 0.0
    %v3538 = vpack.c.bf16 %v3532, %v3532
    %v3539 = vpack.c.bf16 %v3533, %v3533
    %v3540 = vld [vmem:[#allocation12] sm:$0xf]
    %v3541 = vld [vmem:[#allocation12 + $0x4] sm:$0xf]
    %v3542 = vld [vmem:[#allocation12 + $0x8] sm:$0xf]
    %v3543 = vld [vmem:[#allocation12 + $0xc] sm:$0xf]
    %v3544 = vld [vmem:[#allocation12 + $0x10] sm:$0xf]
    %v3545 = vld [vmem:[#allocation12 + $0x14] sm:$0xf]
    %v3546 = vld [vmem:[#allocation12 + $0x18] sm:$0xf]
    %v3547 = vld [vmem:[#allocation12 + $0x1c] sm:$0xf]
    %v3548 = vld [vmem:[#allocation12 + $0x20] sm:$0xf]
    %v3549 = vld [vmem:[#allocation12 + $0x24] sm:$0xf]
    %v3550 = vld [vmem:[#allocation12 + $0x28] sm:$0xf]
    %v3551 = vld [vmem:[#allocation12 + $0x2c] sm:$0xf]
    %v3552 = vld [vmem:[#allocation12 + $0x30] sm:$0xf]
    %v3553 = vld [vmem:[#allocation12 + $0x34] sm:$0xf]
    %v3554 = vld [vmem:[#allocation12 + $0x38] sm:$0xf]
    %v3555 = vld [vmem:[#allocation12 + $0x3c] sm:$0xf]
    %v3556 = vld [vmem:[#allocation12 + $0x40] sm:$0xf]
    %v3557 = vld [vmem:[#allocation12 + $0x44] sm:$0xf]
    %v3558 = vld [vmem:[#allocation12 + $0x48] sm:$0xf]
    %v3559 = vld [vmem:[#allocation12 + $0x4c] sm:$0xf]
    %v3560 = vld [vmem:[#allocation12 + $0x50] sm:$0xf]
    %v3561 = vld [vmem:[#allocation12 + $0x54] sm:$0xf]
    %v3562 = vld [vmem:[#allocation12 + $0x58] sm:$0xf]
    %v3563 = vld [vmem:[#allocation12 + $0x5c] sm:$0xf]
    %v3564 = vld [vmem:[#allocation12 + $0x60] sm:$0xf]
    %v3565 = vld [vmem:[#allocation12 + $0x64] sm:$0xf]
    %v3566 = vld [vmem:[#allocation12 + $0x68] sm:$0xf]
    %v3567 = vld [vmem:[#allocation12 + $0x6c] sm:$0xf]
    %v3568 = vld [vmem:[#allocation12 + $0x70] sm:$0xf]
    %v3569 = vld [vmem:[#allocation12 + $0x74] sm:$0xf]
    %v3570 = vld [vmem:[#allocation12 + $0x78] sm:$0xf]
    %v3571 = vld [vmem:[#allocation12 + $0x7c] sm:$0xf]
    %v3572 = vld [vmem:[#allocation14] sm:$0x1]
    %v3574 = vperm.slane %v3572, 0
    %v3608 = vunpack.c.l.b16 %v3540
    %v3609 = vunpack.c.l.b16 %v3541
    %v3610 = vunpack.c.l.b16 %v3542
    %v3611 = vunpack.c.l.b16 %v3543
    %v3612 = vunpack.c.l.b16 %v3544
    %v3613 = vunpack.c.l.b16 %v3545
    %v3614 = vunpack.c.l.b16 %v3546
    %v3615 = vunpack.c.l.b16 %v3547
    %v3616 = vunpack.c.l.b16 %v3548
    %v3617 = vunpack.c.l.b16 %v3549
    %v3618 = vunpack.c.l.b16 %v3550
    %v3619 = vunpack.c.l.b16 %v3551
    %v3620 = vunpack.c.l.b16 %v3552
    %v3621 = vunpack.c.l.b16 %v3553
    %v3622 = vunpack.c.l.b16 %v3554
    %v3623 = vunpack.c.l.b16 %v3555
    %v3624 = vunpack.c.l.b16 %v3556
    %v3625 = vunpack.c.l.b16 %v3557
    %v3626 = vunpack.c.l.b16 %v3558
    %v3627 = vunpack.c.l.b16 %v3559
    %v3628 = vunpack.c.l.b16 %v3560
    %v3629 = vunpack.c.l.b16 %v3561
    %v3630 = vunpack.c.l.b16 %v3562
    %v3631 = vunpack.c.l.b16 %v3563
    %v3632 = vunpack.c.l.b16 %v3564
    %v3633 = vunpack.c.l.b16 %v3565
    %v3634 = vunpack.c.l.b16 %v3566
    %v3635 = vunpack.c.l.b16 %v3567
    %v3636 = vunpack.c.l.b16 %v3568
    %v3637 = vunpack.c.l.b16 %v3569
    %v3638 = vunpack.c.l.b16 %v3570
    %v3639 = vunpack.c.l.b16 %v3571
    %v3640 = vpack.c.b16 %v3609, %v3608
    %v3641 = vpack.c.b16 %v3611, %v3610
    %v3642 = vpack.c.b16 %v3613, %v3612
    %v3643 = vpack.c.b16 %v3615, %v3614
    %v3644 = vpack.c.b16 %v3617, %v3616
    %v3645 = vpack.c.b16 %v3619, %v3618
    %v3646 = vpack.c.b16 %v3621, %v3620
    %v3647 = vpack.c.b16 %v3623, %v3622
    %v3648 = vpack.c.b16 %v3625, %v3624
    %v3649 = vpack.c.b16 %v3627, %v3626
    %v3650 = vpack.c.b16 %v3629, %v3628
    %v3651 = vpack.c.b16 %v3631, %v3630
    %v3652 = vpack.c.b16 %v3633, %v3632
    %v3653 = vpack.c.b16 %v3635, %v3634
    %v3654 = vpack.c.b16 %v3637, %v3636
    %v3655 = vpack.c.b16 %v3639, %v3638
    %3672 = vmatpush.bf16.msra.mxu0 %v3647
    %3673 = vmatpush.bf16.msra.mxu0 %v3646
    %3674 = vmatpush.bf16.msra.mxu0 %v3645
    %3675 = vmatpush.bf16.msra.mxu0 %v3644
    %3676 = vmatpush.bf16.msra.mxu0 %v3643
    %3677 = vmatpush.bf16.msra.mxu0 %v3642
    %3678 = vmatpush.bf16.msra.mxu0 %v3641
    %3679 = vmatpush.bf16.msra.mxu0 %v3640
    %3680 = vmatmul.bf16.gmra.mxu0 %v3538
    %v3681 = vpop.f32.mrf.mxu0
    %v3682 = vadd.f32 %v3574, %v3681
    %v3683 = vpop.f32.mrf.mxu0
    %3684 = vdwg.mxu0
    %3685 = vmatpush.bf16.msra.mxu0 %v3655
    %3686 = vmatpush.bf16.msra.mxu0 %v3654
    %3687 = vmatpush.bf16.msra.mxu0 %v3653
    %3688 = vmatpush.bf16.msra.mxu0 %v3652
    %3689 = vmatpush.bf16.msra.mxu0 %v3651
    %3690 = vmatpush.bf16.msra.mxu0 %v3650
    %3691 = vmatpush.bf16.msra.mxu0 %v3649
    %3692 = vmatpush.bf16.msra.mxu0 %v3648
    %3693 = vmatmul.bf16.gmra.mxu0 %v3539
    %v3694 = vpop.f32.mrf.mxu0
    %v3695 = vadd.f32 %v3682, %v3694
    %v3696 = vpop.f32.mrf.mxu0
    %3697 = vdwg.mxu0
    %v3698 = vmax.f32 %v3695, 0.0
    %v3699 = vpack.c.bf16 %v3698, %v3698
    %v3700 = vld [vmem:[#allocation15] sm:$0xf]
    %v3701 = vld [vmem:[#allocation15 + $0x4] sm:$0xf]
    %v3702 = vld [vmem:[#allocation15 + $0x8] sm:$0xf]
    %v3703 = vld [vmem:[#allocation15 + $0xc] sm:$0xf]
    %v3704 = vld [vmem:[#allocation15 + $0x10] sm:$0xf]
    %v3705 = vld [vmem:[#allocation15 + $0x14] sm:$0xf]
    %v3706 = vld [vmem:[#allocation15 + $0x18] sm:$0xf]
    %v3707 = vld [vmem:[#allocation15 + $0x1c] sm:$0xf]
    %v3708 = vld [vmem:[#allocation15 + $0x20] sm:$0xf]
    %v3709 = vld [vmem:[#allocation15 + $0x24] sm:$0xf]
    %v3710 = vld [vmem:[#allocation15 + $0x28] sm:$0xf]
    %v3711 = vld [vmem:[#allocation15 + $0x2c] sm:$0xf]
    %v3712 = vld [vmem:[#allocation15 + $0x30] sm:$0xf]
    %v3713 = vld [vmem:[#allocation15 + $0x34] sm:$0xf]
    %v3714 = vld [vmem:[#allocation15 + $0x38] sm:$0xf]
    %v3715 = vld [vmem:[#allocation15 + $0x3c] sm:$0xf]
    %v3716 = vld [vmem:[#allocation17] sm:$0x1]
    %v3718 = vperm.slane %v3716, 0
    %v3736 = vunpack.c.l.b16 %v3700
    %v3737 = vunpack.c.l.b16 %v3701
    %v3738 = vunpack.c.l.b16 %v3702
    %v3739 = vunpack.c.l.b16 %v3703
    %v3740 = vunpack.c.l.b16 %v3704
    %v3741 = vunpack.c.l.b16 %v3705
    %v3742 = vunpack.c.l.b16 %v3706
    %v3743 = vunpack.c.l.b16 %v3707
    %v3744 = vunpack.c.l.b16 %v3708
    %v3745 = vunpack.c.l.b16 %v3709
    %v3746 = vunpack.c.l.b16 %v3710
    %v3747 = vunpack.c.l.b16 %v3711
    %v3748 = vunpack.c.l.b16 %v3712
    %v3749 = vunpack.c.l.b16 %v3713
    %v3750 = vunpack.c.l.b16 %v3714
    %v3751 = vunpack.c.l.b16 %v3715
    %v3752 = vpack.c.b16 %v3737, %v3736
    %v3753 = vpack.c.b16 %v3739, %v3738
    %v3754 = vpack.c.b16 %v3741, %v3740
    %v3755 = vpack.c.b16 %v3743, %v3742
    %v3756 = vpack.c.b16 %v3745, %v3744
    %v3757 = vpack.c.b16 %v3747, %v3746
    %v3758 = vpack.c.b16 %v3749, %v3748
    %v3759 = vpack.c.b16 %v3751, %v3750
    %3768 = vmatpush.bf16.msra.mxu0 %v3759
    %3769 = vmatpush.bf16.msra.mxu0 %v3758
    %3770 = vmatpush.bf16.msra.mxu0 %v3757
    %3771 = vmatpush.bf16.msra.mxu0 %v3756
    %3772 = vmatpush.bf16.msra.mxu0 %v3755
    %3773 = vmatpush.bf16.msra.mxu0 %v3754
    %3774 = vmatpush.bf16.msra.mxu0 %v3753
    %3775 = vmatpush.bf16.msra.mxu0 %v3752
    %3776 = vmatmul.bf16.gmra.mxu0 %v3699
    %v3777 = vpop.f32.mrf.mxu0
    %v3778 = vadd.f32 %v3718, %v3777
    %v3779 = vpop.f32.mrf.mxu0
    %3780 = vdwg.mxu0
    %v3781 = vld [vmem:[#allocation18] sm:$0xf]
    %v3782 = vunpack.c.l.bf16 %v3781
    %v3784 = vperm.slane %v3782, 0
    %v3785 = vperm.slane %v3782, 2
    %v3786 = vperm.slane %v3782, 4
    %v3787 = vperm.slane %v3782, 6
    %v3792 = vperm.slane %v3784, 0
    %v3793 = vperm.slane %v3785, 0
    %v3794 = vperm.slane %v3786, 0
    %v3795 = vperm.slane %v3787, 0
    %v3796 = vmul.f32 %v3534, %v3792
    %v3797 = vmul.f32 %v3535, %v3793
    %v3798 = vmul.f32 %v3536, %v3794
    %v3799 = vmul.f32 %v3537, %v3795
    %v3800 = vadd.f32 %v3796, %v3797
    %v3801 = vadd.f32 %v3800, %v3798
    %v3802 = vadd.f32 %v3801, %v3799
    %3803 = vadd.xlane.f32.xlu0 %v3802
    %v3804 = vpop.xlane.xlu0 %3803
    %v3805 = vld [vmem:[#allocation2] sm:$0x1]
    %v3807 = vperm.slane %v3805, 0
    %v3809 = vadd.f32 %v3804, %v3807
    %3810 = vadd.xlane.f32.xlu0 %v3778
    %v3811 = vpop.xlane.xlu0 %3810
    %v3812 = vmul.f32 %v3811, 0.16666667
    %v3813 = vsub.f32 %v3809, %v3812
    %3815 = vset.pattern.permute.xlu0 0
    %3816 = vperm.xlu0 %3815, %v3813
    %v3817 = vpop.permute.xlu0 %3816
    %v3819 = vadd.f32 %v3817, %v3778
    %3820 = vst [vmem:[#allocation20] sm:$0xff] %v3819
    // Predicated region
    $region86: #{tpu_custom_call.1} parent=1 // pred_check
      _
    $region87: #{tpu_custom_call.1} parent=1 // pred_check_branch
      %3822 = sbr.rel (0) target = $region89
    $region88: #{tpu_custom_call.1} parent=1 // pred_region
      %3824 = vsyncadd [#allocation5], 0
      %s3826 = sshll.u32 [#allocation20], 4
      %s3827 = int_to_ptr.vmem [resolvable:$true] %s3826
      %s3828 = sshll.u32 %s11, 4
      %s3829 = int_to_ptr.hbm [resolvable:$true] %s3828
      %3831 = dma.vmem_to_hbm [thread:$0]  %s3827, 128, %s3829, [#allocation5]
    $region89: #{tpu_custom_call.1} parent=1 // pred_fallthru
      _
    // Predicated region
    $region90: #{tpu_custom_call.1} parent=1 // pred_check
      _
    $region91: #{tpu_custom_call.1} parent=1 // pred_check_branch
      %3833 = sbr.rel (0) target = $region93
    $region92: #{tpu_custom_call.1} parent=1 // pred_region
      %3835 = dma.done [#allocation5], 128
    $region93: #{tpu_custom_call.1} parent=1 // pred_fallthru
      _
    %3836 = vsyncpa [#allocation4], 1
    %3837 = vsyncpa [#allocation7], 1
    %3838 = vsyncpa [#allocation10], 1
    %3839 = vsyncpa [#allocation13], 1
    %3840 = vsyncpa [#allocation16], 1
    %3841 = vsyncpa [#allocation19], 1
    %3842 = vsyncpa [#allocation5], 1

</llo_original>
